<compile_context>
chip_gen: v7x
topology: tpu7x:2x2x1
jax: 0.10.0
libtpu: 0.0.40
codegen_flags: <defaults>
</compile_context>

<pallas_src>
import functools

import jax
import jax.numpy as jnp
import numpy as np
from jax.experimental import pallas as pl
from jax.experimental.pallas import tpu as pltpu

NUM_1X1 = 20      # "x" in DeepCNNX
_LANES = 128      # channel dim padded 92 -> 128 (and 16/10 -> 128)
_MAX_BLOCK = 512  # max batch rows per grid step (multiple of 16)


def _round_up(x, m):
    return ((x + m - 1) // m) * m


def _cdiv(a, b):
    return -(-a // b)


# ----------------------------- Pallas kernel -------------------------------

def _fused_kernel(num_1x1, p1_ref, w1_ref, b1_ref, w2_ref, b2_ref,
                  w1x1_ref, b1x1_ref, wl_ref, bl_ref, wfc_ref, bfc_ref,
                  o_ref):
    nb = o_ref.shape[0]                       # padded batch rows in this block

    # conv1 (3x3 s1), computed for all 4 conv2 output positions x 9 conv2
    # kernel offsets at once via a block-diagonal weight; the result is exactly
    # conv2's im2col patch matrix with features ordered (kh, kw, cin).
    h1 = jnp.maximum(
        jnp.dot(p1_ref[...], w1_ref[...], preferred_element_type=jnp.float32)
        + b1_ref[...], 0.0)                                     # (4*nb, 18) f32

    # conv2 (3x3 stride 2) as an im2col matmul; rows ordered (s2, n).
    # Cast once to bf16 for the 1x1 chain (single-pass MXU, half the vld/vst).
    h = jnp.maximum(
        jnp.dot(h1, w2_ref[...], preferred_element_type=jnp.float32)
        + b2_ref[...], 0.0).astype(jnp.bfloat16)                # (4*nb, 128)

    # 20 x (1x1 conv 92->92): bf16 operands, f32 accumulation, bias+relu in
    # f32, then re-staged as bf16 for the next layer.
    for i in range(num_1x1):
        acc = jnp.dot(h, w1x1_ref[i], preferred_element_type=jnp.float32)
        h = jnp.maximum(acc + b1x1_ref[i], 0.0).astype(jnp.bfloat16)

    # conv_last (2x2 kernel over the 2x2 map -> 1x1 output): running
    # accumulation of 4 per-position matmuls on packed-sublane-aligned row
    # blocks (nb % 16 == 0) -- MRB-accumulated on v7x.
    acc = jnp.dot(h[0:nb, :], wl_ref[0], preferred_element_type=jnp.float32)
    for s in range(1, 4):
        acc = acc + jnp.dot(h[s * nb:(s + 1) * nb, :], wl_ref[s],
                            preferred_element_type=jnp.float32)
    h16 = jnp.maximum(acc + bl_ref[...], 0.0).astype(jnp.bfloat16)  # (nb, 128)

    # fc: lane-dense f32 output; valid logits live in columns 0..9.
    o_ref[...] = jnp.dot(h16, wfc_ref[...],
                         preferred_element_type=jnp.float32) + bfc_ref[...]


# --------------------------- weight pre-packing -----------------------------

def pack_params(params):
    """One-time re-layout of PyTorch-convention params into kernel layouts."""
    (w1, b1, w2, b2, w1x1, b1x1, wl, bl, wfc, bfc) = params
    num_1x1 = w1x1.shape[0]

    # conv1: (9 -> 2) weight replicated block-diagonally over the 9 conv2
    # kernel offsets so one matmul produces conv2's patch matrix directly.
    w1m = jnp.transpose(w1, (2, 3, 1, 0)).reshape(9, 2)         # (kh,kw,ci)->co
    w1rep = jnp.kron(jnp.eye(9, dtype=jnp.float32), w1m)        # (81, 18)
    b1rep = jnp.tile(b1, 9).reshape(1, 18)

    # conv2: features (kh, kw, cin) -> 92 outputs, padded to 128 lanes.
    w2p = jnp.zeros((18, _LANES), jnp.float32).at[:, :92].set(
        jnp.transpose(w2, (2, 3, 1, 0)).reshape(18, 92))
    b2p = jnp.zeros((1, _LANES), jnp.float32).at[:, :92].set(b2)

    # 1x1 convs: (layer, in, out), padded to 128x128, stored bf16.
    w1x1p = jnp.zeros((num_1x1, _LANES, _LANES), jnp.float32)
    w1x1p = w1x1p.at[:, :92, :92].set(
        jnp.transpose(w1x1.reshape(num_1x1, 92, 92), (0, 2, 1)))
    w1x1p = w1x1p.astype(jnp.bfloat16)
    b1x1p = jnp.zeros((num_1x1, 1, _LANES), jnp.float32).at[:, 0, :92].set(b1x1)

    # conv_last: (spatial position, in, out), padded, bf16.
    wlp = jnp.zeros((4, _LANES, _LANES), jnp.float32).at[:, :92, :16].set(
        jnp.transpose(wl, (2, 3, 1, 0)).reshape(4, 92, 16)).astype(jnp.bfloat16)
    blp = jnp.zeros((1, _LANES), jnp.float32).at[:, :16].set(bl)

    # fc, padded, bf16 weight / f32 bias.
    wfcp = jnp.zeros((_LANES, _LANES), jnp.float32).at[:16, :10].set(
        wfc.T).astype(jnp.bfloat16)
    bfcp = jnp.zeros((1, _LANES), jnp.float32).at[:, :10].set(bfc)

    return (w1rep, b1rep, w2p, b2p, w1x1p, b1x1p, wlp, blp, wfcp, bfcp)


# ------------------------------ forward pass --------------------------------

@jax.jit
def deepcnnx_forward(x_nchw, packed):
    (w1rep, b1rep, w2p, b2p, w1x1p, b1x1p, wlp, blp, wfcp, bfcp) = packed
    num_1x1 = w1x1p.shape[0]
    n = x_nchw.shape[0]

    # Batch-block sizing: balanced blocks (minimal tail padding), >= 2 blocks
    # whenever n > 16 so v7x's two TensorCores both get work, rows a multiple
    # of 16 so bf16 activation slices stay packed-sublane aligned.
    target_blocks = max(2, _cdiv(n, _MAX_BLOCK)) if n > 16 else 1
    nb = min(_MAX_BLOCK, _round_up(_cdiv(n, target_blocks), 16))
    num_blocks = _cdiv(n, nb)
    n_pad = num_blocks * nb

    # conv1 im2col, built directly batch-block-major (no transpose pass):
    # row (block b, conv2 position s2, local sample n) with 81 features ordered
    # (conv2 offset i, j ; conv1 patch a, b); single input channel.
    xs = jnp.pad(x_nchw[:, 0], ((0, n_pad - n), (0, 0), (0, 0)))  # (n_pad,8,8)
    xsb = xs.reshape(num_blocks, nb, 8, 8)
    pos_blocks = []
    for s2 in range(4):
        oh2, ow2 = divmod(s2, 2)
        feats = [xsb[:, :, 2 * oh2 + i:2 * oh2 + i + 3,
                     2 * ow2 + j:2 * ow2 + j + 3].reshape(num_blocks, nb, 9)
                 for i in range(3) for j in range(3)]
        pos_blocks.append(jnp.concatenate(feats, axis=-1))     # (blk, nb, 81)
    # (blk, 4, nb, 81) -> contiguous (free) reshape to block-major rows.
    p1 = jnp.stack(pos_blocks, axis=1).reshape(num_blocks * 4 * nb, 81)

    def const(shape):
        nz = (0,) * len(shape)
        return pl.BlockSpec(shape, lambda b: nz)   # grid-invariant full array

    # Advisory cost estimate (per whole pallas_call).
    flops = num_blocks * (
        2 * 4 * nb * 81 * 18
        + 2 * 4 * nb * 18 * _LANES
        + num_1x1 * 2 * 4 * nb * _LANES * _LANES
        + 4 * 2 * nb * _LANES * _LANES
        + 2 * nb * _LANES * _LANES)
    weight_bytes = sum(int(a.size) * a.dtype.itemsize for a in packed)
    bytes_accessed = (num_blocks * 4 * nb * 81 * 4     # p1
                      + n_pad * _LANES * 4             # output
                      + weight_bytes)

    out = pl.pallas_call(
        functools.partial(_fused_kernel, num_1x1),
        out_shape=jax.ShapeDtypeStruct((n_pad, _LANES), jnp.float32),
        grid=(num_blocks,),
        in_specs=[
            pl.BlockSpec((4 * nb, 81), lambda b: (b, 0)),
            const(w1rep.shape), const(b1rep.shape),
            const(w2p.shape), const(b2p.shape),
            const(w1x1p.shape), const(b1x1p.shape),
            const(wlp.shape), const(blp.shape),
            const(wfcp.shape), const(bfcp.shape),
        ],
        out_specs=pl.BlockSpec((nb, _LANES), lambda b: (b, 0)),
        compiler_params=pltpu.CompilerParams(
            dimension_semantics=("parallel",)),
        cost_estimate=pl.CostEstimate(
            flops=flops, transcendentals=0, bytes_accessed=bytes_accessed),
    )(p1, w1rep, b1rep, w2p, b2p, w1x1p, b1x1p, wlp, blp, wfcp, bfcp)

    return out[:n, :10]


# --------------------------- reference & params -----------------------------

def deepcnnx_reference(x, params):
    (w1, b1, w2, b2, w1x1, b1x1, wl, bl, wfc, bfc) = params

    def conv(h, w, b, stride):
        y = jax.lax.conv_general_dilated(
            h, w, window_strides=(stride, stride), padding="VALID",
            dimension_numbers=("NCHW", "OIHW", "NCHW"))
        return y + b[None, :, None, None]

    h = jax.nn.relu(conv(x, w1, b1, 1))
    h = jax.nn.relu(conv(h, w2, b2, 2))
    for i in range(NUM_1X1):
        h = jax.nn.relu(conv(h, w1x1[i], b1x1[i], 1))
    h = jax.nn.relu(conv(h, wl, bl, 1))
    h = h.reshape(h.shape[0], -1)                                  # (N, 16)
    return h @ wfc.T + bfc[None, :]


def init_params(key):
    def u(k, shape, fan_in):
        bound = 1.0 / np.sqrt(fan_in)
        return jax.random.uniform(k, shape, jnp.float32, -bound, bound)

    ks = jax.random.split(key, 10)
    w1 = u(ks[0], (2, 1, 3, 3), 1 * 9)
    b1 = u(ks[1], (2,), 1 * 9)
    w2 = u(ks[2], (92, 2, 3, 3), 2 * 9)
    b2 = u(ks[3], (92,), 2 * 9)
    w1x1 = u(ks[4], (NUM_1X1, 92, 92, 1, 1), 92)
    b1x1 = u(ks[5], (NUM_1X1, 92), 92)
    wl = u(ks[6], (16, 92, 2, 2), 92 * 4)
    bl = u(ks[7], (16,), 92 * 4)
    wfc = u(ks[8], (10, 16), 16)
    bfc = u(ks[9], (10,), 16)
    return (w1, b1, w2, b2, w1x1, b1x1, wl, bl, wfc, bfc)


if __name__ == "__main__":
    key = jax.random.PRNGKey(0)
    pkey, xkey = jax.random.split(key)
    params = init_params(pkey)
    packed = pack_params(params)                 # one-time weight re-layout
    # sklearn digits are 8x8 single-channel images; batch = 2
    x = jax.random.normal(xkey, (2, 1, 8, 8), jnp.float32)

    out = jax.block_until_ready(deepcnnx_forward(x, packed))
    ref = jax.block_until_ready(deepcnnx_reference(x, params))
    np.testing.assert_allclose(np.asarray(out), np.asarray(ref),
                               rtol=1e-4, atol=1e-4)
    print("KERNEL_OK")
</pallas_src>

<mosaic_0001>
module attributes {stable_mosaic.version = 11 : i64} {
  func.func @_fused_kernel(%arg0: i32, %arg1: memref<64x81xf32, #tpu.memory_space<vmem>>, %arg2: memref<81x18xf32, #tpu.memory_space<vmem>>, %arg3: memref<1x18xf32, #tpu.memory_space<vmem>>, %arg4: memref<18x128xf32, #tpu.memory_space<vmem>>, %arg5: memref<1x128xf32, #tpu.memory_space<vmem>>, %arg6: memref<20x128x128xbf16, #tpu.memory_space<vmem>>, %arg7: memref<20x1x128xf32, #tpu.memory_space<vmem>>, %arg8: memref<4x128x128xbf16, #tpu.memory_space<vmem>>, %arg9: memref<1x128xf32, #tpu.memory_space<vmem>>, %arg10: memref<128x128xbf16, #tpu.memory_space<vmem>>, %arg11: memref<1x128xf32, #tpu.memory_space<vmem>>, %arg12: memref<16x128xf32, #tpu.memory_space<vmem>>) attributes {dimension_semantics = [#tpu.dimension_semantics<parallel>], iteration_bounds = array<i64: 1>, scalar_prefetch = 0 : i64, scratch_operands = 0 : i64, tpu.core_type = #tpu.core_type<tc>, window_params = [{transform_indices = @transform_0, window_bounds = array<i64: 64, 81>}, {pipeline_mode = #tpu.pipeline_mode<synchronous>, transform_indices = @transform_1, window_bounds = array<i64: 81, 18>}, {pipeline_mode = #tpu.pipeline_mode<synchronous>, transform_indices = @transform_2, window_bounds = array<i64: 1, 18>}, {pipeline_mode = #tpu.pipeline_mode<synchronous>, transform_indices = @transform_3, window_bounds = array<i64: 18, 128>}, {pipeline_mode = #tpu.pipeline_mode<synchronous>, transform_indices = @transform_4, window_bounds = array<i64: 1, 128>}, {pipeline_mode = #tpu.pipeline_mode<synchronous>, transform_indices = @transform_5, window_bounds = array<i64: 20, 128, 128>}, {pipeline_mode = #tpu.pipeline_mode<synchronous>, transform_indices = @transform_6, window_bounds = array<i64: 20, 1, 128>}, {pipeline_mode = #tpu.pipeline_mode<synchronous>, transform_indices = @transform_7, window_bounds = array<i64: 4, 128, 128>}, {pipeline_mode = #tpu.pipeline_mode<synchronous>, transform_indices = @transform_8, window_bounds = array<i64: 1, 128>}, {pipeline_mode = #tpu.pipeline_mode<synchronous>, transform_indices = @transform_9, window_bounds = array<i64: 128, 128>}, {pipeline_mode = #tpu.pipeline_mode<synchronous>, transform_indices = @transform_10, window_bounds = array<i64: 1, 128>}, {transform_indices = @transform_11, window_bounds = array<i64: 16, 128>}]} {
    %c0 = arith.constant 0 : index
    %c0_0 = arith.constant 0 : index
    %0 = vector.load %arg1[%c0, %c0_0] : memref<64x81xf32, #tpu.memory_space<vmem>>, vector<64x81xf32>
    %c0_1 = arith.constant 0 : index
    %c0_2 = arith.constant 0 : index
    %1 = vector.load %arg2[%c0_1, %c0_2] : memref<81x18xf32, #tpu.memory_space<vmem>>, vector<81x18xf32>
    %cst = arith.constant dense<0.000000e+00> : vector<64x18xf32>
    %2 = tpu.matmul %0, %1, %cst {dimension_numbers = #tpu.dot_dimension_numbers<[1], [0], [0], [1], [0, 0, 1, 1], [], []>} : vector<64x81xf32>, vector<81x18xf32>, vector<64x18xf32> -> vector<64x18xf32>
    %c0_3 = arith.constant 0 : index
    %c0_4 = arith.constant 0 : index
    %3 = vector.load %arg3[%c0_3, %c0_4] : memref<1x18xf32, #tpu.memory_space<vmem>>, vector<1x18xf32>
    %4 = vector.broadcast %3 : vector<1x18xf32> to vector<64x18xf32>
    %5 = arith.addf %2, %4 : vector<64x18xf32>
    %cst_5 = arith.constant 0.000000e+00 : f32
    %6 = vector.broadcast %cst_5 : f32 to vector<64x18xf32>
    %7 = arith.maximumf %5, %6 : vector<64x18xf32>
    %c0_6 = arith.constant 0 : index
    %c0_7 = arith.constant 0 : index
    %8 = vector.load %arg4[%c0_6, %c0_7] : memref<18x128xf32, #tpu.memory_space<vmem>>, vector<18x128xf32>
    %cst_8 = arith.constant dense<0.000000e+00> : vector<64x128xf32>
    %9 = tpu.matmul %7, %8, %cst_8 {dimension_numbers = #tpu.dot_dimension_numbers<[1], [0], [0], [1], [0, 0, 1, 1], [], []>} : vector<64x18xf32>, vector<18x128xf32>, vector<64x128xf32> -> vector<64x128xf32>
    %c0_9 = arith.constant 0 : index
    %c0_10 = arith.constant 0 : index
    %10 = vector.load %arg5[%c0_9, %c0_10] : memref<1x128xf32, #tpu.memory_space<vmem>>, vector<1x128xf32>
    %11 = vector.broadcast %10 : vector<1x128xf32> to vector<64x128xf32>
    %12 = arith.addf %9, %11 : vector<64x128xf32>
    %cst_11 = arith.constant 0.000000e+00 : f32
    %13 = vector.broadcast %cst_11 : f32 to vector<64x128xf32>
    %14 = arith.maximumf %12, %13 : vector<64x128xf32>
    %15 = arith.truncf %14 : vector<64x128xf32> to vector<64x128xbf16>
    %c0_12 = arith.constant 0 : index
    %c0_13 = arith.constant 0 : index
    %c0_14 = arith.constant 0 : index
    %16 = vector.load %arg6[%c0_12, %c0_13, %c0_14] : memref<20x128x128xbf16, #tpu.memory_space<vmem>>, vector<1x128x128xbf16>
    %17 = vector.shape_cast %16 : vector<1x128x128xbf16> to vector<128x128xbf16>
    %cst_15 = arith.constant dense<0.000000e+00> : vector<64x128xf32>
    %18 = tpu.matmul %15, %17, %cst_15 {dimension_numbers = #tpu.dot_dimension_numbers<[1], [0], [0], [1], [0, 0, 1, 1], [], []>} : vector<64x128xbf16>, vector<128x128xbf16>, vector<64x128xf32> -> vector<64x128xf32>
    %c0_16 = arith.constant 0 : index
    %c0_17 = arith.constant 0 : index
    %c0_18 = arith.constant 0 : index
    %19 = vector.load %arg7[%c0_16, %c0_17, %c0_18] : memref<20x1x128xf32, #tpu.memory_space<vmem>>, vector<1x1x128xf32>
    %20 = vector.shape_cast %19 : vector<1x1x128xf32> to vector<1x128xf32>
    %21 = vector.broadcast %20 : vector<1x128xf32> to vector<64x128xf32>
    %22 = arith.addf %18, %21 : vector<64x128xf32>
    %cst_19 = arith.constant 0.000000e+00 : f32
    %23 = vector.broadcast %cst_19 : f32 to vector<64x128xf32>
    %24 = arith.maximumf %22, %23 : vector<64x128xf32>
    %25 = arith.truncf %24 : vector<64x128xf32> to vector<64x128xbf16>
    %c1 = arith.constant 1 : index
    %c0_20 = arith.constant 0 : index
    %c0_21 = arith.constant 0 : index
    %26 = vector.load %arg6[%c1, %c0_20, %c0_21] : memref<20x128x128xbf16, #tpu.memory_space<vmem>>, vector<1x128x128xbf16>
    %27 = vector.shape_cast %26 : vector<1x128x128xbf16> to vector<128x128xbf16>
    %cst_22 = arith.constant dense<0.000000e+00> : vector<64x128xf32>
    %28 = tpu.matmul %25, %27, %cst_22 {dimension_numbers = #tpu.dot_dimension_numbers<[1], [0], [0], [1], [0, 0, 1, 1], [], []>} : vector<64x128xbf16>, vector<128x128xbf16>, vector<64x128xf32> -> vector<64x128xf32>
    %c1_23 = arith.constant 1 : index
    %c0_24 = arith.constant 0 : index
    %c0_25 = arith.constant 0 : index
    %29 = vector.load %arg7[%c1_23, %c0_24, %c0_25] : memref<20x1x128xf32, #tpu.memory_space<vmem>>, vector<1x1x128xf32>
    %30 = vector.shape_cast %29 : vector<1x1x128xf32> to vector<1x128xf32>
    %31 = vector.broadcast %30 : vector<1x128xf32> to vector<64x128xf32>
    %32 = arith.addf %28, %31 : vector<64x128xf32>
    %cst_26 = arith.constant 0.000000e+00 : f32
    %33 = vector.broadcast %cst_26 : f32 to vector<64x128xf32>
    %34 = arith.maximumf %32, %33 : vector<64x128xf32>
    %35 = arith.truncf %34 : vector<64x128xf32> to vector<64x128xbf16>
    %c2 = arith.constant 2 : index
    %c0_27 = arith.constant 0 : index
    %c0_28 = arith.constant 0 : index
    %36 = vector.load %arg6[%c2, %c0_27, %c0_28] : memref<20x128x128xbf16, #tpu.memory_space<vmem>>, vector<1x128x128xbf16>
    %37 = vector.shape_cast %36 : vector<1x128x128xbf16> to vector<128x128xbf16>
    %cst_29 = arith.constant dense<0.000000e+00> : vector<64x128xf32>
    %38 = tpu.matmul %35, %37, %cst_29 {dimension_numbers = #tpu.dot_dimension_numbers<[1], [0], [0], [1], [0, 0, 1, 1], [], []>} : vector<64x128xbf16>, vector<128x128xbf16>, vector<64x128xf32> -> vector<64x128xf32>
    %c2_30 = arith.constant 2 : index
    %c0_31 = arith.constant 0 : index
    %c0_32 = arith.constant 0 : index
    %39 = vector.load %arg7[%c2_30, %c0_31, %c0_32] : memref<20x1x128xf32, #tpu.memory_space<vmem>>, vector<1x1x128xf32>
    %40 = vector.shape_cast %39 : vector<1x1x128xf32> to vector<1x128xf32>
    %41 = vector.broadcast %40 : vector<1x128xf32> to vector<64x128xf32>
    %42 = arith.addf %38, %41 : vector<64x128xf32>
    %cst_33 = arith.constant 0.000000e+00 : f32
    %43 = vector.broadcast %cst_33 : f32 to vector<64x128xf32>
    %44 = arith.maximumf %42, %43 : vector<64x128xf32>
    %45 = arith.truncf %44 : vector<64x128xf32> to vector<64x128xbf16>
    %c3 = arith.constant 3 : index
    %c0_34 = arith.constant 0 : index
    %c0_35 = arith.constant 0 : index
    %46 = vector.load %arg6[%c3, %c0_34, %c0_35] : memref<20x128x128xbf16, #tpu.memory_space<vmem>>, vector<1x128x128xbf16>
    %47 = vector.shape_cast %46 : vector<1x128x128xbf16> to vector<128x128xbf16>
    %cst_36 = arith.constant dense<0.000000e+00> : vector<64x128xf32>
    %48 = tpu.matmul %45, %47, %cst_36 {dimension_numbers = #tpu.dot_dimension_numbers<[1], [0], [0], [1], [0, 0, 1, 1], [], []>} : vector<64x128xbf16>, vector<128x128xbf16>, vector<64x128xf32> -> vector<64x128xf32>
    %c3_37 = arith.constant 3 : index
    %c0_38 = arith.constant 0 : index
    %c0_39 = arith.constant 0 : index
    %49 = vector.load %arg7[%c3_37, %c0_38, %c0_39] : memref<20x1x128xf32, #tpu.memory_space<vmem>>, vector<1x1x128xf32>
    %50 = vector.shape_cast %49 : vector<1x1x128xf32> to vector<1x128xf32>
    %51 = vector.broadcast %50 : vector<1x128xf32> to vector<64x128xf32>
    %52 = arith.addf %48, %51 : vector<64x128xf32>
    %cst_40 = arith.constant 0.000000e+00 : f32
    %53 = vector.broadcast %cst_40 : f32 to vector<64x128xf32>
    %54 = arith.maximumf %52, %53 : vector<64x128xf32>
    %55 = arith.truncf %54 : vector<64x128xf32> to vector<64x128xbf16>
    %c4 = arith.constant 4 : index
    %c0_41 = arith.constant 0 : index
    %c0_42 = arith.constant 0 : index
    %56 = vector.load %arg6[%c4, %c0_41, %c0_42] : memref<20x128x128xbf16, #tpu.memory_space<vmem>>, vector<1x128x128xbf16>
    %57 = vector.shape_cast %56 : vector<1x128x128xbf16> to vector<128x128xbf16>
    %cst_43 = arith.constant dense<0.000000e+00> : vector<64x128xf32>
    %58 = tpu.matmul %55, %57, %cst_43 {dimension_numbers = #tpu.dot_dimension_numbers<[1], [0], [0], [1], [0, 0, 1, 1], [], []>} : vector<64x128xbf16>, vector<128x128xbf16>, vector<64x128xf32> -> vector<64x128xf32>
    %c4_44 = arith.constant 4 : index
    %c0_45 = arith.constant 0 : index
    %c0_46 = arith.constant 0 : index
    %59 = vector.load %arg7[%c4_44, %c0_45, %c0_46] : memref<20x1x128xf32, #tpu.memory_space<vmem>>, vector<1x1x128xf32>
    %60 = vector.shape_cast %59 : vector<1x1x128xf32> to vector<1x128xf32>
    %61 = vector.broadcast %60 : vector<1x128xf32> to vector<64x128xf32>
    %62 = arith.addf %58, %61 : vector<64x128xf32>
    %cst_47 = arith.constant 0.000000e+00 : f32
    %63 = vector.broadcast %cst_47 : f32 to vector<64x128xf32>
    %64 = arith.maximumf %62, %63 : vector<64x128xf32>
    %65 = arith.truncf %64 : vector<64x128xf32> to vector<64x128xbf16>
    %c5 = arith.constant 5 : index
    %c0_48 = arith.constant 0 : index
    %c0_49 = arith.constant 0 : index
    %66 = vector.load %arg6[%c5, %c0_48, %c0_49] : memref<20x128x128xbf16, #tpu.memory_space<vmem>>, vector<1x128x128xbf16>
    %67 = vector.shape_cast %66 : vector<1x128x128xbf16> to vector<128x128xbf16>
    %cst_50 = arith.constant dense<0.000000e+00> : vector<64x128xf32>
    %68 = tpu.matmul %65, %67, %cst_50 {dimension_numbers = #tpu.dot_dimension_numbers<[1], [0], [0], [1], [0, 0, 1, 1], [], []>} : vector<64x128xbf16>, vector<128x128xbf16>, vector<64x128xf32> -> vector<64x128xf32>
    %c5_51 = arith.constant 5 : index
    %c0_52 = arith.constant 0 : index
    %c0_53 = arith.constant 0 : index
    %69 = vector.load %arg7[%c5_51, %c0_52, %c0_53] : memref<20x1x128xf32, #tpu.memory_space<vmem>>, vector<1x1x128xf32>
    %70 = vector.shape_cast %69 : vector<1x1x128xf32> to vector<1x128xf32>
    %71 = vector.broadcast %70 : vector<1x128xf32> to vector<64x128xf32>
    %72 = arith.addf %68, %71 : vector<64x128xf32>
    %cst_54 = arith.constant 0.000000e+00 : f32
    %73 = vector.broadcast %cst_54 : f32 to vector<64x128xf32>
    %74 = arith.maximumf %72, %73 : vector<64x128xf32>
    %75 = arith.truncf %74 : vector<64x128xf32> to vector<64x128xbf16>
    %c6 = arith.constant 6 : index
    %c0_55 = arith.constant 0 : index
    %c0_56 = arith.constant 0 : index
    %76 = vector.load %arg6[%c6, %c0_55, %c0_56] : memref<20x128x128xbf16, #tpu.memory_space<vmem>>, vector<1x128x128xbf16>
    %77 = vector.shape_cast %76 : vector<1x128x128xbf16> to vector<128x128xbf16>
    %cst_57 = arith.constant dense<0.000000e+00> : vector<64x128xf32>
    %78 = tpu.matmul %75, %77, %cst_57 {dimension_numbers = #tpu.dot_dimension_numbers<[1], [0], [0], [1], [0, 0, 1, 1], [], []>} : vector<64x128xbf16>, vector<128x128xbf16>, vector<64x128xf32> -> vector<64x128xf32>
    %c6_58 = arith.constant 6 : index
    %c0_59 = arith.constant 0 : index
    %c0_60 = arith.constant 0 : index
    %79 = vector.load %arg7[%c6_58, %c0_59, %c0_60] : memref<20x1x128xf32, #tpu.memory_space<vmem>>, vector<1x1x128xf32>
    %80 = vector.shape_cast %79 : vector<1x1x128xf32> to vector<1x128xf32>
    %81 = vector.broadcast %80 : vector<1x128xf32> to vector<64x128xf32>
    %82 = arith.addf %78, %81 : vector<64x128xf32>
    %cst_61 = arith.constant 0.000000e+00 : f32
    %83 = vector.broadcast %cst_61 : f32 to vector<64x128xf32>
    %84 = arith.maximumf %82, %83 : vector<64x128xf32>
    %85 = arith.truncf %84 : vector<64x128xf32> to vector<64x128xbf16>
    %c7 = arith.constant 7 : index
    %c0_62 = arith.constant 0 : index
    %c0_63 = arith.constant 0 : index
    %86 = vector.load %arg6[%c7, %c0_62, %c0_63] : memref<20x128x128xbf16, #tpu.memory_space<vmem>>, vector<1x128x128xbf16>
    %87 = vector.shape_cast %86 : vector<1x128x128xbf16> to vector<128x128xbf16>
    %cst_64 = arith.constant dense<0.000000e+00> : vector<64x128xf32>
    %88 = tpu.matmul %85, %87, %cst_64 {dimension_numbers = #tpu.dot_dimension_numbers<[1], [0], [0], [1], [0, 0, 1, 1], [], []>} : vector<64x128xbf16>, vector<128x128xbf16>, vector<64x128xf32> -> vector<64x128xf32>
    %c7_65 = arith.constant 7 : index
    %c0_66 = arith.constant 0 : index
    %c0_67 = arith.constant 0 : index
    %89 = vector.load %arg7[%c7_65, %c0_66, %c0_67] : memref<20x1x128xf32, #tpu.memory_space<vmem>>, vector<1x1x128xf32>
    %90 = vector.shape_cast %89 : vector<1x1x128xf32> to vector<1x128xf32>
    %91 = vector.broadcast %90 : vector<1x128xf32> to vector<64x128xf32>
    %92 = arith.addf %88, %91 : vector<64x128xf32>
    %cst_68 = arith.constant 0.000000e+00 : f32
    %93 = vector.broadcast %cst_68 : f32 to vector<64x128xf32>
    %94 = arith.maximumf %92, %93 : vector<64x128xf32>
    %95 = arith.truncf %94 : vector<64x128xf32> to vector<64x128xbf16>
    %c8 = arith.constant 8 : index
    %c0_69 = arith.constant 0 : index
    %c0_70 = arith.constant 0 : index
    %96 = vector.load %arg6[%c8, %c0_69, %c0_70] : memref<20x128x128xbf16, #tpu.memory_space<vmem>>, vector<1x128x128xbf16>
    %97 = vector.shape_cast %96 : vector<1x128x128xbf16> to vector<128x128xbf16>
    %cst_71 = arith.constant dense<0.000000e+00> : vector<64x128xf32>
    %98 = tpu.matmul %95, %97, %cst_71 {dimension_numbers = #tpu.dot_dimension_numbers<[1], [0], [0], [1], [0, 0, 1, 1], [], []>} : vector<64x128xbf16>, vector<128x128xbf16>, vector<64x128xf32> -> vector<64x128xf32>
    %c8_72 = arith.constant 8 : index
    %c0_73 = arith.constant 0 : index
    %c0_74 = arith.constant 0 : index
    %99 = vector.load %arg7[%c8_72, %c0_73, %c0_74] : memref<20x1x128xf32, #tpu.memory_space<vmem>>, vector<1x1x128xf32>
    %100 = vector.shape_cast %99 : vector<1x1x128xf32> to vector<1x128xf32>
    %101 = vector.broadcast %100 : vector<1x128xf32> to vector<64x128xf32>
    %102 = arith.addf %98, %101 : vector<64x128xf32>
    %cst_75 = arith.constant 0.000000e+00 : f32
    %103 = vector.broadcast %cst_75 : f32 to vector<64x128xf32>
    %104 = arith.maximumf %102, %103 : vector<64x128xf32>
    %105 = arith.truncf %104 : vector<64x128xf32> to vector<64x128xbf16>
    %c9 = arith.constant 9 : index
    %c0_76 = arith.constant 0 : index
    %c0_77 = arith.constant 0 : index
    %106 = vector.load %arg6[%c9, %c0_76, %c0_77] : memref<20x128x128xbf16, #tpu.memory_space<vmem>>, vector<1x128x128xbf16>
    %107 = vector.shape_cast %106 : vector<1x128x128xbf16> to vector<128x128xbf16>
    %cst_78 = arith.constant dense<0.000000e+00> : vector<64x128xf32>
    %108 = tpu.matmul %105, %107, %cst_78 {dimension_numbers = #tpu.dot_dimension_numbers<[1], [0], [0], [1], [0, 0, 1, 1], [], []>} : vector<64x128xbf16>, vector<128x128xbf16>, vector<64x128xf32> -> vector<64x128xf32>
    %c9_79 = arith.constant 9 : index
    %c0_80 = arith.constant 0 : index
    %c0_81 = arith.constant 0 : index
    %109 = vector.load %arg7[%c9_79, %c0_80, %c0_81] : memref<20x1x128xf32, #tpu.memory_space<vmem>>, vector<1x1x128xf32>
    %110 = vector.shape_cast %109 : vector<1x1x128xf32> to vector<1x128xf32>
    %111 = vector.broadcast %110 : vector<1x128xf32> to vector<64x128xf32>
    %112 = arith.addf %108, %111 : vector<64x128xf32>
    %cst_82 = arith.constant 0.000000e+00 : f32
    %113 = vector.broadcast %cst_82 : f32 to vector<64x128xf32>
    %114 = arith.maximumf %112, %113 : vector<64x128xf32>
    %115 = arith.truncf %114 : vector<64x128xf32> to vector<64x128xbf16>
    %c10 = arith.constant 10 : index
    %c0_83 = arith.constant 0 : index
    %c0_84 = arith.constant 0 : index
    %116 = vector.load %arg6[%c10, %c0_83, %c0_84] : memref<20x128x128xbf16, #tpu.memory_space<vmem>>, vector<1x128x128xbf16>
    %117 = vector.shape_cast %116 : vector<1x128x128xbf16> to vector<128x128xbf16>
    %cst_85 = arith.constant dense<0.000000e+00> : vector<64x128xf32>
    %118 = tpu.matmul %115, %117, %cst_85 {dimension_numbers = #tpu.dot_dimension_numbers<[1], [0], [0], [1], [0, 0, 1, 1], [], []>} : vector<64x128xbf16>, vector<128x128xbf16>, vector<64x128xf32> -> vector<64x128xf32>
    %c10_86 = arith.constant 10 : index
    %c0_87 = arith.constant 0 : index
    %c0_88 = arith.constant 0 : index
    %119 = vector.load %arg7[%c10_86, %c0_87, %c0_88] : memref<20x1x128xf32, #tpu.memory_space<vmem>>, vector<1x1x128xf32>
    %120 = vector.shape_cast %119 : vector<1x1x128xf32> to vector<1x128xf32>
    %121 = vector.broadcast %120 : vector<1x128xf32> to vector<64x128xf32>
    %122 = arith.addf %118, %121 : vector<64x128xf32>
    %cst_89 = arith.constant 0.000000e+00 : f32
    %123 = vector.broadcast %cst_89 : f32 to vector<64x128xf32>
    %124 = arith.maximumf %122, %123 : vector<64x128xf32>
    %125 = arith.truncf %124 : vector<64x128xf32> to vector<64x128xbf16>
    %c11 = arith.constant 11 : index
    %c0_90 = arith.constant 0 : index
    %c0_91 = arith.constant 0 : index
    %126 = vector.load %arg6[%c11, %c0_90, %c0_91] : memref<20x128x128xbf16, #tpu.memory_space<vmem>>, vector<1x128x128xbf16>
    %127 = vector.shape_cast %126 : vector<1x128x128xbf16> to vector<128x128xbf16>
    %cst_92 = arith.constant dense<0.000000e+00> : vector<64x128xf32>
    %128 = tpu.matmul %125, %127, %cst_92 {dimension_numbers = #tpu.dot_dimension_numbers<[1], [0], [0], [1], [0, 0, 1, 1], [], []>} : vector<64x128xbf16>, vector<128x128xbf16>, vector<64x128xf32> -> vector<64x128xf32>
    %c11_93 = arith.constant 11 : index
    %c0_94 = arith.constant 0 : index
    %c0_95 = arith.constant 0 : index
    %129 = vector.load %arg7[%c11_93, %c0_94, %c0_95] : memref<20x1x128xf32, #tpu.memory_space<vmem>>, vector<1x1x128xf32>
    %130 = vector.shape_cast %129 : vector<1x1x128xf32> to vector<1x128xf32>
    %131 = vector.broadcast %130 : vector<1x128xf32> to vector<64x128xf32>
    %132 = arith.addf %128, %131 : vector<64x128xf32>
    %cst_96 = arith.constant 0.000000e+00 : f32
    %133 = vector.broadcast %cst_96 : f32 to vector<64x128xf32>
    %134 = arith.maximumf %132, %133 : vector<64x128xf32>
    %135 = arith.truncf %134 : vector<64x128xf32> to vector<64x128xbf16>
    %c12 = arith.constant 12 : index
    %c0_97 = arith.constant 0 : index
    %c0_98 = arith.constant 0 : index
    %136 = vector.load %arg6[%c12, %c0_97, %c0_98] : memref<20x128x128xbf16, #tpu.memory_space<vmem>>, vector<1x128x128xbf16>
    %137 = vector.shape_cast %136 : vector<1x128x128xbf16> to vector<128x128xbf16>
    %cst_99 = arith.constant dense<0.000000e+00> : vector<64x128xf32>
    %138 = tpu.matmul %135, %137, %cst_99 {dimension_numbers = #tpu.dot_dimension_numbers<[1], [0], [0], [1], [0, 0, 1, 1], [], []>} : vector<64x128xbf16>, vector<128x128xbf16>, vector<64x128xf32> -> vector<64x128xf32>
    %c12_100 = arith.constant 12 : index
    %c0_101 = arith.constant 0 : index
    %c0_102 = arith.constant 0 : index
    %139 = vector.load %arg7[%c12_100, %c0_101, %c0_102] : memref<20x1x128xf32, #tpu.memory_space<vmem>>, vector<1x1x128xf32>
    %140 = vector.shape_cast %139 : vector<1x1x128xf32> to vector<1x128xf32>
    %141 = vector.broadcast %140 : vector<1x128xf32> to vector<64x128xf32>
    %142 = arith.addf %138, %141 : vector<64x128xf32>
    %cst_103 = arith.constant 0.000000e+00 : f32
    %143 = vector.broadcast %cst_103 : f32 to vector<64x128xf32>
    %144 = arith.maximumf %142, %143 : vector<64x128xf32>
    %145 = arith.truncf %144 : vector<64x128xf32> to vector<64x128xbf16>
    %c13 = arith.constant 13 : index
    %c0_104 = arith.constant 0 : index
    %c0_105 = arith.constant 0 : index
    %146 = vector.load %arg6[%c13, %c0_104, %c0_105] : memref<20x128x128xbf16, #tpu.memory_space<vmem>>, vector<1x128x128xbf16>
    %147 = vector.shape_cast %146 : vector<1x128x128xbf16> to vector<128x128xbf16>
    %cst_106 = arith.constant dense<0.000000e+00> : vector<64x128xf32>
    %148 = tpu.matmul %145, %147, %cst_106 {dimension_numbers = #tpu.dot_dimension_numbers<[1], [0], [0], [1], [0, 0, 1, 1], [], []>} : vector<64x128xbf16>, vector<128x128xbf16>, vector<64x128xf32> -> vector<64x128xf32>
    %c13_107 = arith.constant 13 : index
    %c0_108 = arith.constant 0 : index
    %c0_109 = arith.constant 0 : index
    %149 = vector.load %arg7[%c13_107, %c0_108, %c0_109] : memref<20x1x128xf32, #tpu.memory_space<vmem>>, vector<1x1x128xf32>
    %150 = vector.shape_cast %149 : vector<1x1x128xf32> to vector<1x128xf32>
    %151 = vector.broadcast %150 : vector<1x128xf32> to vector<64x128xf32>
    %152 = arith.addf %148, %151 : vector<64x128xf32>
    %cst_110 = arith.constant 0.000000e+00 : f32
    %153 = vector.broadcast %cst_110 : f32 to vector<64x128xf32>
    %154 = arith.maximumf %152, %153 : vector<64x128xf32>
    %155 = arith.truncf %154 : vector<64x128xf32> to vector<64x128xbf16>
    %c14 = arith.constant 14 : index
    %c0_111 = arith.constant 0 : index
    %c0_112 = arith.constant 0 : index
    %156 = vector.load %arg6[%c14, %c0_111, %c0_112] : memref<20x128x128xbf16, #tpu.memory_space<vmem>>, vector<1x128x128xbf16>
    %157 = vector.shape_cast %156 : vector<1x128x128xbf16> to vector<128x128xbf16>
    %cst_113 = arith.constant dense<0.000000e+00> : vector<64x128xf32>
    %158 = tpu.matmul %155, %157, %cst_113 {dimension_numbers = #tpu.dot_dimension_numbers<[1], [0], [0], [1], [0, 0, 1, 1], [], []>} : vector<64x128xbf16>, vector<128x128xbf16>, vector<64x128xf32> -> vector<64x128xf32>
    %c14_114 = arith.constant 14 : index
    %c0_115 = arith.constant 0 : index
    %c0_116 = arith.constant 0 : index
    %159 = vector.load %arg7[%c14_114, %c0_115, %c0_116] : memref<20x1x128xf32, #tpu.memory_space<vmem>>, vector<1x1x128xf32>
    %160 = vector.shape_cast %159 : vector<1x1x128xf32> to vector<1x128xf32>
    %161 = vector.broadcast %160 : vector<1x128xf32> to vector<64x128xf32>
    %162 = arith.addf %158, %161 : vector<64x128xf32>
    %cst_117 = arith.constant 0.000000e+00 : f32
    %163 = vector.broadcast %cst_117 : f32 to vector<64x128xf32>
    %164 = arith.maximumf %162, %163 : vector<64x128xf32>
    %165 = arith.truncf %164 : vector<64x128xf32> to vector<64x128xbf16>
    %c15 = arith.constant 15 : index
    %c0_118 = arith.constant 0 : index
    %c0_119 = arith.constant 0 : index
    %166 = vector.load %arg6[%c15, %c0_118, %c0_119] : memref<20x128x128xbf16, #tpu.memory_space<vmem>>, vector<1x128x128xbf16>
    %167 = vector.shape_cast %166 : vector<1x128x128xbf16> to vector<128x128xbf16>
    %cst_120 = arith.constant dense<0.000000e+00> : vector<64x128xf32>
    %168 = tpu.matmul %165, %167, %cst_120 {dimension_numbers = #tpu.dot_dimension_numbers<[1], [0], [0], [1], [0, 0, 1, 1], [], []>} : vector<64x128xbf16>, vector<128x128xbf16>, vector<64x128xf32> -> vector<64x128xf32>
    %c15_121 = arith.constant 15 : index
    %c0_122 = arith.constant 0 : index
    %c0_123 = arith.constant 0 : index
    %169 = vector.load %arg7[%c15_121, %c0_122, %c0_123] : memref<20x1x128xf32, #tpu.memory_space<vmem>>, vector<1x1x128xf32>
    %170 = vector.shape_cast %169 : vector<1x1x128xf32> to vector<1x128xf32>
    %171 = vector.broadcast %170 : vector<1x128xf32> to vector<64x128xf32>
    %172 = arith.addf %168, %171 : vector<64x128xf32>
    %cst_124 = arith.constant 0.000000e+00 : f32
    %173 = vector.broadcast %cst_124 : f32 to vector<64x128xf32>
    %174 = arith.maximumf %172, %173 : vector<64x128xf32>
    %175 = arith.truncf %174 : vector<64x128xf32> to vector<64x128xbf16>
    %c16 = arith.constant 16 : index
    %c0_125 = arith.constant 0 : index
    %c0_126 = arith.constant 0 : index
    %176 = vector.load %arg6[%c16, %c0_125, %c0_126] : memref<20x128x128xbf16, #tpu.memory_space<vmem>>, vector<1x128x128xbf16>
    %177 = vector.shape_cast %176 : vector<1x128x128xbf16> to vector<128x128xbf16>
    %cst_127 = arith.constant dense<0.000000e+00> : vector<64x128xf32>
    %178 = tpu.matmul %175, %177, %cst_127 {dimension_numbers = #tpu.dot_dimension_numbers<[1], [0], [0], [1], [0, 0, 1, 1], [], []>} : vector<64x128xbf16>, vector<128x128xbf16>, vector<64x128xf32> -> vector<64x128xf32>
    %c16_128 = arith.constant 16 : index
    %c0_129 = arith.constant 0 : index
    %c0_130 = arith.constant 0 : index
    %179 = vector.load %arg7[%c16_128, %c0_129, %c0_130] : memref<20x1x128xf32, #tpu.memory_space<vmem>>, vector<1x1x128xf32>
    %180 = vector.shape_cast %179 : vector<1x1x128xf32> to vector<1x128xf32>
    %181 = vector.broadcast %180 : vector<1x128xf32> to vector<64x128xf32>
    %182 = arith.addf %178, %181 : vector<64x128xf32>
    %cst_131 = arith.constant 0.000000e+00 : f32
    %183 = vector.broadcast %cst_131 : f32 to vector<64x128xf32>
    %184 = arith.maximumf %182, %183 : vector<64x128xf32>
    %185 = arith.truncf %184 : vector<64x128xf32> to vector<64x128xbf16>
    %c17 = arith.constant 17 : index
    %c0_132 = arith.constant 0 : index
    %c0_133 = arith.constant 0 : index
    %186 = vector.load %arg6[%c17, %c0_132, %c0_133] : memref<20x128x128xbf16, #tpu.memory_space<vmem>>, vector<1x128x128xbf16>
    %187 = vector.shape_cast %186 : vector<1x128x128xbf16> to vector<128x128xbf16>
    %cst_134 = arith.constant dense<0.000000e+00> : vector<64x128xf32>
    %188 = tpu.matmul %185, %187, %cst_134 {dimension_numbers = #tpu.dot_dimension_numbers<[1], [0], [0], [1], [0, 0, 1, 1], [], []>} : vector<64x128xbf16>, vector<128x128xbf16>, vector<64x128xf32> -> vector<64x128xf32>
    %c17_135 = arith.constant 17 : index
    %c0_136 = arith.constant 0 : index
    %c0_137 = arith.constant 0 : index
    %189 = vector.load %arg7[%c17_135, %c0_136, %c0_137] : memref<20x1x128xf32, #tpu.memory_space<vmem>>, vector<1x1x128xf32>
    %190 = vector.shape_cast %189 : vector<1x1x128xf32> to vector<1x128xf32>
    %191 = vector.broadcast %190 : vector<1x128xf32> to vector<64x128xf32>
    %192 = arith.addf %188, %191 : vector<64x128xf32>
    %cst_138 = arith.constant 0.000000e+00 : f32
    %193 = vector.broadcast %cst_138 : f32 to vector<64x128xf32>
    %194 = arith.maximumf %192, %193 : vector<64x128xf32>
    %195 = arith.truncf %194 : vector<64x128xf32> to vector<64x128xbf16>
    %c18 = arith.constant 18 : index
    %c0_139 = arith.constant 0 : index
    %c0_140 = arith.constant 0 : index
    %196 = vector.load %arg6[%c18, %c0_139, %c0_140] : memref<20x128x128xbf16, #tpu.memory_space<vmem>>, vector<1x128x128xbf16>
    %197 = vector.shape_cast %196 : vector<1x128x128xbf16> to vector<128x128xbf16>
    %cst_141 = arith.constant dense<0.000000e+00> : vector<64x128xf32>
    %198 = tpu.matmul %195, %197, %cst_141 {dimension_numbers = #tpu.dot_dimension_numbers<[1], [0], [0], [1], [0, 0, 1, 1], [], []>} : vector<64x128xbf16>, vector<128x128xbf16>, vector<64x128xf32> -> vector<64x128xf32>
    %c18_142 = arith.constant 18 : index
    %c0_143 = arith.constant 0 : index
    %c0_144 = arith.constant 0 : index
    %199 = vector.load %arg7[%c18_142, %c0_143, %c0_144] : memref<20x1x128xf32, #tpu.memory_space<vmem>>, vector<1x1x128xf32>
    %200 = vector.shape_cast %199 : vector<1x1x128xf32> to vector<1x128xf32>
    %201 = vector.broadcast %200 : vector<1x128xf32> to vector<64x128xf32>
    %202 = arith.addf %198, %201 : vector<64x128xf32>
    %cst_145 = arith.constant 0.000000e+00 : f32
    %203 = vector.broadcast %cst_145 : f32 to vector<64x128xf32>
    %204 = arith.maximumf %202, %203 : vector<64x128xf32>
    %205 = arith.truncf %204 : vector<64x128xf32> to vector<64x128xbf16>
    %c19 = arith.constant 19 : index
    %c0_146 = arith.constant 0 : index
    %c0_147 = arith.constant 0 : index
    %206 = vector.load %arg6[%c19, %c0_146, %c0_147] : memref<20x128x128xbf16, #tpu.memory_space<vmem>>, vector<1x128x128xbf16>
    %207 = vector.shape_cast %206 : vector<1x128x128xbf16> to vector<128x128xbf16>
    %cst_148 = arith.constant dense<0.000000e+00> : vector<64x128xf32>
    %208 = tpu.matmul %205, %207, %cst_148 {dimension_numbers = #tpu.dot_dimension_numbers<[1], [0], [0], [1], [0, 0, 1, 1], [], []>} : vector<64x128xbf16>, vector<128x128xbf16>, vector<64x128xf32> -> vector<64x128xf32>
    %c19_149 = arith.constant 19 : index
    %c0_150 = arith.constant 0 : index
    %c0_151 = arith.constant 0 : index
    %209 = vector.load %arg7[%c19_149, %c0_150, %c0_151] : memref<20x1x128xf32, #tpu.memory_space<vmem>>, vector<1x1x128xf32>
    %210 = vector.shape_cast %209 : vector<1x1x128xf32> to vector<1x128xf32>
    %211 = vector.broadcast %210 : vector<1x128xf32> to vector<64x128xf32>
    %212 = arith.addf %208, %211 : vector<64x128xf32>
    %cst_152 = arith.constant 0.000000e+00 : f32
    %213 = vector.broadcast %cst_152 : f32 to vector<64x128xf32>
    %214 = arith.maximumf %212, %213 : vector<64x128xf32>
    %215 = arith.truncf %214 : vector<64x128xf32> to vector<64x128xbf16>
    %216 = vector.extract_strided_slice %215 {offsets = [0, 0], sizes = [16, 128], strides = [1, 1]} : vector<64x128xbf16> to vector<16x128xbf16>
    %c0_153 = arith.constant 0 : index
    %c0_154 = arith.constant 0 : index
    %c0_155 = arith.constant 0 : index
    %217 = vector.load %arg8[%c0_153, %c0_154, %c0_155] : memref<4x128x128xbf16, #tpu.memory_space<vmem>>, vector<1x128x128xbf16>
    %218 = vector.shape_cast %217 : vector<1x128x128xbf16> to vector<128x128xbf16>
    %cst_156 = arith.constant dense<0.000000e+00> : vector<16x128xf32>
    %219 = tpu.matmul %216, %218, %cst_156 {dimension_numbers = #tpu.dot_dimension_numbers<[1], [0], [0], [1], [0, 0, 1, 1], [], []>} : vector<16x128xbf16>, vector<128x128xbf16>, vector<16x128xf32> -> vector<16x128xf32>
    %220 = vector.extract_strided_slice %215 {offsets = [16, 0], sizes = [16, 128], strides = [1, 1]} : vector<64x128xbf16> to vector<16x128xbf16>
    %c1_157 = arith.constant 1 : index
    %c0_158 = arith.constant 0 : index
    %c0_159 = arith.constant 0 : index
    %221 = vector.load %arg8[%c1_157, %c0_158, %c0_159] : memref<4x128x128xbf16, #tpu.memory_space<vmem>>, vector<1x128x128xbf16>
    %222 = vector.shape_cast %221 : vector<1x128x128xbf16> to vector<128x128xbf16>
    %cst_160 = arith.constant dense<0.000000e+00> : vector<16x128xf32>
    %223 = tpu.matmul %220, %222, %cst_160 {dimension_numbers = #tpu.dot_dimension_numbers<[1], [0], [0], [1], [0, 0, 1, 1], [], []>} : vector<16x128xbf16>, vector<128x128xbf16>, vector<16x128xf32> -> vector<16x128xf32>
    %224 = arith.addf %219, %223 : vector<16x128xf32>
    %225 = vector.extract_strided_slice %215 {offsets = [32, 0], sizes = [16, 128], strides = [1, 1]} : vector<64x128xbf16> to vector<16x128xbf16>
    %c2_161 = arith.constant 2 : index
    %c0_162 = arith.constant 0 : index
    %c0_163 = arith.constant 0 : index
    %226 = vector.load %arg8[%c2_161, %c0_162, %c0_163] : memref<4x128x128xbf16, #tpu.memory_space<vmem>>, vector<1x128x128xbf16>
    %227 = vector.shape_cast %226 : vector<1x128x128xbf16> to vector<128x128xbf16>
    %cst_164 = arith.constant dense<0.000000e+00> : vector<16x128xf32>
    %228 = tpu.matmul %225, %227, %cst_164 {dimension_numbers = #tpu.dot_dimension_numbers<[1], [0], [0], [1], [0, 0, 1, 1], [], []>} : vector<16x128xbf16>, vector<128x128xbf16>, vector<16x128xf32> -> vector<16x128xf32>
    %229 = arith.addf %224, %228 : vector<16x128xf32>
    %230 = vector.extract_strided_slice %215 {offsets = [48, 0], sizes = [16, 128], strides = [1, 1]} : vector<64x128xbf16> to vector<16x128xbf16>
    %c3_165 = arith.constant 3 : index
    %c0_166 = arith.constant 0 : index
    %c0_167 = arith.constant 0 : index
    %231 = vector.load %arg8[%c3_165, %c0_166, %c0_167] : memref<4x128x128xbf16, #tpu.memory_space<vmem>>, vector<1x128x128xbf16>
    %232 = vector.shape_cast %231 : vector<1x128x128xbf16> to vector<128x128xbf16>
    %cst_168 = arith.constant dense<0.000000e+00> : vector<16x128xf32>
    %233 = tpu.matmul %230, %232, %cst_168 {dimension_numbers = #tpu.dot_dimension_numbers<[1], [0], [0], [1], [0, 0, 1, 1], [], []>} : vector<16x128xbf16>, vector<128x128xbf16>, vector<16x128xf32> -> vector<16x128xf32>
    %234 = arith.addf %229, %233 : vector<16x128xf32>
    %c0_169 = arith.constant 0 : index
    %c0_170 = arith.constant 0 : index
    %235 = vector.load %arg9[%c0_169, %c0_170] : memref<1x128xf32, #tpu.memory_space<vmem>>, vector<1x128xf32>
    %236 = vector.broadcast %235 : vector<1x128xf32> to vector<16x128xf32>
    %237 = arith.addf %234, %236 : vector<16x128xf32>
    %cst_171 = arith.constant 0.000000e+00 : f32
    %238 = vector.broadcast %cst_171 : f32 to vector<16x128xf32>
    %239 = arith.maximumf %237, %238 : vector<16x128xf32>
    %240 = arith.truncf %239 : vector<16x128xf32> to vector<16x128xbf16>
    %c0_172 = arith.constant 0 : index
    %c0_173 = arith.constant 0 : index
    %241 = vector.load %arg10[%c0_172, %c0_173] : memref<128x128xbf16, #tpu.memory_space<vmem>>, vector<128x128xbf16>
    %cst_174 = arith.constant dense<0.000000e+00> : vector<16x128xf32>
    %242 = tpu.matmul %240, %241, %cst_174 {dimension_numbers = #tpu.dot_dimension_numbers<[1], [0], [0], [1], [0, 0, 1, 1], [], []>} : vector<16x128xbf16>, vector<128x128xbf16>, vector<16x128xf32> -> vector<16x128xf32>
    %c0_175 = arith.constant 0 : index
    %c0_176 = arith.constant 0 : index
    %243 = vector.load %arg11[%c0_175, %c0_176] : memref<1x128xf32, #tpu.memory_space<vmem>>, vector<1x128xf32>
    %244 = vector.broadcast %243 : vector<1x128xf32> to vector<16x128xf32>
    %245 = arith.addf %242, %244 : vector<16x128xf32>
    %c0_177 = arith.constant 0 : index
    %c0_178 = arith.constant 0 : index
    %246 = vector.load %arg12[%c0_177, %c0_178] : memref<16x128xf32, #tpu.memory_space<vmem>>, vector<16x128xf32>
    tpu.vector_store %arg12[%c0_177, %c0_178], %245 {strides = array<i32>} : memref<16x128xf32, #tpu.memory_space<vmem>>, vector<16x128xf32>,
    return
  }
  func.func @transform_0(%arg0: i32) -> (i32, i32) {
    %c0_i32 = arith.constant 0 : i32
    %c0_i32_0 = arith.constant 0 : i32
    return %arg0, %c0_i32 : i32, i32
  }
  func.func @transform_1(%arg0: i32) -> (i32, i32) {
    %c0_i32 = arith.constant 0 : i32
    %c0_i32_0 = arith.constant 0 : i32
    %c0_i32_1 = arith.constant 0 : i32
    return %c0_i32, %c0_i32_0 : i32, i32
  }
  func.func @transform_2(%arg0: i32) -> (i32, i32) {
    %c0_i32 = arith.constant 0 : i32
    %c0_i32_0 = arith.constant 0 : i32
    %c0_i32_1 = arith.constant 0 : i32
    return %c0_i32, %c0_i32_0 : i32, i32
  }
  func.func @transform_3(%arg0: i32) -> (i32, i32) {
    %c0_i32 = arith.constant 0 : i32
    %c0_i32_0 = arith.constant 0 : i32
    %c0_i32_1 = arith.constant 0 : i32
    return %c0_i32, %c0_i32_0 : i32, i32
  }
  func.func @transform_4(%arg0: i32) -> (i32, i32) {
    %c0_i32 = arith.constant 0 : i32
    %c0_i32_0 = arith.constant 0 : i32
    %c0_i32_1 = arith.constant 0 : i32
    return %c0_i32, %c0_i32_0 : i32, i32
  }
  func.func @transform_5(%arg0: i32) -> (i32, i32, i32) {
    %c0_i32 = arith.constant 0 : i32
    %c0_i32_0 = arith.constant 0 : i32
    %c0_i32_1 = arith.constant 0 : i32
    %c0_i32_2 = arith.constant 0 : i32
    return %c0_i32, %c0_i32_0, %c0_i32_1 : i32, i32, i32
  }
  func.func @transform_6(%arg0: i32) -> (i32, i32, i32) {
    %c0_i32 = arith.constant 0 : i32
    %c0_i32_0 = arith.constant 0 : i32
    %c0_i32_1 = arith.constant 0 : i32
    %c0_i32_2 = arith.constant 0 : i32
    return %c0_i32, %c0_i32_0, %c0_i32_1 : i32, i32, i32
  }
  func.func @transform_7(%arg0: i32) -> (i32, i32, i32) {
    %c0_i32 = arith.constant 0 : i32
    %c0_i32_0 = arith.constant 0 : i32
    %c0_i32_1 = arith.constant 0 : i32
    %c0_i32_2 = arith.constant 0 : i32
    return %c0_i32, %c0_i32_0, %c0_i32_1 : i32, i32, i32
  }
  func.func @transform_8(%arg0: i32) -> (i32, i32) {
    %c0_i32 = arith.constant 0 : i32
    %c0_i32_0 = arith.constant 0 : i32
    %c0_i32_1 = arith.constant 0 : i32
    return %c0_i32, %c0_i32_0 : i32, i32
  }
  func.func @transform_9(%arg0: i32) -> (i32, i32) {
    %c0_i32 = arith.constant 0 : i32
    %c0_i32_0 = arith.constant 0 : i32
    %c0_i32_1 = arith.constant 0 : i32
    return %c0_i32, %c0_i32_0 : i32, i32
  }
  func.func @transform_10(%arg0: i32) -> (i32, i32) {
    %c0_i32 = arith.constant 0 : i32
    %c0_i32_0 = arith.constant 0 : i32
    %c0_i32_1 = arith.constant 0 : i32
    return %c0_i32, %c0_i32_0 : i32, i32
  }
  func.func @transform_11(%arg0: i32) -> (i32, i32) {
    %c0_i32 = arith.constant 0 : i32
    %c0_i32_0 = arith.constant 0 : i32
    return %arg0, %c0_i32 : i32, i32
  }
}

</mosaic_0001>

<llo_original>
// kernel: deepcnnx_forward.1
$region0: #{deepcnnx_forward.1}
  #allocation0 [shape = 'u32[]', space=smem, size = 0x4, offset = 0x4, fixed_abs, tag = 'smem constant byte address 0x4 - core index']
  #allocation1 [shape = 'u32[144,128]{1,0:T(1,128)}', space=vmem, size = 0x12000, scoped, tag = 'internal scratch']
  %s0 = inlined_call_operand.vmem [shape: f32[64,81], index: 0, kind: input, shape index: {}]
  %s1 = inlined_call_operand.vmem [shape: f32[81,18], index: 1, kind: input, shape index: {}]
  %s2 = inlined_call_operand.vmem [shape: f32[1,18], index: 2, kind: input, shape index: {}]
  %s3 = inlined_call_operand.vmem [shape: f32[18,128], index: 3, kind: input, shape index: {}]
  %s4 = inlined_call_operand.vmem [shape: f32[1,128], index: 4, kind: input, shape index: {}]
  %s5 = inlined_call_operand.vmem [shape: bf16[20,128,128], index: 5, kind: input, shape index: {}]
  %s6 = inlined_call_operand.vmem [shape: f32[20,1,128], index: 6, kind: input, shape index: {}]
  %s7 = inlined_call_operand.vmem [shape: bf16[4,128,128], index: 7, kind: input, shape index: {}]
  %s8 = inlined_call_operand.vmem [shape: f32[1,128], index: 8, kind: input, shape index: {}]
  %s9 = inlined_call_operand.vmem [shape: bf16[128,128], index: 9, kind: input, shape index: {}]
  %s10 = inlined_call_operand.vmem [shape: f32[1,128], index: 10, kind: input, shape index: {}]
  %s11 = inlined_call_operand.vmem [shape: f32[16,128], index: 11, kind: output, shape index: {}]
  %s12 = sld [smem:[#allocation0]]
  $region54: #{deepcnnx_forward.1} parent=0
    _
  %s14 = ssub.s32 1, %s12
  %s15 = scalar_select 0, %s14, %s12
  // Predicated region
  $region2: #{deepcnnx_forward.1} parent=0 // pred_check
    _
  $region3: #{deepcnnx_forward.1} parent=0 // pred_check_branch
    %17 = sbr.rel (0) target = $region5
  $region4: #{deepcnnx_forward.1} parent=0 // pred_region
    _
  $region5: #{deepcnnx_forward.1} parent=0 // pred_fallthru
    _
  // Predicated region
  $region6: #{deepcnnx_forward.1} parent=0 // pred_check
    _
  $region7: #{deepcnnx_forward.1} parent=0 // pred_check_branch
    %19 = sbr.rel (0) target = $region9
  $region8: #{deepcnnx_forward.1} parent=0 // pred_region
    _
  $region9: #{deepcnnx_forward.1} parent=0 // pred_fallthru
    _
  // Predicated region
  $region10: #{deepcnnx_forward.1} parent=0 // pred_check
    _
  $region11: #{deepcnnx_forward.1} parent=0 // pred_check_branch
    %21 = sbr.rel (0) target = $region13
  $region12: #{deepcnnx_forward.1} parent=0 // pred_region
    _
  $region13: #{deepcnnx_forward.1} parent=0 // pred_fallthru
    _
  // Predicated region
  $region14: #{deepcnnx_forward.1} parent=0 // pred_check
    _
  $region15: #{deepcnnx_forward.1} parent=0 // pred_check_branch
    %23 = sbr.rel (0) target = $region17
  $region16: #{deepcnnx_forward.1} parent=0 // pred_region
    _
  $region17: #{deepcnnx_forward.1} parent=0 // pred_fallthru
    _
  // Predicated region
  $region18: #{deepcnnx_forward.1} parent=0 // pred_check
    _
  $region19: #{deepcnnx_forward.1} parent=0 // pred_check_branch
    %25 = sbr.rel (0) target = $region21
  $region20: #{deepcnnx_forward.1} parent=0 // pred_region
    _
  $region21: #{deepcnnx_forward.1} parent=0 // pred_fallthru
    _
  // Predicated region
  $region22: #{deepcnnx_forward.1} parent=0 // pred_check
    _
  $region23: #{deepcnnx_forward.1} parent=0 // pred_check_branch
    %27 = sbr.rel (0) target = $region25
  $region24: #{deepcnnx_forward.1} parent=0 // pred_region
    _
  $region25: #{deepcnnx_forward.1} parent=0 // pred_fallthru
    _
  // Predicated region
  $region26: #{deepcnnx_forward.1} parent=0 // pred_check
    _
  $region27: #{deepcnnx_forward.1} parent=0 // pred_check_branch
    %29 = sbr.rel (0) target = $region29
  $region28: #{deepcnnx_forward.1} parent=0 // pred_region
    _
  $region29: #{deepcnnx_forward.1} parent=0 // pred_fallthru
    _
  // Predicated region
  $region30: #{deepcnnx_forward.1} parent=0 // pred_check
    _
  $region31: #{deepcnnx_forward.1} parent=0 // pred_check_branch
    %31 = sbr.rel (0) target = $region33
  $region32: #{deepcnnx_forward.1} parent=0 // pred_region
    _
  $region33: #{deepcnnx_forward.1} parent=0 // pred_fallthru
    _
  // Predicated region
  $region34: #{deepcnnx_forward.1} parent=0 // pred_check
    _
  $region35: #{deepcnnx_forward.1} parent=0 // pred_check_branch
    %33 = sbr.rel (0) target = $region37
  $region36: #{deepcnnx_forward.1} parent=0 // pred_region
    _
  $region37: #{deepcnnx_forward.1} parent=0 // pred_fallthru
    _
  // Predicated region
  $region38: #{deepcnnx_forward.1} parent=0 // pred_check
    _
  $region39: #{deepcnnx_forward.1} parent=0 // pred_check_branch
    %35 = sbr.rel (0) target = $region41
  $region40: #{deepcnnx_forward.1} parent=0 // pred_region
    _
  $region41: #{deepcnnx_forward.1} parent=0 // pred_fallthru
    _
  // Predicated region
  $region42: #{deepcnnx_forward.1} parent=0 // pred_check
    _
  $region43: #{deepcnnx_forward.1} parent=0 // pred_check_branch
    %37 = sbr.rel (0) target = $region45
  $region44: #{deepcnnx_forward.1} parent=0 // pred_region
    _
  $region45: #{deepcnnx_forward.1} parent=0 // pred_fallthru
    _
  %v39 = vld [vmem:[%s0] sm:$0xff]
  %v40 = vld [vmem:[%s0 + $0x8] sm:$0xff]
  %v41 = vld [vmem:[%s0 + $0x10] sm:$0xff]
  %v42 = vld [vmem:[%s0 + $0x18] sm:$0xff]
  %v43 = vld [vmem:[%s0 + $0x20] sm:$0xff]
  %v44 = vld [vmem:[%s0 + $0x28] sm:$0xff]
  %v45 = vld [vmem:[%s0 + $0x30] sm:$0xff]
  %v46 = vld [vmem:[%s0 + $0x38] sm:$0xff]
  %v47 = vld [vmem:[%s1] sm:$0xff]
  %v48 = vld [vmem:[%s1 + $0x8] sm:$0xff]
  %v49 = vld [vmem:[%s1 + $0x10] sm:$0xff]
  %v50 = vld [vmem:[%s1 + $0x18] sm:$0xff]
  %v51 = vld [vmem:[%s1 + $0x20] sm:$0xff]
  %v52 = vld [vmem:[%s1 + $0x28] sm:$0xff]
  %v53 = vld [vmem:[%s1 + $0x30] sm:$0xff]
  %v54 = vld [vmem:[%s1 + $0x38] sm:$0xff]
  %v55 = vld [vmem:[%s1 + $0x40] sm:$0xff]
  %v56 = vld [vmem:[%s1 + $0x48] sm:$0xff]
  %v57 = vld [vmem:[%s1 + $0x50] sm:$0x1]
  %v58 = vld [vmem:[%s2] sm:$0x1]
  %v60 = vlaneseq
  %v61 = vshrl.u32 %v60, 7
  %v62 = vsub.s32 0, %v61
  %v63 = vrot.slane %v58, %v62
  %vm65 = vcmask 662528
  %v67 = vsel %vm65, %v39, 0
  %v70 = vsel %vm65, %v40, 0
  %v73 = vsel %vm65, %v41, 0
  %v76 = vsel %vm65, %v42, 0
  %v79 = vsel %vm65, %v43, 0
  %v82 = vsel %vm65, %v44, 0
  %v85 = vsel %vm65, %v45, 0
  %v88 = vsel %vm65, %v46, 0
  %vm90 = vcmask 1040384
  %v92 = vsel %vm90, %v57, 0
  %94 = vmatprep.subr.mxu0 0.0
  %95 = vmatpush1.msra.mxu0 %v47
  %96 = vmatprep.subr.mxu0 0.0
  %97 = vmatpush1.msra.mxu0 %v48
  %98 = vmatprep.subr.mxu0 0.0
  %99 = vmatpush1.msra.mxu0 %v49
  %100 = vmatprep.subr.mxu0 0.0
  %101 = vmatpush1.msra.mxu0 %v50
  %102 = vmatprep.subr.mxu0 0.0
  %103 = vmatpush1.msra.mxu0 %v51
  %104 = vmatprep.subr.mxu0 0.0
  %105 = vmatpush1.msra.mxu0 %v52
  %106 = vmatprep.subr.mxu0 0.0
  %107 = vmatpush1.msra.mxu0 %v53
  %108 = vmatprep.subr.mxu0 0.0
  %109 = vmatpush1.msra.mxu0 %v54
  %110 = vmatprep.subr.mxu0 0.0
  %111 = vmatpush1.msra.mxu0 %v55
  %112 = vmatprep.subr.mxu0 0.0
  %113 = vmatpush1.msra.mxu0 %v56
  %114 = vmatprep.subr.mxu0 0.0
  %115 = vmatpush1.msra.mxu0 %v92
  %116 = vmatprep.subr.mxu0 0.0
  %117 = vmatpush1.msra.mxu0 0.0
  %118 = vmatprep.subr.mxu0 0.0
  %119 = vmatpush1.msra.mxu0 0.0
  %120 = vmatprep.subr.mxu0 0.0
  %121 = vmatpush1.msra.mxu0 0.0
  %122 = vmatprep.subr.mxu0 0.0
  %123 = vmatpush1.msra.mxu0 0.0
  %124 = vmatprep.subr.mxu0 0.0
  %125 = vmatpush1.msra.mxu0 0.0
  %126 = vmatprep.subr.mxu0 0.0
  %127 = vmatpush1.msra.mxu0 0.0
  %128 = vmatprep.subr.mxu0 0.0
  %129 = vmatpush1.msra.mxu0 0.0
  %130 = vmatprep.subr.mxu0 0.0
  %131 = vmatpush1.msra.mxu0 0.0
  %132 = vmatprep.subr.mxu0 0.0
  %133 = vmatpush1.msra.mxu0 0.0
  %134 = vmatprep.subr.mxu0 0.0
  %135 = vmatpush1.msra.mxu0 0.0
  %136 = vmatprep.subr.mxu0 0.0
  %137 = vmatpush1.msra.mxu0 0.0
  %138 = vmatprep.subr.mxu0 0.0
  %139 = vmatpush1.msra.mxu0 0.0
  %140 = vmatprep.subr.mxu0 0.0
  %141 = vmatpush1.msra.mxu0 0.0
  %142 = vmatprep.subr.mxu0 0.0
  %143 = vmatpush1.msra.mxu0 0.0
  %144 = vmatprep.subr.mxu0 0.0
  %145 = vmatpush1.msra.mxu0 0.0
  %146 = vmatprep.subr.mxu0 0.0
  %147 = vmatpush1.msra.mxu0 0.0
  %148 = vmatprep.subr.mxu0 0.0
  %149 = vmatpush1.msra.mxu0 0.0
  %150 = vmatprep.subr.mxu0 0.0
  %151 = vmatpush1.msra.mxu0 0.0
  %152 = vmatprep.subr.mxu0 0.0
  %153 = vmatpush1.msra.mxu0 0.0
  %154 = vmatprep.subr.mxu0 0.0
  %155 = vmatpush1.msra.mxu0 0.0
  %156 = vmatprep.subr.mxu0 0.0
  %157 = vmatpush1.msra.mxu0 0.0
  %158 = vmatprep.mubr.f32.mxu0 0.0
  %159 = vmatmul.mubr.f32.gmra.mrb[0].mxu0 %v67
  %v160 = vpop.f32.mrb[0].mxu0
  %v161 = vadd.f32 %v63, %v160
  %v162 = vpop.f32.mrb[0].mxu0
  %163 = vmatprep.mubr.f32.mxu0 0.0
  %164 = vmatmul.mubr.f32.gmra.mrb[0].mxu0 %v70
  %v165 = vpop.f32.mrb[0].mxu0
  %v166 = vadd.f32 %v63, %v165
  %v167 = vpop.f32.mrb[0].mxu0
  %168 = vmatprep.mubr.f32.mxu0 0.0
  %169 = vmatmul.mubr.f32.gmra.mrb[0].mxu0 %v73
  %v170 = vpop.f32.mrb[0].mxu0
  %v171 = vadd.f32 %v63, %v170
  %v172 = vpop.f32.mrb[0].mxu0
  %173 = vmatprep.mubr.f32.mxu0 0.0
  %174 = vmatmul.mubr.f32.gmra.mrb[0].mxu0 %v76
  %v175 = vpop.f32.mrb[0].mxu0
  %v176 = vadd.f32 %v63, %v175
  %v177 = vpop.f32.mrb[0].mxu0
  %178 = vmatprep.mubr.f32.mxu0 0.0
  %179 = vmatmul.mubr.f32.gmra.mrb[0].mxu0 %v79
  %v180 = vpop.f32.mrb[0].mxu0
  %v181 = vadd.f32 %v63, %v180
  %v182 = vpop.f32.mrb[0].mxu0
  %183 = vmatprep.mubr.f32.mxu0 0.0
  %184 = vmatmul.mubr.f32.gmra.mrb[0].mxu0 %v82
  %v185 = vpop.f32.mrb[0].mxu0
  %v186 = vadd.f32 %v63, %v185
  %v187 = vpop.f32.mrb[0].mxu0
  %188 = vmatprep.mubr.f32.mxu0 0.0
  %189 = vmatmul.mubr.f32.gmra.mrb[0].mxu0 %v85
  %v190 = vpop.f32.mrb[0].mxu0
  %v191 = vadd.f32 %v63, %v190
  %v192 = vpop.f32.mrb[0].mxu0
  %193 = vmatprep.mubr.f32.mxu0 0.0
  %194 = vmatmul.mubr.f32.gmra.mrb[0].mxu0 %v88
  %v195 = vpop.f32.mrb[0].mxu0
  %v196 = vadd.f32 %v63, %v195
  %v197 = vpop.f32.mrb[0].mxu0
  %198 = vdwg.mxu0
  %v199 = vmax.f32 %v161, 0.0
  %v200 = vmax.f32 %v166, 0.0
  %v201 = vmax.f32 %v171, 0.0
  %v202 = vmax.f32 %v176, 0.0
  %v203 = vmax.f32 %v181, 0.0
  %v204 = vmax.f32 %v186, 0.0
  %v205 = vmax.f32 %v191, 0.0
  %v206 = vmax.f32 %v196, 0.0
  %v207 = vld [vmem:[%s3] sm:$0xff]
  %v208 = vld [vmem:[%s3 + $0x8] sm:$0xff]
  %v209 = vld [vmem:[%s3 + $0x10] sm:$0x3]
  %v210 = vld [vmem:[%s4] sm:$0x1]
  %v212 = vlaneseq
  %v213 = vshrl.u32 %v212, 7
  %v214 = vsub.s32 0, %v213
  %v215 = vrot.slane %v210, %v214
  %vm217 = vcmask 146432
  %v219 = vsel %vm217, %v199, 0
  %v222 = vsel %vm217, %v200, 0
  %v225 = vsel %vm217, %v201, 0
  %v228 = vsel %vm217, %v202, 0
  %v231 = vsel %vm217, %v203, 0
  %v234 = vsel %vm217, %v204, 0
  %v237 = vsel %vm217, %v205, 0
  %v240 = vsel %vm217, %v206, 0
  %vm242 = vcmask 1041408
  %v244 = vsel %vm242, %v209, 0
  %246 = vmatprep.subr.mxu0 0.0
  %247 = vmatpush1.msra.mxu0 %v207
  %248 = vmatprep.subr.mxu0 0.0
  %249 = vmatpush1.msra.mxu0 %v208
  %250 = vmatprep.subr.mxu0 0.0
  %251 = vmatpush1.msra.mxu0 %v244
  %252 = vmatprep.subr.mxu0 0.0
  %253 = vmatpush1.msra.mxu0 0.0
  %254 = vmatprep.subr.mxu0 0.0
  %255 = vmatpush1.msra.mxu0 0.0
  %256 = vmatprep.subr.mxu0 0.0
  %257 = vmatpush1.msra.mxu0 0.0
  %258 = vmatprep.subr.mxu0 0.0
  %259 = vmatpush1.msra.mxu0 0.0
  %260 = vmatprep.subr.mxu0 0.0
  %261 = vmatpush1.msra.mxu0 0.0
  %262 = vmatprep.subr.mxu0 0.0
  %263 = vmatpush1.msra.mxu0 0.0
  %264 = vmatprep.subr.mxu0 0.0
  %265 = vmatpush1.msra.mxu0 0.0
  %266 = vmatprep.subr.mxu0 0.0
  %267 = vmatpush1.msra.mxu0 0.0
  %268 = vmatprep.subr.mxu0 0.0
  %269 = vmatpush1.msra.mxu0 0.0
  %270 = vmatprep.subr.mxu0 0.0
  %271 = vmatpush1.msra.mxu0 0.0
  %272 = vmatprep.subr.mxu0 0.0
  %273 = vmatpush1.msra.mxu0 0.0
  %274 = vmatprep.subr.mxu0 0.0
  %275 = vmatpush1.msra.mxu0 0.0
  %276 = vmatprep.subr.mxu0 0.0
  %277 = vmatpush1.msra.mxu0 0.0
  %278 = vmatprep.subr.mxu0 0.0
  %279 = vmatpush1.msra.mxu0 0.0
  %280 = vmatprep.subr.mxu0 0.0
  %281 = vmatpush1.msra.mxu0 0.0
  %282 = vmatprep.subr.mxu0 0.0
  %283 = vmatpush1.msra.mxu0 0.0
  %284 = vmatprep.subr.mxu0 0.0
  %285 = vmatpush1.msra.mxu0 0.0
  %286 = vmatprep.subr.mxu0 0.0
  %287 = vmatpush1.msra.mxu0 0.0
  %288 = vmatprep.subr.mxu0 0.0
  %289 = vmatpush1.msra.mxu0 0.0
  %290 = vmatprep.subr.mxu0 0.0
  %291 = vmatpush1.msra.mxu0 0.0
  %292 = vmatprep.subr.mxu0 0.0
  %293 = vmatpush1.msra.mxu0 0.0
  %294 = vmatprep.subr.mxu0 0.0
  %295 = vmatpush1.msra.mxu0 0.0
  %296 = vmatprep.subr.mxu0 0.0
  %297 = vmatpush1.msra.mxu0 0.0
  %298 = vmatprep.subr.mxu0 0.0
  %299 = vmatpush1.msra.mxu0 0.0
  %300 = vmatprep.subr.mxu0 0.0
  %301 = vmatpush1.msra.mxu0 0.0
  %302 = vmatprep.subr.mxu0 0.0
  %303 = vmatpush1.msra.mxu0 0.0
  %304 = vmatprep.subr.mxu0 0.0
  %305 = vmatpush1.msra.mxu0 0.0
  %306 = vmatprep.subr.mxu0 0.0
  %307 = vmatpush1.msra.mxu0 0.0
  %308 = vmatprep.subr.mxu0 0.0
  %309 = vmatpush1.msra.mxu0 0.0
  %310 = vmatprep.mubr.f32.mxu0 0.0
  %311 = vmatmul.mubr.f32.gmra.mrb[0].mxu0 %v219
  %v312 = vpop.f32.mrb[0].mxu0
  %v313 = vadd.f32 %v215, %v312
  %v314 = vpop.f32.mrb[0].mxu0
  %315 = vmatprep.mubr.f32.mxu0 0.0
  %316 = vmatmul.mubr.f32.gmra.mrb[0].mxu0 %v222
  %v317 = vpop.f32.mrb[0].mxu0
  %v318 = vadd.f32 %v215, %v317
  %v319 = vpop.f32.mrb[0].mxu0
  %320 = vmatprep.mubr.f32.mxu0 0.0
  %321 = vmatmul.mubr.f32.gmra.mrb[0].mxu0 %v225
  %v322 = vpop.f32.mrb[0].mxu0
  %v323 = vadd.f32 %v215, %v322
  %v324 = vpop.f32.mrb[0].mxu0
  %325 = vmatprep.mubr.f32.mxu0 0.0
  %326 = vmatmul.mubr.f32.gmra.mrb[0].mxu0 %v228
  %v327 = vpop.f32.mrb[0].mxu0
  %v328 = vadd.f32 %v215, %v327
  %v329 = vpop.f32.mrb[0].mxu0
  %330 = vmatprep.mubr.f32.mxu0 0.0
  %331 = vmatmul.mubr.f32.gmra.mrb[0].mxu0 %v231
  %v332 = vpop.f32.mrb[0].mxu0
  %v333 = vadd.f32 %v215, %v332
  %v334 = vpop.f32.mrb[0].mxu0
  %335 = vmatprep.mubr.f32.mxu0 0.0
  %336 = vmatmul.mubr.f32.gmra.mrb[0].mxu0 %v234
  %v337 = vpop.f32.mrb[0].mxu0
  %v338 = vadd.f32 %v215, %v337
  %v339 = vpop.f32.mrb[0].mxu0
  %340 = vmatprep.mubr.f32.mxu0 0.0
  %341 = vmatmul.mubr.f32.gmra.mrb[0].mxu0 %v237
  %v342 = vpop.f32.mrb[0].mxu0
  %v343 = vadd.f32 %v215, %v342
  %v344 = vpop.f32.mrb[0].mxu0
  %345 = vmatprep.mubr.f32.mxu0 0.0
  %346 = vmatmul.mubr.f32.gmra.mrb[0].mxu0 %v240
  %v347 = vpop.f32.mrb[0].mxu0
  %v348 = vadd.f32 %v215, %v347
  %v349 = vpop.f32.mrb[0].mxu0
  %350 = vdwg.mxu0
  %v351 = vmax.f32 %v313, 0.0
  %v352 = vmax.f32 %v318, 0.0
  %v353 = vmax.f32 %v323, 0.0
  %v354 = vmax.f32 %v328, 0.0
  %v355 = vmax.f32 %v333, 0.0
  %v356 = vmax.f32 %v338, 0.0
  %v357 = vmax.f32 %v343, 0.0
  %v358 = vmax.f32 %v348, 0.0
  %v359 = vpack.c.bf16 %v352, %v351
  %v360 = vpack.c.bf16 %v354, %v353
  %v361 = vpack.c.bf16 %v356, %v355
  %v362 = vpack.c.bf16 %v358, %v357
  %v363 = vld [vmem:[%s5] sm:$0xf]
  %v364 = vld [vmem:[%s5 + $0x4] sm:$0xf]
  %v365 = vld [vmem:[%s5 + $0x8] sm:$0xf]
  %v366 = vld [vmem:[%s5 + $0xc] sm:$0xf]
  %v367 = vld [vmem:[%s5 + $0x10] sm:$0xf]
  %v368 = vld [vmem:[%s5 + $0x14] sm:$0xf]
  %v369 = vld [vmem:[%s5 + $0x18] sm:$0xf]
  %v370 = vld [vmem:[%s5 + $0x1c] sm:$0xf]
  %v371 = vld [vmem:[%s5 + $0x20] sm:$0xf]
  %v372 = vld [vmem:[%s5 + $0x24] sm:$0xf]
  %v373 = vld [vmem:[%s5 + $0x28] sm:$0xf]
  %v374 = vld [vmem:[%s5 + $0x2c] sm:$0xf]
  %v375 = vld [vmem:[%s5 + $0x30] sm:$0xf]
  %v376 = vld [vmem:[%s5 + $0x34] sm:$0xf]
  %v377 = vld [vmem:[%s5 + $0x38] sm:$0xf]
  %v378 = vld [vmem:[%s5 + $0x3c] sm:$0xf]
  %v379 = vld [vmem:[%s6] sm:$0x1]
  %v381 = vlaneseq
  %v382 = vshrl.u32 %v381, 7
  %v383 = vsub.s32 0, %v382
  %v384 = vrot.slane %v379, %v383
  %v402 = vunpack.c.l.b16 %v363
  %v403 = vunpack.c.l.b16 %v364
  %v404 = vunpack.c.l.b16 %v365
  %v405 = vunpack.c.l.b16 %v366
  %v406 = vunpack.c.l.b16 %v367
  %v407 = vunpack.c.l.b16 %v368
  %v408 = vunpack.c.l.b16 %v369
  %v409 = vunpack.c.l.b16 %v370
  %v410 = vunpack.c.l.b16 %v371
  %v411 = vunpack.c.l.b16 %v372
  %v412 = vunpack.c.l.b16 %v373
  %v413 = vunpack.c.l.b16 %v374
  %v414 = vunpack.c.l.b16 %v375
  %v415 = vunpack.c.l.b16 %v376
  %v416 = vunpack.c.l.b16 %v377
  %v417 = vunpack.c.l.b16 %v378
  %v418 = vpack.c.b16 %v403, %v402
  %v419 = vpack.c.b16 %v405, %v404
  %v420 = vpack.c.b16 %v407, %v406
  %v421 = vpack.c.b16 %v409, %v408
  %v422 = vpack.c.b16 %v411, %v410
  %v423 = vpack.c.b16 %v413, %v412
  %v424 = vpack.c.b16 %v415, %v414
  %v425 = vpack.c.b16 %v417, %v416
  %434 = vmatprep.subr.bf16.mxu0 0
  %435 = vmatpush1.bf16.msra.mxu0 %v418
  %436 = vmatprep.subr.bf16.mxu0 0
  %437 = vmatpush1.bf16.msra.mxu0 %v419
  %438 = vmatprep.subr.bf16.mxu0 0
  %439 = vmatpush1.bf16.msra.mxu0 %v420
  %440 = vmatprep.subr.bf16.mxu0 0
  %441 = vmatpush1.bf16.msra.mxu0 %v421
  %442 = vmatprep.subr.bf16.mxu0 0
  %443 = vmatpush1.bf16.msra.mxu0 %v422
  %444 = vmatprep.subr.bf16.mxu0 0
  %445 = vmatpush1.bf16.msra.mxu0 %v423
  %446 = vmatprep.subr.bf16.mxu0 0
  %447 = vmatpush1.bf16.msra.mxu0 %v424
  %448 = vmatprep.subr.bf16.mxu0 0
  %449 = vmatpush1.bf16.msra.mxu0 %v425
  %450 = vmatprep.subr.bf16.mxu0 0
  %451 = vmatpush1.bf16.msra.mxu0 0
  %452 = vmatprep.subr.bf16.mxu0 0
  %453 = vmatpush1.bf16.msra.mxu0 0
  %454 = vmatprep.subr.bf16.mxu0 0
  %455 = vmatpush1.bf16.msra.mxu0 0
  %456 = vmatprep.subr.bf16.mxu0 0
  %457 = vmatpush1.bf16.msra.mxu0 0
  %458 = vmatprep.subr.bf16.mxu0 0
  %459 = vmatpush1.bf16.msra.mxu0 0
  %460 = vmatprep.subr.bf16.mxu0 0
  %461 = vmatpush1.bf16.msra.mxu0 0
  %462 = vmatprep.subr.bf16.mxu0 0
  %463 = vmatpush1.bf16.msra.mxu0 0
  %464 = vmatprep.subr.bf16.mxu0 0
  %465 = vmatpush1.bf16.msra.mxu0 0
  %466 = vmatprep.mubr.bf16.mxu0 0
  %467 = vmatmul.mubr.bf16.gmra.mrb[0].mxu0 %v359
  %v468 = vpop.f32.mrb[0].mxu0
  %v469 = vadd.f32 %v384, %v468
  %v470 = vpop.f32.mrb[0].mxu0
  %v471 = vpop.f32.mrb[0].mxu0
  %v472 = vadd.f32 %v384, %v471
  %v473 = vpop.f32.mrb[0].mxu0
  %474 = vmatprep.mubr.bf16.mxu0 0
  %475 = vmatmul.mubr.bf16.gmra.mrb[0].mxu0 %v360
  %v476 = vpop.f32.mrb[0].mxu0
  %v477 = vadd.f32 %v384, %v476
  %v478 = vpop.f32.mrb[0].mxu0
  %v479 = vpop.f32.mrb[0].mxu0
  %v480 = vadd.f32 %v384, %v479
  %v481 = vpop.f32.mrb[0].mxu0
  %482 = vmatprep.mubr.bf16.mxu0 0
  %483 = vmatmul.mubr.bf16.gmra.mrb[0].mxu0 %v361
  %v484 = vpop.f32.mrb[0].mxu0
  %v485 = vadd.f32 %v384, %v484
  %v486 = vpop.f32.mrb[0].mxu0
  %v487 = vpop.f32.mrb[0].mxu0
  %v488 = vadd.f32 %v384, %v487
  %v489 = vpop.f32.mrb[0].mxu0
  %490 = vmatprep.mubr.bf16.mxu0 0
  %491 = vmatmul.mubr.bf16.gmra.mrb[0].mxu0 %v362
  %v492 = vpop.f32.mrb[0].mxu0
  %v493 = vadd.f32 %v384, %v492
  %v494 = vpop.f32.mrb[0].mxu0
  %v495 = vpop.f32.mrb[0].mxu0
  %v496 = vadd.f32 %v384, %v495
  %v497 = vpop.f32.mrb[0].mxu0
  %498 = vdwg.mxu0
  %v499 = vmax.f32 %v469, 0.0
  %v500 = vmax.f32 %v472, 0.0
  %v501 = vmax.f32 %v477, 0.0
  %v502 = vmax.f32 %v480, 0.0
  %v503 = vmax.f32 %v485, 0.0
  %v504 = vmax.f32 %v488, 0.0
  %v505 = vmax.f32 %v493, 0.0
  %v506 = vmax.f32 %v496, 0.0
  %v507 = vpack.c.bf16 %v500, %v499
  %v508 = vpack.c.bf16 %v502, %v501
  %v509 = vpack.c.bf16 %v504, %v503
  %v510 = vpack.c.bf16 %v506, %v505
  %s511 = scalar_lea.vmem %s5, 64
  %v512 = vld [vmem:[%s511] sm:$0xf]
  %v513 = vld [vmem:[%s511 + $0x4] sm:$0xf]
  %v514 = vld [vmem:[%s511 + $0x8] sm:$0xf]
  %v515 = vld [vmem:[%s511 + $0xc] sm:$0xf]
  %v516 = vld [vmem:[%s511 + $0x10] sm:$0xf]
  %v517 = vld [vmem:[%s511 + $0x14] sm:$0xf]
  %v518 = vld [vmem:[%s511 + $0x18] sm:$0xf]
  %v519 = vld [vmem:[%s511 + $0x1c] sm:$0xf]
  %v520 = vld [vmem:[%s511 + $0x20] sm:$0xf]
  %v521 = vld [vmem:[%s511 + $0x24] sm:$0xf]
  %v522 = vld [vmem:[%s511 + $0x28] sm:$0xf]
  %v523 = vld [vmem:[%s511 + $0x2c] sm:$0xf]
  %v524 = vld [vmem:[%s511 + $0x30] sm:$0xf]
  %v525 = vld [vmem:[%s511 + $0x34] sm:$0xf]
  %v526 = vld [vmem:[%s511 + $0x38] sm:$0xf]
  %v527 = vld [vmem:[%s511 + $0x3c] sm:$0xf]
  %s528 = scalar_lea.vmem %s6, 1
  %v529 = vld [vmem:[%s528] sm:$0x1]
  %v531 = vlaneseq
  %v532 = vshrl.u32 %v531, 7
  %v533 = vsub.s32 0, %v532
  %v534 = vrot.slane %v529, %v533
  %v552 = vunpack.c.l.b16 %v512
  %v553 = vunpack.c.l.b16 %v513
  %v554 = vunpack.c.l.b16 %v514
  %v555 = vunpack.c.l.b16 %v515
  %v556 = vunpack.c.l.b16 %v516
  %v557 = vunpack.c.l.b16 %v517
  %v558 = vunpack.c.l.b16 %v518
  %v559 = vunpack.c.l.b16 %v519
  %v560 = vunpack.c.l.b16 %v520
  %v561 = vunpack.c.l.b16 %v521
  %v562 = vunpack.c.l.b16 %v522
  %v563 = vunpack.c.l.b16 %v523
  %v564 = vunpack.c.l.b16 %v524
  %v565 = vunpack.c.l.b16 %v525
  %v566 = vunpack.c.l.b16 %v526
  %v567 = vunpack.c.l.b16 %v527
  %v568 = vpack.c.b16 %v553, %v552
  %v569 = vpack.c.b16 %v555, %v554
  %v570 = vpack.c.b16 %v557, %v556
  %v571 = vpack.c.b16 %v559, %v558
  %v572 = vpack.c.b16 %v561, %v560
  %v573 = vpack.c.b16 %v563, %v562
  %v574 = vpack.c.b16 %v565, %v564
  %v575 = vpack.c.b16 %v567, %v566
  %584 = vmatprep.subr.bf16.mxu0 0
  %585 = vmatpush1.bf16.msra.mxu0 %v568
  %586 = vmatprep.subr.bf16.mxu0 0
  %587 = vmatpush1.bf16.msra.mxu0 %v569
  %588 = vmatprep.subr.bf16.mxu0 0
  %589 = vmatpush1.bf16.msra.mxu0 %v570
  %590 = vmatprep.subr.bf16.mxu0 0
  %591 = vmatpush1.bf16.msra.mxu0 %v571
  %592 = vmatprep.subr.bf16.mxu0 0
  %593 = vmatpush1.bf16.msra.mxu0 %v572
  %594 = vmatprep.subr.bf16.mxu0 0
  %595 = vmatpush1.bf16.msra.mxu0 %v573
  %596 = vmatprep.subr.bf16.mxu0 0
  %597 = vmatpush1.bf16.msra.mxu0 %v574
  %598 = vmatprep.subr.bf16.mxu0 0
  %599 = vmatpush1.bf16.msra.mxu0 %v575
  %600 = vmatprep.subr.bf16.mxu0 0
  %601 = vmatpush1.bf16.msra.mxu0 0
  %602 = vmatprep.subr.bf16.mxu0 0
  %603 = vmatpush1.bf16.msra.mxu0 0
  %604 = vmatprep.subr.bf16.mxu0 0
  %605 = vmatpush1.bf16.msra.mxu0 0
  %606 = vmatprep.subr.bf16.mxu0 0
  %607 = vmatpush1.bf16.msra.mxu0 0
  %608 = vmatprep.subr.bf16.mxu0 0
  %609 = vmatpush1.bf16.msra.mxu0 0
  %610 = vmatprep.subr.bf16.mxu0 0
  %611 = vmatpush1.bf16.msra.mxu0 0
  %612 = vmatprep.subr.bf16.mxu0 0
  %613 = vmatpush1.bf16.msra.mxu0 0
  %614 = vmatprep.subr.bf16.mxu0 0
  %615 = vmatpush1.bf16.msra.mxu0 0
  %616 = vmatprep.mubr.bf16.mxu0 0
  %617 = vmatmul.mubr.bf16.gmra.mrb[0].mxu0 %v507
  %v618 = vpop.f32.mrb[0].mxu0
  %v619 = vadd.f32 %v534, %v618
  %v620 = vpop.f32.mrb[0].mxu0
  %v621 = vpop.f32.mrb[0].mxu0
  %v622 = vadd.f32 %v534, %v621
  %v623 = vpop.f32.mrb[0].mxu0
  %624 = vmatprep.mubr.bf16.mxu0 0
  %625 = vmatmul.mubr.bf16.gmra.mrb[0].mxu0 %v508
  %v626 = vpop.f32.mrb[0].mxu0
  %v627 = vadd.f32 %v534, %v626
  %v628 = vpop.f32.mrb[0].mxu0
  %v629 = vpop.f32.mrb[0].mxu0
  %v630 = vadd.f32 %v534, %v629
  %v631 = vpop.f32.mrb[0].mxu0
  %632 = vmatprep.mubr.bf16.mxu0 0
  %633 = vmatmul.mubr.bf16.gmra.mrb[0].mxu0 %v509
  %v634 = vpop.f32.mrb[0].mxu0
  %v635 = vadd.f32 %v534, %v634
  %v636 = vpop.f32.mrb[0].mxu0
  %v637 = vpop.f32.mrb[0].mxu0
  %v638 = vadd.f32 %v534, %v637
  %v639 = vpop.f32.mrb[0].mxu0
  %640 = vmatprep.mubr.bf16.mxu0 0
  %641 = vmatmul.mubr.bf16.gmra.mrb[0].mxu0 %v510
  %v642 = vpop.f32.mrb[0].mxu0
  %v643 = vadd.f32 %v534, %v642
  %v644 = vpop.f32.mrb[0].mxu0
  %v645 = vpop.f32.mrb[0].mxu0
  %v646 = vadd.f32 %v534, %v645
  %v647 = vpop.f32.mrb[0].mxu0
  %648 = vdwg.mxu0
  %v649 = vmax.f32 %v619, 0.0
  %v650 = vmax.f32 %v622, 0.0
  %v651 = vmax.f32 %v627, 0.0
  %v652 = vmax.f32 %v630, 0.0
  %v653 = vmax.f32 %v635, 0.0
  %v654 = vmax.f32 %v638, 0.0
  %v655 = vmax.f32 %v643, 0.0
  %v656 = vmax.f32 %v646, 0.0
  %v657 = vpack.c.bf16 %v650, %v649
  %v658 = vpack.c.bf16 %v652, %v651
  %v659 = vpack.c.bf16 %v654, %v653
  %v660 = vpack.c.bf16 %v656, %v655
  %s661 = scalar_lea.vmem %s5, 128
  %v662 = vld [vmem:[%s661] sm:$0xf]
  %v663 = vld [vmem:[%s661 + $0x4] sm:$0xf]
  %v664 = vld [vmem:[%s661 + $0x8] sm:$0xf]
  %v665 = vld [vmem:[%s661 + $0xc] sm:$0xf]
  %v666 = vld [vmem:[%s661 + $0x10] sm:$0xf]
  %v667 = vld [vmem:[%s661 + $0x14] sm:$0xf]
  %v668 = vld [vmem:[%s661 + $0x18] sm:$0xf]
  %v669 = vld [vmem:[%s661 + $0x1c] sm:$0xf]
  %v670 = vld [vmem:[%s661 + $0x20] sm:$0xf]
  %v671 = vld [vmem:[%s661 + $0x24] sm:$0xf]
  %v672 = vld [vmem:[%s661 + $0x28] sm:$0xf]
  %v673 = vld [vmem:[%s661 + $0x2c] sm:$0xf]
  %v674 = vld [vmem:[%s661 + $0x30] sm:$0xf]
  %v675 = vld [vmem:[%s661 + $0x34] sm:$0xf]
  %v676 = vld [vmem:[%s661 + $0x38] sm:$0xf]
  %v677 = vld [vmem:[%s661 + $0x3c] sm:$0xf]
  %s678 = scalar_lea.vmem %s6, 2
  %v679 = vld [vmem:[%s678] sm:$0x1]
  %v681 = vlaneseq
  %v682 = vshrl.u32 %v681, 7
  %v683 = vsub.s32 0, %v682
  %v684 = vrot.slane %v679, %v683
  %v702 = vunpack.c.l.b16 %v662
  %v703 = vunpack.c.l.b16 %v663
  %v704 = vunpack.c.l.b16 %v664
  %v705 = vunpack.c.l.b16 %v665
  %v706 = vunpack.c.l.b16 %v666
  %v707 = vunpack.c.l.b16 %v667
  %v708 = vunpack.c.l.b16 %v668
  %v709 = vunpack.c.l.b16 %v669
  %v710 = vunpack.c.l.b16 %v670
  %v711 = vunpack.c.l.b16 %v671
  %v712 = vunpack.c.l.b16 %v672
  %v713 = vunpack.c.l.b16 %v673
  %v714 = vunpack.c.l.b16 %v674
  %v715 = vunpack.c.l.b16 %v675
  %v716 = vunpack.c.l.b16 %v676
  %v717 = vunpack.c.l.b16 %v677
  %v718 = vpack.c.b16 %v703, %v702
  %v719 = vpack.c.b16 %v705, %v704
  %v720 = vpack.c.b16 %v707, %v706
  %v721 = vpack.c.b16 %v709, %v708
  %v722 = vpack.c.b16 %v711, %v710
  %v723 = vpack.c.b16 %v713, %v712
  %v724 = vpack.c.b16 %v715, %v714
  %v725 = vpack.c.b16 %v717, %v716
  %734 = vmatprep.subr.bf16.mxu0 0
  %735 = vmatpush1.bf16.msra.mxu0 %v718
  %736 = vmatprep.subr.bf16.mxu0 0
  %737 = vmatpush1.bf16.msra.mxu0 %v719
  %738 = vmatprep.subr.bf16.mxu0 0
  %739 = vmatpush1.bf16.msra.mxu0 %v720
  %740 = vmatprep.subr.bf16.mxu0 0
  %741 = vmatpush1.bf16.msra.mxu0 %v721
  %742 = vmatprep.subr.bf16.mxu0 0
  %743 = vmatpush1.bf16.msra.mxu0 %v722
  %744 = vmatprep.subr.bf16.mxu0 0
  %745 = vmatpush1.bf16.msra.mxu0 %v723
  %746 = vmatprep.subr.bf16.mxu0 0
  %747 = vmatpush1.bf16.msra.mxu0 %v724
  %748 = vmatprep.subr.bf16.mxu0 0
  %749 = vmatpush1.bf16.msra.mxu0 %v725
  %750 = vmatprep.subr.bf16.mxu0 0
  %751 = vmatpush1.bf16.msra.mxu0 0
  %752 = vmatprep.subr.bf16.mxu0 0
  %753 = vmatpush1.bf16.msra.mxu0 0
  %754 = vmatprep.subr.bf16.mxu0 0
  %755 = vmatpush1.bf16.msra.mxu0 0
  %756 = vmatprep.subr.bf16.mxu0 0
  %757 = vmatpush1.bf16.msra.mxu0 0
  %758 = vmatprep.subr.bf16.mxu0 0
  %759 = vmatpush1.bf16.msra.mxu0 0
  %760 = vmatprep.subr.bf16.mxu0 0
  %761 = vmatpush1.bf16.msra.mxu0 0
  %762 = vmatprep.subr.bf16.mxu0 0
  %763 = vmatpush1.bf16.msra.mxu0 0
  %764 = vmatprep.subr.bf16.mxu0 0
  %765 = vmatpush1.bf16.msra.mxu0 0
  %766 = vmatprep.mubr.bf16.mxu0 0
  %767 = vmatmul.mubr.bf16.gmra.mrb[0].mxu0 %v657
  %v768 = vpop.f32.mrb[0].mxu0
  %v769 = vadd.f32 %v684, %v768
  %v770 = vpop.f32.mrb[0].mxu0
  %v771 = vpop.f32.mrb[0].mxu0
  %v772 = vadd.f32 %v684, %v771
  %v773 = vpop.f32.mrb[0].mxu0
  %774 = vmatprep.mubr.bf16.mxu0 0
  %775 = vmatmul.mubr.bf16.gmra.mrb[0].mxu0 %v658
  %v776 = vpop.f32.mrb[0].mxu0
  %v777 = vadd.f32 %v684, %v776
  %v778 = vpop.f32.mrb[0].mxu0
  %v779 = vpop.f32.mrb[0].mxu0
  %v780 = vadd.f32 %v684, %v779
  %v781 = vpop.f32.mrb[0].mxu0
  %782 = vmatprep.mubr.bf16.mxu0 0
  %783 = vmatmul.mubr.bf16.gmra.mrb[0].mxu0 %v659
  %v784 = vpop.f32.mrb[0].mxu0
  %v785 = vadd.f32 %v684, %v784
  %v786 = vpop.f32.mrb[0].mxu0
  %v787 = vpop.f32.mrb[0].mxu0
  %v788 = vadd.f32 %v684, %v787
  %v789 = vpop.f32.mrb[0].mxu0
  %790 = vmatprep.mubr.bf16.mxu0 0
  %791 = vmatmul.mubr.bf16.gmra.mrb[0].mxu0 %v660
  %v792 = vpop.f32.mrb[0].mxu0
  %v793 = vadd.f32 %v684, %v792
  %v794 = vpop.f32.mrb[0].mxu0
  %v795 = vpop.f32.mrb[0].mxu0
  %v796 = vadd.f32 %v684, %v795
  %v797 = vpop.f32.mrb[0].mxu0
  %798 = vdwg.mxu0
  %v799 = vmax.f32 %v769, 0.0
  %v800 = vmax.f32 %v772, 0.0
  %v801 = vmax.f32 %v777, 0.0
  %v802 = vmax.f32 %v780, 0.0
  %v803 = vmax.f32 %v785, 0.0
  %v804 = vmax.f32 %v788, 0.0
  %v805 = vmax.f32 %v793, 0.0
  %v806 = vmax.f32 %v796, 0.0
  %v807 = vpack.c.bf16 %v800, %v799
  %v808 = vpack.c.bf16 %v802, %v801
  %v809 = vpack.c.bf16 %v804, %v803
  %v810 = vpack.c.bf16 %v806, %v805
  %s811 = scalar_lea.vmem %s5, 192
  %v812 = vld [vmem:[%s811] sm:$0xf]
  %v813 = vld [vmem:[%s811 + $0x4] sm:$0xf]
  %v814 = vld [vmem:[%s811 + $0x8] sm:$0xf]
  %v815 = vld [vmem:[%s811 + $0xc] sm:$0xf]
  %v816 = vld [vmem:[%s811 + $0x10] sm:$0xf]
  %v817 = vld [vmem:[%s811 + $0x14] sm:$0xf]
  %v818 = vld [vmem:[%s811 + $0x18] sm:$0xf]
  %v819 = vld [vmem:[%s811 + $0x1c] sm:$0xf]
  %v820 = vld [vmem:[%s811 + $0x20] sm:$0xf]
  %v821 = vld [vmem:[%s811 + $0x24] sm:$0xf]
  %v822 = vld [vmem:[%s811 + $0x28] sm:$0xf]
  %v823 = vld [vmem:[%s811 + $0x2c] sm:$0xf]
  %v824 = vld [vmem:[%s811 + $0x30] sm:$0xf]
  %v825 = vld [vmem:[%s811 + $0x34] sm:$0xf]
  %v826 = vld [vmem:[%s811 + $0x38] sm:$0xf]
  %v827 = vld [vmem:[%s811 + $0x3c] sm:$0xf]
  %s828 = scalar_lea.vmem %s6, 3
  %v829 = vld [vmem:[%s828] sm:$0x1]
  %v831 = vlaneseq
  %v832 = vshrl.u32 %v831, 7
  %v833 = vsub.s32 0, %v832
  %v834 = vrot.slane %v829, %v833
  %v852 = vunpack.c.l.b16 %v812
  %v853 = vunpack.c.l.b16 %v813
  %v854 = vunpack.c.l.b16 %v814
  %v855 = vunpack.c.l.b16 %v815
  %v856 = vunpack.c.l.b16 %v816
  %v857 = vunpack.c.l.b16 %v817
  %v858 = vunpack.c.l.b16 %v818
  %v859 = vunpack.c.l.b16 %v819
  %v860 = vunpack.c.l.b16 %v820
  %v861 = vunpack.c.l.b16 %v821
  %v862 = vunpack.c.l.b16 %v822
  %v863 = vunpack.c.l.b16 %v823
  %v864 = vunpack.c.l.b16 %v824
  %v865 = vunpack.c.l.b16 %v825
  %v866 = vunpack.c.l.b16 %v826
  %v867 = vunpack.c.l.b16 %v827
  %v868 = vpack.c.b16 %v853, %v852
  %v869 = vpack.c.b16 %v855, %v854
  %v870 = vpack.c.b16 %v857, %v856
  %v871 = vpack.c.b16 %v859, %v858
  %v872 = vpack.c.b16 %v861, %v860
  %v873 = vpack.c.b16 %v863, %v862
  %v874 = vpack.c.b16 %v865, %v864
  %v875 = vpack.c.b16 %v867, %v866
  %884 = vmatprep.subr.bf16.mxu0 0
  %885 = vmatpush1.bf16.msra.mxu0 %v868
  %886 = vmatprep.subr.bf16.mxu0 0
  %887 = vmatpush1.bf16.msra.mxu0 %v869
  %888 = vmatprep.subr.bf16.mxu0 0
  %889 = vmatpush1.bf16.msra.mxu0 %v870
  %890 = vmatprep.subr.bf16.mxu0 0
  %891 = vmatpush1.bf16.msra.mxu0 %v871
  %892 = vmatprep.subr.bf16.mxu0 0
  %893 = vmatpush1.bf16.msra.mxu0 %v872
  %894 = vmatprep.subr.bf16.mxu0 0
  %895 = vmatpush1.bf16.msra.mxu0 %v873
  %896 = vmatprep.subr.bf16.mxu0 0
  %897 = vmatpush1.bf16.msra.mxu0 %v874
  %898 = vmatprep.subr.bf16.mxu0 0
  %899 = vmatpush1.bf16.msra.mxu0 %v875
  %900 = vmatprep.subr.bf16.mxu0 0
  %901 = vmatpush1.bf16.msra.mxu0 0
  %902 = vmatprep.subr.bf16.mxu0 0
  %903 = vmatpush1.bf16.msra.mxu0 0
  %904 = vmatprep.subr.bf16.mxu0 0
  %905 = vmatpush1.bf16.msra.mxu0 0
  %906 = vmatprep.subr.bf16.mxu0 0
  %907 = vmatpush1.bf16.msra.mxu0 0
  %908 = vmatprep.subr.bf16.mxu0 0
  %909 = vmatpush1.bf16.msra.mxu0 0
  %910 = vmatprep.subr.bf16.mxu0 0
  %911 = vmatpush1.bf16.msra.mxu0 0
  %912 = vmatprep.subr.bf16.mxu0 0
  %913 = vmatpush1.bf16.msra.mxu0 0
  %914 = vmatprep.subr.bf16.mxu0 0
  %915 = vmatpush1.bf16.msra.mxu0 0
  %916 = vmatprep.mubr.bf16.mxu0 0
  %917 = vmatmul.mubr.bf16.gmra.mrb[0].mxu0 %v807
  %v918 = vpop.f32.mrb[0].mxu0
  %v919 = vadd.f32 %v834, %v918
  %v920 = vpop.f32.mrb[0].mxu0
  %v921 = vpop.f32.mrb[0].mxu0
  %v922 = vadd.f32 %v834, %v921
  %v923 = vpop.f32.mrb[0].mxu0
  %924 = vmatprep.mubr.bf16.mxu0 0
  %925 = vmatmul.mubr.bf16.gmra.mrb[0].mxu0 %v808
  %v926 = vpop.f32.mrb[0].mxu0
  %v927 = vadd.f32 %v834, %v926
  %v928 = vpop.f32.mrb[0].mxu0
  %v929 = vpop.f32.mrb[0].mxu0
  %v930 = vadd.f32 %v834, %v929
  %v931 = vpop.f32.mrb[0].mxu0
  %932 = vmatprep.mubr.bf16.mxu0 0
  %933 = vmatmul.mubr.bf16.gmra.mrb[0].mxu0 %v809
  %v934 = vpop.f32.mrb[0].mxu0
  %v935 = vadd.f32 %v834, %v934
  %v936 = vpop.f32.mrb[0].mxu0
  %v937 = vpop.f32.mrb[0].mxu0
  %v938 = vadd.f32 %v834, %v937
  %v939 = vpop.f32.mrb[0].mxu0
  %940 = vmatprep.mubr.bf16.mxu0 0
  %941 = vmatmul.mubr.bf16.gmra.mrb[0].mxu0 %v810
  %v942 = vpop.f32.mrb[0].mxu0
  %v943 = vadd.f32 %v834, %v942
  %v944 = vpop.f32.mrb[0].mxu0
  %v945 = vpop.f32.mrb[0].mxu0
  %v946 = vadd.f32 %v834, %v945
  %v947 = vpop.f32.mrb[0].mxu0
  %948 = vdwg.mxu0
  %v949 = vmax.f32 %v919, 0.0
  %v950 = vmax.f32 %v922, 0.0
  %v951 = vmax.f32 %v927, 0.0
  %v952 = vmax.f32 %v930, 0.0
  %v953 = vmax.f32 %v935, 0.0
  %v954 = vmax.f32 %v938, 0.0
  %v955 = vmax.f32 %v943, 0.0
  %v956 = vmax.f32 %v946, 0.0
  %v957 = vpack.c.bf16 %v950, %v949
  %v958 = vpack.c.bf16 %v952, %v951
  %v959 = vpack.c.bf16 %v954, %v953
  %v960 = vpack.c.bf16 %v956, %v955
  %s961 = scalar_lea.vmem %s5, 256
  %v962 = vld [vmem:[%s961] sm:$0xf]
  %v963 = vld [vmem:[%s961 + $0x4] sm:$0xf]
  %v964 = vld [vmem:[%s961 + $0x8] sm:$0xf]
  %v965 = vld [vmem:[%s961 + $0xc] sm:$0xf]
  %v966 = vld [vmem:[%s961 + $0x10] sm:$0xf]
  %v967 = vld [vmem:[%s961 + $0x14] sm:$0xf]
  %v968 = vld [vmem:[%s961 + $0x18] sm:$0xf]
  %v969 = vld [vmem:[%s961 + $0x1c] sm:$0xf]
  %v970 = vld [vmem:[%s961 + $0x20] sm:$0xf]
  %v971 = vld [vmem:[%s961 + $0x24] sm:$0xf]
  %v972 = vld [vmem:[%s961 + $0x28] sm:$0xf]
  %v973 = vld [vmem:[%s961 + $0x2c] sm:$0xf]
  %v974 = vld [vmem:[%s961 + $0x30] sm:$0xf]
  %v975 = vld [vmem:[%s961 + $0x34] sm:$0xf]
  %v976 = vld [vmem:[%s961 + $0x38] sm:$0xf]
  %v977 = vld [vmem:[%s961 + $0x3c] sm:$0xf]
  %s978 = scalar_lea.vmem %s6, 4
  %v979 = vld [vmem:[%s978] sm:$0x1]
  %v981 = vlaneseq
  %v982 = vshrl.u32 %v981, 7
  %v983 = vsub.s32 0, %v982
  %v984 = vrot.slane %v979, %v983
  %v1002 = vunpack.c.l.b16 %v962
  %v1003 = vunpack.c.l.b16 %v963
  %v1004 = vunpack.c.l.b16 %v964
  %v1005 = vunpack.c.l.b16 %v965
  %v1006 = vunpack.c.l.b16 %v966
  %v1007 = vunpack.c.l.b16 %v967
  %v1008 = vunpack.c.l.b16 %v968
  %v1009 = vunpack.c.l.b16 %v969
  %v1010 = vunpack.c.l.b16 %v970
  %v1011 = vunpack.c.l.b16 %v971
  %v1012 = vunpack.c.l.b16 %v972
  %v1013 = vunpack.c.l.b16 %v973
  %v1014 = vunpack.c.l.b16 %v974
  %v1015 = vunpack.c.l.b16 %v975
  %v1016 = vunpack.c.l.b16 %v976
  %v1017 = vunpack.c.l.b16 %v977
  %v1018 = vpack.c.b16 %v1003, %v1002
  %v1019 = vpack.c.b16 %v1005, %v1004
  %v1020 = vpack.c.b16 %v1007, %v1006
  %v1021 = vpack.c.b16 %v1009, %v1008
  %v1022 = vpack.c.b16 %v1011, %v1010
  %v1023 = vpack.c.b16 %v1013, %v1012
  %v1024 = vpack.c.b16 %v1015, %v1014
  %v1025 = vpack.c.b16 %v1017, %v1016
  %1034 = vmatprep.subr.bf16.mxu0 0
  %1035 = vmatpush1.bf16.msra.mxu0 %v1018
  %1036 = vmatprep.subr.bf16.mxu0 0
  %1037 = vmatpush1.bf16.msra.mxu0 %v1019
  %1038 = vmatprep.subr.bf16.mxu0 0
  %1039 = vmatpush1.bf16.msra.mxu0 %v1020
  %1040 = vmatprep.subr.bf16.mxu0 0
  %1041 = vmatpush1.bf16.msra.mxu0 %v1021
  %1042 = vmatprep.subr.bf16.mxu0 0
  %1043 = vmatpush1.bf16.msra.mxu0 %v1022
  %1044 = vmatprep.subr.bf16.mxu0 0
  %1045 = vmatpush1.bf16.msra.mxu0 %v1023
  %1046 = vmatprep.subr.bf16.mxu0 0
  %1047 = vmatpush1.bf16.msra.mxu0 %v1024
  %1048 = vmatprep.subr.bf16.mxu0 0
  %1049 = vmatpush1.bf16.msra.mxu0 %v1025
  %1050 = vmatprep.subr.bf16.mxu0 0
  %1051 = vmatpush1.bf16.msra.mxu0 0
  %1052 = vmatprep.subr.bf16.mxu0 0
  %1053 = vmatpush1.bf16.msra.mxu0 0
  %1054 = vmatprep.subr.bf16.mxu0 0
  %1055 = vmatpush1.bf16.msra.mxu0 0
  %1056 = vmatprep.subr.bf16.mxu0 0
  %1057 = vmatpush1.bf16.msra.mxu0 0
  %1058 = vmatprep.subr.bf16.mxu0 0
  %1059 = vmatpush1.bf16.msra.mxu0 0
  %1060 = vmatprep.subr.bf16.mxu0 0
  %1061 = vmatpush1.bf16.msra.mxu0 0
  %1062 = vmatprep.subr.bf16.mxu0 0
  %1063 = vmatpush1.bf16.msra.mxu0 0
  %1064 = vmatprep.subr.bf16.mxu0 0
  %1065 = vmatpush1.bf16.msra.mxu0 0
  %1066 = vmatprep.mubr.bf16.mxu0 0
  %1067 = vmatmul.mubr.bf16.gmra.mrb[0].mxu0 %v957
  %v1068 = vpop.f32.mrb[0].mxu0
  %v1069 = vadd.f32 %v984, %v1068
  %v1070 = vpop.f32.mrb[0].mxu0
  %v1071 = vpop.f32.mrb[0].mxu0
  %v1072 = vadd.f32 %v984, %v1071
  %v1073 = vpop.f32.mrb[0].mxu0
  %1074 = vmatprep.mubr.bf16.mxu0 0
  %1075 = vmatmul.mubr.bf16.gmra.mrb[0].mxu0 %v958
  %v1076 = vpop.f32.mrb[0].mxu0
  %v1077 = vadd.f32 %v984, %v1076
  %v1078 = vpop.f32.mrb[0].mxu0
  %v1079 = vpop.f32.mrb[0].mxu0
  %v1080 = vadd.f32 %v984, %v1079
  %v1081 = vpop.f32.mrb[0].mxu0
  %1082 = vmatprep.mubr.bf16.mxu0 0
  %1083 = vmatmul.mubr.bf16.gmra.mrb[0].mxu0 %v959
  %v1084 = vpop.f32.mrb[0].mxu0
  %v1085 = vadd.f32 %v984, %v1084
  %v1086 = vpop.f32.mrb[0].mxu0
  %v1087 = vpop.f32.mrb[0].mxu0
  %v1088 = vadd.f32 %v984, %v1087
  %v1089 = vpop.f32.mrb[0].mxu0
  %1090 = vmatprep.mubr.bf16.mxu0 0
  %1091 = vmatmul.mubr.bf16.gmra.mrb[0].mxu0 %v960
  %v1092 = vpop.f32.mrb[0].mxu0
  %v1093 = vadd.f32 %v984, %v1092
  %v1094 = vpop.f32.mrb[0].mxu0
  %v1095 = vpop.f32.mrb[0].mxu0
  %v1096 = vadd.f32 %v984, %v1095
  %v1097 = vpop.f32.mrb[0].mxu0
  %1098 = vdwg.mxu0
  %v1099 = vmax.f32 %v1069, 0.0
  %v1100 = vmax.f32 %v1072, 0.0
  %v1101 = vmax.f32 %v1077, 0.0
  %v1102 = vmax.f32 %v1080, 0.0
  %v1103 = vmax.f32 %v1085, 0.0
  %v1104 = vmax.f32 %v1088, 0.0
  %v1105 = vmax.f32 %v1093, 0.0
  %v1106 = vmax.f32 %v1096, 0.0
  %v1107 = vpack.c.bf16 %v1100, %v1099
  %v1108 = vpack.c.bf16 %v1102, %v1101
  %v1109 = vpack.c.bf16 %v1104, %v1103
  %v1110 = vpack.c.bf16 %v1106, %v1105
  %s1111 = scalar_lea.vmem %s5, 320
  %v1112 = vld [vmem:[%s1111] sm:$0xf]
  %v1113 = vld [vmem:[%s1111 + $0x4] sm:$0xf]
  %v1114 = vld [vmem:[%s1111 + $0x8] sm:$0xf]
  %v1115 = vld [vmem:[%s1111 + $0xc] sm:$0xf]
  %v1116 = vld [vmem:[%s1111 + $0x10] sm:$0xf]
  %v1117 = vld [vmem:[%s1111 + $0x14] sm:$0xf]
  %v1118 = vld [vmem:[%s1111 + $0x18] sm:$0xf]
  %v1119 = vld [vmem:[%s1111 + $0x1c] sm:$0xf]
  %v1120 = vld [vmem:[%s1111 + $0x20] sm:$0xf]
  %v1121 = vld [vmem:[%s1111 + $0x24] sm:$0xf]
  %v1122 = vld [vmem:[%s1111 + $0x28] sm:$0xf]
  %v1123 = vld [vmem:[%s1111 + $0x2c] sm:$0xf]
  %v1124 = vld [vmem:[%s1111 + $0x30] sm:$0xf]
  %v1125 = vld [vmem:[%s1111 + $0x34] sm:$0xf]
  %v1126 = vld [vmem:[%s1111 + $0x38] sm:$0xf]
  %v1127 = vld [vmem:[%s1111 + $0x3c] sm:$0xf]
  %s1128 = scalar_lea.vmem %s6, 5
  %v1129 = vld [vmem:[%s1128] sm:$0x1]
  %v1131 = vlaneseq
  %v1132 = vshrl.u32 %v1131, 7
  %v1133 = vsub.s32 0, %v1132
  %v1134 = vrot.slane %v1129, %v1133
  %v1152 = vunpack.c.l.b16 %v1112
  %v1153 = vunpack.c.l.b16 %v1113
  %v1154 = vunpack.c.l.b16 %v1114
  %v1155 = vunpack.c.l.b16 %v1115
  %v1156 = vunpack.c.l.b16 %v1116
  %v1157 = vunpack.c.l.b16 %v1117
  %v1158 = vunpack.c.l.b16 %v1118
  %v1159 = vunpack.c.l.b16 %v1119
  %v1160 = vunpack.c.l.b16 %v1120
  %v1161 = vunpack.c.l.b16 %v1121
  %v1162 = vunpack.c.l.b16 %v1122
  %v1163 = vunpack.c.l.b16 %v1123
  %v1164 = vunpack.c.l.b16 %v1124
  %v1165 = vunpack.c.l.b16 %v1125
  %v1166 = vunpack.c.l.b16 %v1126
  %v1167 = vunpack.c.l.b16 %v1127
  %v1168 = vpack.c.b16 %v1153, %v1152
  %v1169 = vpack.c.b16 %v1155, %v1154
  %v1170 = vpack.c.b16 %v1157, %v1156
  %v1171 = vpack.c.b16 %v1159, %v1158
  %v1172 = vpack.c.b16 %v1161, %v1160
  %v1173 = vpack.c.b16 %v1163, %v1162
  %v1174 = vpack.c.b16 %v1165, %v1164
  %v1175 = vpack.c.b16 %v1167, %v1166
  %1184 = vmatprep.subr.bf16.mxu0 0
  %1185 = vmatpush1.bf16.msra.mxu0 %v1168
  %1186 = vmatprep.subr.bf16.mxu0 0
  %1187 = vmatpush1.bf16.msra.mxu0 %v1169
  %1188 = vmatprep.subr.bf16.mxu0 0
  %1189 = vmatpush1.bf16.msra.mxu0 %v1170
  %1190 = vmatprep.subr.bf16.mxu0 0
  %1191 = vmatpush1.bf16.msra.mxu0 %v1171
  %1192 = vmatprep.subr.bf16.mxu0 0
  %1193 = vmatpush1.bf16.msra.mxu0 %v1172
  %1194 = vmatprep.subr.bf16.mxu0 0
  %1195 = vmatpush1.bf16.msra.mxu0 %v1173
  %1196 = vmatprep.subr.bf16.mxu0 0
  %1197 = vmatpush1.bf16.msra.mxu0 %v1174
  %1198 = vmatprep.subr.bf16.mxu0 0
  %1199 = vmatpush1.bf16.msra.mxu0 %v1175
  %1200 = vmatprep.subr.bf16.mxu0 0
  %1201 = vmatpush1.bf16.msra.mxu0 0
  %1202 = vmatprep.subr.bf16.mxu0 0
  %1203 = vmatpush1.bf16.msra.mxu0 0
  %1204 = vmatprep.subr.bf16.mxu0 0
  %1205 = vmatpush1.bf16.msra.mxu0 0
  %1206 = vmatprep.subr.bf16.mxu0 0
  %1207 = vmatpush1.bf16.msra.mxu0 0
  %1208 = vmatprep.subr.bf16.mxu0 0
  %1209 = vmatpush1.bf16.msra.mxu0 0
  %1210 = vmatprep.subr.bf16.mxu0 0
  %1211 = vmatpush1.bf16.msra.mxu0 0
  %1212 = vmatprep.subr.bf16.mxu0 0
  %1213 = vmatpush1.bf16.msra.mxu0 0
  %1214 = vmatprep.subr.bf16.mxu0 0
  %1215 = vmatpush1.bf16.msra.mxu0 0
  %1216 = vmatprep.mubr.bf16.mxu0 0
  %1217 = vmatmul.mubr.bf16.gmra.mrb[0].mxu0 %v1107
  %v1218 = vpop.f32.mrb[0].mxu0
  %v1219 = vadd.f32 %v1134, %v1218
  %v1220 = vpop.f32.mrb[0].mxu0
  %v1221 = vpop.f32.mrb[0].mxu0
  %v1222 = vadd.f32 %v1134, %v1221
  %v1223 = vpop.f32.mrb[0].mxu0
  %1224 = vmatprep.mubr.bf16.mxu0 0
  %1225 = vmatmul.mubr.bf16.gmra.mrb[0].mxu0 %v1108
  %v1226 = vpop.f32.mrb[0].mxu0
  %v1227 = vadd.f32 %v1134, %v1226
  %v1228 = vpop.f32.mrb[0].mxu0
  %v1229 = vpop.f32.mrb[0].mxu0
  %v1230 = vadd.f32 %v1134, %v1229
  %v1231 = vpop.f32.mrb[0].mxu0
  %1232 = vmatprep.mubr.bf16.mxu0 0
  %1233 = vmatmul.mubr.bf16.gmra.mrb[0].mxu0 %v1109
  %v1234 = vpop.f32.mrb[0].mxu0
  %v1235 = vadd.f32 %v1134, %v1234
  %v1236 = vpop.f32.mrb[0].mxu0
  %v1237 = vpop.f32.mrb[0].mxu0
  %v1238 = vadd.f32 %v1134, %v1237
  %v1239 = vpop.f32.mrb[0].mxu0
  %1240 = vmatprep.mubr.bf16.mxu0 0
  %1241 = vmatmul.mubr.bf16.gmra.mrb[0].mxu0 %v1110
  %v1242 = vpop.f32.mrb[0].mxu0
  %v1243 = vadd.f32 %v1134, %v1242
  %v1244 = vpop.f32.mrb[0].mxu0
  %v1245 = vpop.f32.mrb[0].mxu0
  %v1246 = vadd.f32 %v1134, %v1245
  %v1247 = vpop.f32.mrb[0].mxu0
  %1248 = vdwg.mxu0
  %v1249 = vmax.f32 %v1219, 0.0
  %v1250 = vmax.f32 %v1222, 0.0
  %v1251 = vmax.f32 %v1227, 0.0
  %v1252 = vmax.f32 %v1230, 0.0
  %v1253 = vmax.f32 %v1235, 0.0
  %v1254 = vmax.f32 %v1238, 0.0
  %v1255 = vmax.f32 %v1243, 0.0
  %v1256 = vmax.f32 %v1246, 0.0
  %v1257 = vpack.c.bf16 %v1250, %v1249
  %v1258 = vpack.c.bf16 %v1252, %v1251
  %v1259 = vpack.c.bf16 %v1254, %v1253
  %v1260 = vpack.c.bf16 %v1256, %v1255
  %s1261 = scalar_lea.vmem %s5, 384
  %v1262 = vld [vmem:[%s1261] sm:$0xf]
  %v1263 = vld [vmem:[%s1261 + $0x4] sm:$0xf]
  %v1264 = vld [vmem:[%s1261 + $0x8] sm:$0xf]
  %v1265 = vld [vmem:[%s1261 + $0xc] sm:$0xf]
  %v1266 = vld [vmem:[%s1261 + $0x10] sm:$0xf]
  %v1267 = vld [vmem:[%s1261 + $0x14] sm:$0xf]
  %v1268 = vld [vmem:[%s1261 + $0x18] sm:$0xf]
  %v1269 = vld [vmem:[%s1261 + $0x1c] sm:$0xf]
  %v1270 = vld [vmem:[%s1261 + $0x20] sm:$0xf]
  %v1271 = vld [vmem:[%s1261 + $0x24] sm:$0xf]
  %v1272 = vld [vmem:[%s1261 + $0x28] sm:$0xf]
  %v1273 = vld [vmem:[%s1261 + $0x2c] sm:$0xf]
  %v1274 = vld [vmem:[%s1261 + $0x30] sm:$0xf]
  %v1275 = vld [vmem:[%s1261 + $0x34] sm:$0xf]
  %v1276 = vld [vmem:[%s1261 + $0x38] sm:$0xf]
  %v1277 = vld [vmem:[%s1261 + $0x3c] sm:$0xf]
  %s1278 = scalar_lea.vmem %s6, 6
  %v1279 = vld [vmem:[%s1278] sm:$0x1]
  %v1281 = vlaneseq
  %v1282 = vshrl.u32 %v1281, 7
  %v1283 = vsub.s32 0, %v1282
  %v1284 = vrot.slane %v1279, %v1283
  %v1302 = vunpack.c.l.b16 %v1262
  %v1303 = vunpack.c.l.b16 %v1263
  %v1304 = vunpack.c.l.b16 %v1264
  %v1305 = vunpack.c.l.b16 %v1265
  %v1306 = vunpack.c.l.b16 %v1266
  %v1307 = vunpack.c.l.b16 %v1267
  %v1308 = vunpack.c.l.b16 %v1268
  %v1309 = vunpack.c.l.b16 %v1269
  %v1310 = vunpack.c.l.b16 %v1270
  %v1311 = vunpack.c.l.b16 %v1271
  %v1312 = vunpack.c.l.b16 %v1272
  %v1313 = vunpack.c.l.b16 %v1273
  %v1314 = vunpack.c.l.b16 %v1274
  %v1315 = vunpack.c.l.b16 %v1275
  %v1316 = vunpack.c.l.b16 %v1276
  %v1317 = vunpack.c.l.b16 %v1277
  %v1318 = vpack.c.b16 %v1303, %v1302
  %v1319 = vpack.c.b16 %v1305, %v1304
  %v1320 = vpack.c.b16 %v1307, %v1306
  %v1321 = vpack.c.b16 %v1309, %v1308
  %v1322 = vpack.c.b16 %v1311, %v1310
  %v1323 = vpack.c.b16 %v1313, %v1312
  %v1324 = vpack.c.b16 %v1315, %v1314
  %v1325 = vpack.c.b16 %v1317, %v1316
  %1334 = vmatprep.subr.bf16.mxu0 0
  %1335 = vmatpush1.bf16.msra.mxu0 %v1318
  %1336 = vmatprep.subr.bf16.mxu0 0
  %1337 = vmatpush1.bf16.msra.mxu0 %v1319
  %1338 = vmatprep.subr.bf16.mxu0 0
  %1339 = vmatpush1.bf16.msra.mxu0 %v1320
  %1340 = vmatprep.subr.bf16.mxu0 0
  %1341 = vmatpush1.bf16.msra.mxu0 %v1321
  %1342 = vmatprep.subr.bf16.mxu0 0
  %1343 = vmatpush1.bf16.msra.mxu0 %v1322
  %1344 = vmatprep.subr.bf16.mxu0 0
  %1345 = vmatpush1.bf16.msra.mxu0 %v1323
  %1346 = vmatprep.subr.bf16.mxu0 0
  %1347 = vmatpush1.bf16.msra.mxu0 %v1324
  %1348 = vmatprep.subr.bf16.mxu0 0
  %1349 = vmatpush1.bf16.msra.mxu0 %v1325
  %1350 = vmatprep.subr.bf16.mxu0 0
  %1351 = vmatpush1.bf16.msra.mxu0 0
  %1352 = vmatprep.subr.bf16.mxu0 0
  %1353 = vmatpush1.bf16.msra.mxu0 0
  %1354 = vmatprep.subr.bf16.mxu0 0
  %1355 = vmatpush1.bf16.msra.mxu0 0
  %1356 = vmatprep.subr.bf16.mxu0 0
  %1357 = vmatpush1.bf16.msra.mxu0 0
  %1358 = vmatprep.subr.bf16.mxu0 0
  %1359 = vmatpush1.bf16.msra.mxu0 0
  %1360 = vmatprep.subr.bf16.mxu0 0
  %1361 = vmatpush1.bf16.msra.mxu0 0
  %1362 = vmatprep.subr.bf16.mxu0 0
  %1363 = vmatpush1.bf16.msra.mxu0 0
  %1364 = vmatprep.subr.bf16.mxu0 0
  %1365 = vmatpush1.bf16.msra.mxu0 0
  %1366 = vmatprep.mubr.bf16.mxu0 0
  %1367 = vmatmul.mubr.bf16.gmra.mrb[0].mxu0 %v1257
  %v1368 = vpop.f32.mrb[0].mxu0
  %v1369 = vadd.f32 %v1284, %v1368
  %v1370 = vpop.f32.mrb[0].mxu0
  %v1371 = vpop.f32.mrb[0].mxu0
  %v1372 = vadd.f32 %v1284, %v1371
  %v1373 = vpop.f32.mrb[0].mxu0
  %1374 = vmatprep.mubr.bf16.mxu0 0
  %1375 = vmatmul.mubr.bf16.gmra.mrb[0].mxu0 %v1258
  %v1376 = vpop.f32.mrb[0].mxu0
  %v1377 = vadd.f32 %v1284, %v1376
  %v1378 = vpop.f32.mrb[0].mxu0
  %v1379 = vpop.f32.mrb[0].mxu0
  %v1380 = vadd.f32 %v1284, %v1379
  %v1381 = vpop.f32.mrb[0].mxu0
  %1382 = vmatprep.mubr.bf16.mxu0 0
  %1383 = vmatmul.mubr.bf16.gmra.mrb[0].mxu0 %v1259
  %v1384 = vpop.f32.mrb[0].mxu0
  %v1385 = vadd.f32 %v1284, %v1384
  %v1386 = vpop.f32.mrb[0].mxu0
  %v1387 = vpop.f32.mrb[0].mxu0
  %v1388 = vadd.f32 %v1284, %v1387
  %v1389 = vpop.f32.mrb[0].mxu0
  %1390 = vmatprep.mubr.bf16.mxu0 0
  %1391 = vmatmul.mubr.bf16.gmra.mrb[0].mxu0 %v1260
  %v1392 = vpop.f32.mrb[0].mxu0
  %v1393 = vadd.f32 %v1284, %v1392
  %v1394 = vpop.f32.mrb[0].mxu0
  %v1395 = vpop.f32.mrb[0].mxu0
  %v1396 = vadd.f32 %v1284, %v1395
  %v1397 = vpop.f32.mrb[0].mxu0
  %1398 = vdwg.mxu0
  %v1399 = vmax.f32 %v1369, 0.0
  %v1400 = vmax.f32 %v1372, 0.0
  %v1401 = vmax.f32 %v1377, 0.0
  %v1402 = vmax.f32 %v1380, 0.0
  %v1403 = vmax.f32 %v1385, 0.0
  %v1404 = vmax.f32 %v1388, 0.0
  %v1405 = vmax.f32 %v1393, 0.0
  %v1406 = vmax.f32 %v1396, 0.0
  %v1407 = vpack.c.bf16 %v1400, %v1399
  %v1408 = vpack.c.bf16 %v1402, %v1401
  %v1409 = vpack.c.bf16 %v1404, %v1403
  %v1410 = vpack.c.bf16 %v1406, %v1405
  %s1411 = scalar_lea.vmem %s5, 448
  %v1412 = vld [vmem:[%s1411] sm:$0xf]
  %v1413 = vld [vmem:[%s1411 + $0x4] sm:$0xf]
  %v1414 = vld [vmem:[%s1411 + $0x8] sm:$0xf]
  %v1415 = vld [vmem:[%s1411 + $0xc] sm:$0xf]
  %v1416 = vld [vmem:[%s1411 + $0x10] sm:$0xf]
  %v1417 = vld [vmem:[%s1411 + $0x14] sm:$0xf]
  %v1418 = vld [vmem:[%s1411 + $0x18] sm:$0xf]
  %v1419 = vld [vmem:[%s1411 + $0x1c] sm:$0xf]
  %v1420 = vld [vmem:[%s1411 + $0x20] sm:$0xf]
  %v1421 = vld [vmem:[%s1411 + $0x24] sm:$0xf]
  %v1422 = vld [vmem:[%s1411 + $0x28] sm:$0xf]
  %v1423 = vld [vmem:[%s1411 + $0x2c] sm:$0xf]
  %v1424 = vld [vmem:[%s1411 + $0x30] sm:$0xf]
  %v1425 = vld [vmem:[%s1411 + $0x34] sm:$0xf]
  %v1426 = vld [vmem:[%s1411 + $0x38] sm:$0xf]
  %v1427 = vld [vmem:[%s1411 + $0x3c] sm:$0xf]
  %s1428 = scalar_lea.vmem %s6, 7
  %v1429 = vld [vmem:[%s1428] sm:$0x1]
  %v1431 = vlaneseq
  %v1432 = vshrl.u32 %v1431, 7
  %v1433 = vsub.s32 0, %v1432
  %v1434 = vrot.slane %v1429, %v1433
  %v1452 = vunpack.c.l.b16 %v1412
  %v1453 = vunpack.c.l.b16 %v1413
  %v1454 = vunpack.c.l.b16 %v1414
  %v1455 = vunpack.c.l.b16 %v1415
  %v1456 = vunpack.c.l.b16 %v1416
  %v1457 = vunpack.c.l.b16 %v1417
  %v1458 = vunpack.c.l.b16 %v1418
  %v1459 = vunpack.c.l.b16 %v1419
  %v1460 = vunpack.c.l.b16 %v1420
  %v1461 = vunpack.c.l.b16 %v1421
  %v1462 = vunpack.c.l.b16 %v1422
  %v1463 = vunpack.c.l.b16 %v1423
  %v1464 = vunpack.c.l.b16 %v1424
  %v1465 = vunpack.c.l.b16 %v1425
  %v1466 = vunpack.c.l.b16 %v1426
  %v1467 = vunpack.c.l.b16 %v1427
  %v1468 = vpack.c.b16 %v1453, %v1452
  %v1469 = vpack.c.b16 %v1455, %v1454
  %v1470 = vpack.c.b16 %v1457, %v1456
  %v1471 = vpack.c.b16 %v1459, %v1458
  %v1472 = vpack.c.b16 %v1461, %v1460
  %v1473 = vpack.c.b16 %v1463, %v1462
  %v1474 = vpack.c.b16 %v1465, %v1464
  %v1475 = vpack.c.b16 %v1467, %v1466
  %1484 = vmatprep.subr.bf16.mxu0 0
  %1485 = vmatpush1.bf16.msra.mxu0 %v1468
  %1486 = vmatprep.subr.bf16.mxu0 0
  %1487 = vmatpush1.bf16.msra.mxu0 %v1469
  %1488 = vmatprep.subr.bf16.mxu0 0
  %1489 = vmatpush1.bf16.msra.mxu0 %v1470
  %1490 = vmatprep.subr.bf16.mxu0 0
  %1491 = vmatpush1.bf16.msra.mxu0 %v1471
  %1492 = vmatprep.subr.bf16.mxu0 0
  %1493 = vmatpush1.bf16.msra.mxu0 %v1472
  %1494 = vmatprep.subr.bf16.mxu0 0
  %1495 = vmatpush1.bf16.msra.mxu0 %v1473
  %1496 = vmatprep.subr.bf16.mxu0 0
  %1497 = vmatpush1.bf16.msra.mxu0 %v1474
  %1498 = vmatprep.subr.bf16.mxu0 0
  %1499 = vmatpush1.bf16.msra.mxu0 %v1475
  %1500 = vmatprep.subr.bf16.mxu0 0
  %1501 = vmatpush1.bf16.msra.mxu0 0
  %1502 = vmatprep.subr.bf16.mxu0 0
  %1503 = vmatpush1.bf16.msra.mxu0 0
  %1504 = vmatprep.subr.bf16.mxu0 0
  %1505 = vmatpush1.bf16.msra.mxu0 0
  %1506 = vmatprep.subr.bf16.mxu0 0
  %1507 = vmatpush1.bf16.msra.mxu0 0
  %1508 = vmatprep.subr.bf16.mxu0 0
  %1509 = vmatpush1.bf16.msra.mxu0 0
  %1510 = vmatprep.subr.bf16.mxu0 0
  %1511 = vmatpush1.bf16.msra.mxu0 0
  %1512 = vmatprep.subr.bf16.mxu0 0
  %1513 = vmatpush1.bf16.msra.mxu0 0
  %1514 = vmatprep.subr.bf16.mxu0 0
  %1515 = vmatpush1.bf16.msra.mxu0 0
  %1516 = vmatprep.mubr.bf16.mxu0 0
  %1517 = vmatmul.mubr.bf16.gmra.mrb[0].mxu0 %v1407
  %v1518 = vpop.f32.mrb[0].mxu0
  %v1519 = vadd.f32 %v1434, %v1518
  %v1520 = vpop.f32.mrb[0].mxu0
  %v1521 = vpop.f32.mrb[0].mxu0
  %v1522 = vadd.f32 %v1434, %v1521
  %v1523 = vpop.f32.mrb[0].mxu0
  %1524 = vmatprep.mubr.bf16.mxu0 0
  %1525 = vmatmul.mubr.bf16.gmra.mrb[0].mxu0 %v1408
  %v1526 = vpop.f32.mrb[0].mxu0
  %v1527 = vadd.f32 %v1434, %v1526
  %v1528 = vpop.f32.mrb[0].mxu0
  %v1529 = vpop.f32.mrb[0].mxu0
  %v1530 = vadd.f32 %v1434, %v1529
  %v1531 = vpop.f32.mrb[0].mxu0
  %1532 = vmatprep.mubr.bf16.mxu0 0
  %1533 = vmatmul.mubr.bf16.gmra.mrb[0].mxu0 %v1409
  %v1534 = vpop.f32.mrb[0].mxu0
  %v1535 = vadd.f32 %v1434, %v1534
  %v1536 = vpop.f32.mrb[0].mxu0
  %v1537 = vpop.f32.mrb[0].mxu0
  %v1538 = vadd.f32 %v1434, %v1537
  %v1539 = vpop.f32.mrb[0].mxu0
  %1540 = vmatprep.mubr.bf16.mxu0 0
  %1541 = vmatmul.mubr.bf16.gmra.mrb[0].mxu0 %v1410
  %v1542 = vpop.f32.mrb[0].mxu0
  %v1543 = vadd.f32 %v1434, %v1542
  %v1544 = vpop.f32.mrb[0].mxu0
  %v1545 = vpop.f32.mrb[0].mxu0
  %v1546 = vadd.f32 %v1434, %v1545
  %v1547 = vpop.f32.mrb[0].mxu0
  %1548 = vdwg.mxu0
  %v1549 = vmax.f32 %v1519, 0.0
  %v1550 = vmax.f32 %v1522, 0.0
  %v1551 = vmax.f32 %v1527, 0.0
  %v1552 = vmax.f32 %v1530, 0.0
  %v1553 = vmax.f32 %v1535, 0.0
  %v1554 = vmax.f32 %v1538, 0.0
  %v1555 = vmax.f32 %v1543, 0.0
  %v1556 = vmax.f32 %v1546, 0.0
  %v1557 = vpack.c.bf16 %v1550, %v1549
  %v1558 = vpack.c.bf16 %v1552, %v1551
  %v1559 = vpack.c.bf16 %v1554, %v1553
  %v1560 = vpack.c.bf16 %v1556, %v1555
  %s1561 = scalar_lea.vmem %s5, 512
  %v1562 = vld [vmem:[%s1561] sm:$0xf]
  %v1563 = vld [vmem:[%s1561 + $0x4] sm:$0xf]
  %v1564 = vld [vmem:[%s1561 + $0x8] sm:$0xf]
  %v1565 = vld [vmem:[%s1561 + $0xc] sm:$0xf]
  %v1566 = vld [vmem:[%s1561 + $0x10] sm:$0xf]
  %v1567 = vld [vmem:[%s1561 + $0x14] sm:$0xf]
  %v1568 = vld [vmem:[%s1561 + $0x18] sm:$0xf]
  %v1569 = vld [vmem:[%s1561 + $0x1c] sm:$0xf]
  %v1570 = vld [vmem:[%s1561 + $0x20] sm:$0xf]
  %v1571 = vld [vmem:[%s1561 + $0x24] sm:$0xf]
  %v1572 = vld [vmem:[%s1561 + $0x28] sm:$0xf]
  %v1573 = vld [vmem:[%s1561 + $0x2c] sm:$0xf]
  %v1574 = vld [vmem:[%s1561 + $0x30] sm:$0xf]
  %v1575 = vld [vmem:[%s1561 + $0x34] sm:$0xf]
  %v1576 = vld [vmem:[%s1561 + $0x38] sm:$0xf]
  %v1577 = vld [vmem:[%s1561 + $0x3c] sm:$0xf]
  %s1578 = scalar_lea.vmem %s6, 8
  %v1579 = vld [vmem:[%s1578] sm:$0x1]
  %v1581 = vlaneseq
  %v1582 = vshrl.u32 %v1581, 7
  %v1583 = vsub.s32 0, %v1582
  %v1584 = vrot.slane %v1579, %v1583
  %v1602 = vunpack.c.l.b16 %v1562
  %v1603 = vunpack.c.l.b16 %v1563
  %v1604 = vunpack.c.l.b16 %v1564
  %v1605 = vunpack.c.l.b16 %v1565
  %v1606 = vunpack.c.l.b16 %v1566
  %v1607 = vunpack.c.l.b16 %v1567
  %v1608 = vunpack.c.l.b16 %v1568
  %v1609 = vunpack.c.l.b16 %v1569
  %v1610 = vunpack.c.l.b16 %v1570
  %v1611 = vunpack.c.l.b16 %v1571
  %v1612 = vunpack.c.l.b16 %v1572
  %v1613 = vunpack.c.l.b16 %v1573
  %v1614 = vunpack.c.l.b16 %v1574
  %v1615 = vunpack.c.l.b16 %v1575
  %v1616 = vunpack.c.l.b16 %v1576
  %v1617 = vunpack.c.l.b16 %v1577
  %v1618 = vpack.c.b16 %v1603, %v1602
  %v1619 = vpack.c.b16 %v1605, %v1604
  %v1620 = vpack.c.b16 %v1607, %v1606
  %v1621 = vpack.c.b16 %v1609, %v1608
  %v1622 = vpack.c.b16 %v1611, %v1610
  %v1623 = vpack.c.b16 %v1613, %v1612
  %v1624 = vpack.c.b16 %v1615, %v1614
  %v1625 = vpack.c.b16 %v1617, %v1616
  %1634 = vmatprep.subr.bf16.mxu0 0
  %1635 = vmatpush1.bf16.msra.mxu0 %v1618
  %1636 = vmatprep.subr.bf16.mxu0 0
  %1637 = vmatpush1.bf16.msra.mxu0 %v1619
  %1638 = vmatprep.subr.bf16.mxu0 0
  %1639 = vmatpush1.bf16.msra.mxu0 %v1620
  %1640 = vmatprep.subr.bf16.mxu0 0
  %1641 = vmatpush1.bf16.msra.mxu0 %v1621
  %1642 = vmatprep.subr.bf16.mxu0 0
  %1643 = vmatpush1.bf16.msra.mxu0 %v1622
  %1644 = vmatprep.subr.bf16.mxu0 0
  %1645 = vmatpush1.bf16.msra.mxu0 %v1623
  %1646 = vmatprep.subr.bf16.mxu0 0
  %1647 = vmatpush1.bf16.msra.mxu0 %v1624
  %1648 = vmatprep.subr.bf16.mxu0 0
  %1649 = vmatpush1.bf16.msra.mxu0 %v1625
  %1650 = vmatprep.subr.bf16.mxu0 0
  %1651 = vmatpush1.bf16.msra.mxu0 0
  %1652 = vmatprep.subr.bf16.mxu0 0
  %1653 = vmatpush1.bf16.msra.mxu0 0
  %1654 = vmatprep.subr.bf16.mxu0 0
  %1655 = vmatpush1.bf16.msra.mxu0 0
  %1656 = vmatprep.subr.bf16.mxu0 0
  %1657 = vmatpush1.bf16.msra.mxu0 0
  %1658 = vmatprep.subr.bf16.mxu0 0
  %1659 = vmatpush1.bf16.msra.mxu0 0
  %1660 = vmatprep.subr.bf16.mxu0 0
  %1661 = vmatpush1.bf16.msra.mxu0 0
  %1662 = vmatprep.subr.bf16.mxu0 0
  %1663 = vmatpush1.bf16.msra.mxu0 0
  %1664 = vmatprep.subr.bf16.mxu0 0
  %1665 = vmatpush1.bf16.msra.mxu0 0
  %1666 = vmatprep.mubr.bf16.mxu0 0
  %1667 = vmatmul.mubr.bf16.gmra.mrb[0].mxu0 %v1557
  %v1668 = vpop.f32.mrb[0].mxu0
  %v1669 = vadd.f32 %v1584, %v1668
  %v1670 = vpop.f32.mrb[0].mxu0
  %v1671 = vpop.f32.mrb[0].mxu0
  %v1672 = vadd.f32 %v1584, %v1671
  %v1673 = vpop.f32.mrb[0].mxu0
  %1674 = vmatprep.mubr.bf16.mxu0 0
  %1675 = vmatmul.mubr.bf16.gmra.mrb[0].mxu0 %v1558
  %v1676 = vpop.f32.mrb[0].mxu0
  %v1677 = vadd.f32 %v1584, %v1676
  %v1678 = vpop.f32.mrb[0].mxu0
  %v1679 = vpop.f32.mrb[0].mxu0
  %v1680 = vadd.f32 %v1584, %v1679
  %v1681 = vpop.f32.mrb[0].mxu0
  %1682 = vmatprep.mubr.bf16.mxu0 0
  %1683 = vmatmul.mubr.bf16.gmra.mrb[0].mxu0 %v1559
  %v1684 = vpop.f32.mrb[0].mxu0
  %v1685 = vadd.f32 %v1584, %v1684
  %v1686 = vpop.f32.mrb[0].mxu0
  %v1687 = vpop.f32.mrb[0].mxu0
  %v1688 = vadd.f32 %v1584, %v1687
  %v1689 = vpop.f32.mrb[0].mxu0
  %1690 = vmatprep.mubr.bf16.mxu0 0
  %1691 = vmatmul.mubr.bf16.gmra.mrb[0].mxu0 %v1560
  %v1692 = vpop.f32.mrb[0].mxu0
  %v1693 = vadd.f32 %v1584, %v1692
  %v1694 = vpop.f32.mrb[0].mxu0
  %v1695 = vpop.f32.mrb[0].mxu0
  %v1696 = vadd.f32 %v1584, %v1695
  %v1697 = vpop.f32.mrb[0].mxu0
  %1698 = vdwg.mxu0
  %v1699 = vmax.f32 %v1669, 0.0
  %v1700 = vmax.f32 %v1672, 0.0
  %v1701 = vmax.f32 %v1677, 0.0
  %v1702 = vmax.f32 %v1680, 0.0
  %v1703 = vmax.f32 %v1685, 0.0
  %v1704 = vmax.f32 %v1688, 0.0
  %v1705 = vmax.f32 %v1693, 0.0
  %v1706 = vmax.f32 %v1696, 0.0
  %v1707 = vpack.c.bf16 %v1700, %v1699
  %v1708 = vpack.c.bf16 %v1702, %v1701
  %v1709 = vpack.c.bf16 %v1704, %v1703
  %v1710 = vpack.c.bf16 %v1706, %v1705
  %s1711 = scalar_lea.vmem %s5, 576
  %v1712 = vld [vmem:[%s1711] sm:$0xf]
  %v1713 = vld [vmem:[%s1711 + $0x4] sm:$0xf]
  %v1714 = vld [vmem:[%s1711 + $0x8] sm:$0xf]
  %v1715 = vld [vmem:[%s1711 + $0xc] sm:$0xf]
  %v1716 = vld [vmem:[%s1711 + $0x10] sm:$0xf]
  %v1717 = vld [vmem:[%s1711 + $0x14] sm:$0xf]
  %v1718 = vld [vmem:[%s1711 + $0x18] sm:$0xf]
  %v1719 = vld [vmem:[%s1711 + $0x1c] sm:$0xf]
  %v1720 = vld [vmem:[%s1711 + $0x20] sm:$0xf]
  %v1721 = vld [vmem:[%s1711 + $0x24] sm:$0xf]
  %v1722 = vld [vmem:[%s1711 + $0x28] sm:$0xf]
  %v1723 = vld [vmem:[%s1711 + $0x2c] sm:$0xf]
  %v1724 = vld [vmem:[%s1711 + $0x30] sm:$0xf]
  %v1725 = vld [vmem:[%s1711 + $0x34] sm:$0xf]
  %v1726 = vld [vmem:[%s1711 + $0x38] sm:$0xf]
  %v1727 = vld [vmem:[%s1711 + $0x3c] sm:$0xf]
  %s1728 = scalar_lea.vmem %s6, 9
  %v1729 = vld [vmem:[%s1728] sm:$0x1]
  %v1731 = vlaneseq
  %v1732 = vshrl.u32 %v1731, 7
  %v1733 = vsub.s32 0, %v1732
  %v1734 = vrot.slane %v1729, %v1733
  %v1752 = vunpack.c.l.b16 %v1712
  %v1753 = vunpack.c.l.b16 %v1713
  %v1754 = vunpack.c.l.b16 %v1714
  %v1755 = vunpack.c.l.b16 %v1715
  %v1756 = vunpack.c.l.b16 %v1716
  %v1757 = vunpack.c.l.b16 %v1717
  %v1758 = vunpack.c.l.b16 %v1718
  %v1759 = vunpack.c.l.b16 %v1719
  %v1760 = vunpack.c.l.b16 %v1720
  %v1761 = vunpack.c.l.b16 %v1721
  %v1762 = vunpack.c.l.b16 %v1722
  %v1763 = vunpack.c.l.b16 %v1723
  %v1764 = vunpack.c.l.b16 %v1724
  %v1765 = vunpack.c.l.b16 %v1725
  %v1766 = vunpack.c.l.b16 %v1726
  %v1767 = vunpack.c.l.b16 %v1727
  %v1768 = vpack.c.b16 %v1753, %v1752
  %v1769 = vpack.c.b16 %v1755, %v1754
  %v1770 = vpack.c.b16 %v1757, %v1756
  %v1771 = vpack.c.b16 %v1759, %v1758
  %v1772 = vpack.c.b16 %v1761, %v1760
  %v1773 = vpack.c.b16 %v1763, %v1762
  %v1774 = vpack.c.b16 %v1765, %v1764
  %v1775 = vpack.c.b16 %v1767, %v1766
  %1784 = vmatprep.subr.bf16.mxu0 0
  %1785 = vmatpush1.bf16.msra.mxu0 %v1768
  %1786 = vmatprep.subr.bf16.mxu0 0
  %1787 = vmatpush1.bf16.msra.mxu0 %v1769
  %1788 = vmatprep.subr.bf16.mxu0 0
  %1789 = vmatpush1.bf16.msra.mxu0 %v1770
  %1790 = vmatprep.subr.bf16.mxu0 0
  %1791 = vmatpush1.bf16.msra.mxu0 %v1771
  %1792 = vmatprep.subr.bf16.mxu0 0
  %1793 = vmatpush1.bf16.msra.mxu0 %v1772
  %1794 = vmatprep.subr.bf16.mxu0 0
  %1795 = vmatpush1.bf16.msra.mxu0 %v1773
  %1796 = vmatprep.subr.bf16.mxu0 0
  %1797 = vmatpush1.bf16.msra.mxu0 %v1774
  %1798 = vmatprep.subr.bf16.mxu0 0
  %1799 = vmatpush1.bf16.msra.mxu0 %v1775
  %1800 = vmatprep.subr.bf16.mxu0 0
  %1801 = vmatpush1.bf16.msra.mxu0 0
  %1802 = vmatprep.subr.bf16.mxu0 0
  %1803 = vmatpush1.bf16.msra.mxu0 0
  %1804 = vmatprep.subr.bf16.mxu0 0
  %1805 = vmatpush1.bf16.msra.mxu0 0
  %1806 = vmatprep.subr.bf16.mxu0 0
  %1807 = vmatpush1.bf16.msra.mxu0 0
  %1808 = vmatprep.subr.bf16.mxu0 0
  %1809 = vmatpush1.bf16.msra.mxu0 0
  %1810 = vmatprep.subr.bf16.mxu0 0
  %1811 = vmatpush1.bf16.msra.mxu0 0
  %1812 = vmatprep.subr.bf16.mxu0 0
  %1813 = vmatpush1.bf16.msra.mxu0 0
  %1814 = vmatprep.subr.bf16.mxu0 0
  %1815 = vmatpush1.bf16.msra.mxu0 0
  %1816 = vmatprep.mubr.bf16.mxu0 0
  %1817 = vmatmul.mubr.bf16.gmra.mrb[0].mxu0 %v1707
  %v1818 = vpop.f32.mrb[0].mxu0
  %v1819 = vadd.f32 %v1734, %v1818
  %v1820 = vpop.f32.mrb[0].mxu0
  %v1821 = vpop.f32.mrb[0].mxu0
  %v1822 = vadd.f32 %v1734, %v1821
  %v1823 = vpop.f32.mrb[0].mxu0
  %1824 = vmatprep.mubr.bf16.mxu0 0
  %1825 = vmatmul.mubr.bf16.gmra.mrb[0].mxu0 %v1708
  %v1826 = vpop.f32.mrb[0].mxu0
  %v1827 = vadd.f32 %v1734, %v1826
  %v1828 = vpop.f32.mrb[0].mxu0
  %v1829 = vpop.f32.mrb[0].mxu0
  %v1830 = vadd.f32 %v1734, %v1829
  %v1831 = vpop.f32.mrb[0].mxu0
  %1832 = vmatprep.mubr.bf16.mxu0 0
  %1833 = vmatmul.mubr.bf16.gmra.mrb[0].mxu0 %v1709
  %v1834 = vpop.f32.mrb[0].mxu0
  %v1835 = vadd.f32 %v1734, %v1834
  %v1836 = vpop.f32.mrb[0].mxu0
  %v1837 = vpop.f32.mrb[0].mxu0
  %v1838 = vadd.f32 %v1734, %v1837
  %v1839 = vpop.f32.mrb[0].mxu0
  %1840 = vmatprep.mubr.bf16.mxu0 0
  %1841 = vmatmul.mubr.bf16.gmra.mrb[0].mxu0 %v1710
  %v1842 = vpop.f32.mrb[0].mxu0
  %v1843 = vadd.f32 %v1734, %v1842
  %v1844 = vpop.f32.mrb[0].mxu0
  %v1845 = vpop.f32.mrb[0].mxu0
  %v1846 = vadd.f32 %v1734, %v1845
  %v1847 = vpop.f32.mrb[0].mxu0
  %1848 = vdwg.mxu0
  %v1849 = vmax.f32 %v1819, 0.0
  %v1850 = vmax.f32 %v1822, 0.0
  %v1851 = vmax.f32 %v1827, 0.0
  %v1852 = vmax.f32 %v1830, 0.0
  %v1853 = vmax.f32 %v1835, 0.0
  %v1854 = vmax.f32 %v1838, 0.0
  %v1855 = vmax.f32 %v1843, 0.0
  %v1856 = vmax.f32 %v1846, 0.0
  %v1857 = vpack.c.bf16 %v1850, %v1849
  %v1858 = vpack.c.bf16 %v1852, %v1851
  %v1859 = vpack.c.bf16 %v1854, %v1853
  %v1860 = vpack.c.bf16 %v1856, %v1855
  %s1861 = scalar_lea.vmem %s5, 640
  %v1862 = vld [vmem:[%s1861] sm:$0xf]
  %v1863 = vld [vmem:[%s1861 + $0x4] sm:$0xf]
  %v1864 = vld [vmem:[%s1861 + $0x8] sm:$0xf]
  %v1865 = vld [vmem:[%s1861 + $0xc] sm:$0xf]
  %v1866 = vld [vmem:[%s1861 + $0x10] sm:$0xf]
  %v1867 = vld [vmem:[%s1861 + $0x14] sm:$0xf]
  %v1868 = vld [vmem:[%s1861 + $0x18] sm:$0xf]
  %v1869 = vld [vmem:[%s1861 + $0x1c] sm:$0xf]
  %v1870 = vld [vmem:[%s1861 + $0x20] sm:$0xf]
  %v1871 = vld [vmem:[%s1861 + $0x24] sm:$0xf]
  %v1872 = vld [vmem:[%s1861 + $0x28] sm:$0xf]
  %v1873 = vld [vmem:[%s1861 + $0x2c] sm:$0xf]
  %v1874 = vld [vmem:[%s1861 + $0x30] sm:$0xf]
  %v1875 = vld [vmem:[%s1861 + $0x34] sm:$0xf]
  %v1876 = vld [vmem:[%s1861 + $0x38] sm:$0xf]
  %v1877 = vld [vmem:[%s1861 + $0x3c] sm:$0xf]
  %s1878 = scalar_lea.vmem %s6, 10
  %v1879 = vld [vmem:[%s1878] sm:$0x1]
  %v1881 = vlaneseq
  %v1882 = vshrl.u32 %v1881, 7
  %v1883 = vsub.s32 0, %v1882
  %v1884 = vrot.slane %v1879, %v1883
  %v1902 = vunpack.c.l.b16 %v1862
  %v1903 = vunpack.c.l.b16 %v1863
  %v1904 = vunpack.c.l.b16 %v1864
  %v1905 = vunpack.c.l.b16 %v1865
  %v1906 = vunpack.c.l.b16 %v1866
  %v1907 = vunpack.c.l.b16 %v1867
  %v1908 = vunpack.c.l.b16 %v1868
  %v1909 = vunpack.c.l.b16 %v1869
  %v1910 = vunpack.c.l.b16 %v1870
  %v1911 = vunpack.c.l.b16 %v1871
  %v1912 = vunpack.c.l.b16 %v1872
  %v1913 = vunpack.c.l.b16 %v1873
  %v1914 = vunpack.c.l.b16 %v1874
  %v1915 = vunpack.c.l.b16 %v1875
  %v1916 = vunpack.c.l.b16 %v1876
  %v1917 = vunpack.c.l.b16 %v1877
  %v1918 = vpack.c.b16 %v1903, %v1902
  %v1919 = vpack.c.b16 %v1905, %v1904
  %v1920 = vpack.c.b16 %v1907, %v1906
  %v1921 = vpack.c.b16 %v1909, %v1908
  %v1922 = vpack.c.b16 %v1911, %v1910
  %v1923 = vpack.c.b16 %v1913, %v1912
  %v1924 = vpack.c.b16 %v1915, %v1914
  %v1925 = vpack.c.b16 %v1917, %v1916
  %1934 = vmatprep.subr.bf16.mxu0 0
  %1935 = vmatpush1.bf16.msra.mxu0 %v1918
  %1936 = vmatprep.subr.bf16.mxu0 0
  %1937 = vmatpush1.bf16.msra.mxu0 %v1919
  %1938 = vmatprep.subr.bf16.mxu0 0
  %1939 = vmatpush1.bf16.msra.mxu0 %v1920
  %1940 = vmatprep.subr.bf16.mxu0 0
  %1941 = vmatpush1.bf16.msra.mxu0 %v1921
  %1942 = vmatprep.subr.bf16.mxu0 0
  %1943 = vmatpush1.bf16.msra.mxu0 %v1922
  %1944 = vmatprep.subr.bf16.mxu0 0
  %1945 = vmatpush1.bf16.msra.mxu0 %v1923
  %1946 = vmatprep.subr.bf16.mxu0 0
  %1947 = vmatpush1.bf16.msra.mxu0 %v1924
  %1948 = vmatprep.subr.bf16.mxu0 0
  %1949 = vmatpush1.bf16.msra.mxu0 %v1925
  %1950 = vmatprep.subr.bf16.mxu0 0
  %1951 = vmatpush1.bf16.msra.mxu0 0
  %1952 = vmatprep.subr.bf16.mxu0 0
  %1953 = vmatpush1.bf16.msra.mxu0 0
  %1954 = vmatprep.subr.bf16.mxu0 0
  %1955 = vmatpush1.bf16.msra.mxu0 0
  %1956 = vmatprep.subr.bf16.mxu0 0
  %1957 = vmatpush1.bf16.msra.mxu0 0
  %1958 = vmatprep.subr.bf16.mxu0 0
  %1959 = vmatpush1.bf16.msra.mxu0 0
  %1960 = vmatprep.subr.bf16.mxu0 0
  %1961 = vmatpush1.bf16.msra.mxu0 0
  %1962 = vmatprep.subr.bf16.mxu0 0
  %1963 = vmatpush1.bf16.msra.mxu0 0
  %1964 = vmatprep.subr.bf16.mxu0 0
  %1965 = vmatpush1.bf16.msra.mxu0 0
  %1966 = vmatprep.mubr.bf16.mxu0 0
  %1967 = vmatmul.mubr.bf16.gmra.mrb[0].mxu0 %v1857
  %v1968 = vpop.f32.mrb[0].mxu0
  %v1969 = vadd.f32 %v1884, %v1968
  %v1970 = vpop.f32.mrb[0].mxu0
  %v1971 = vpop.f32.mrb[0].mxu0
  %v1972 = vadd.f32 %v1884, %v1971
  %v1973 = vpop.f32.mrb[0].mxu0
  %1974 = vmatprep.mubr.bf16.mxu0 0
  %1975 = vmatmul.mubr.bf16.gmra.mrb[0].mxu0 %v1858
  %v1976 = vpop.f32.mrb[0].mxu0
  %v1977 = vadd.f32 %v1884, %v1976
  %v1978 = vpop.f32.mrb[0].mxu0
  %v1979 = vpop.f32.mrb[0].mxu0
  %v1980 = vadd.f32 %v1884, %v1979
  %v1981 = vpop.f32.mrb[0].mxu0
  %1982 = vmatprep.mubr.bf16.mxu0 0
  %1983 = vmatmul.mubr.bf16.gmra.mrb[0].mxu0 %v1859
  %v1984 = vpop.f32.mrb[0].mxu0
  %v1985 = vadd.f32 %v1884, %v1984
  %v1986 = vpop.f32.mrb[0].mxu0
  %v1987 = vpop.f32.mrb[0].mxu0
  %v1988 = vadd.f32 %v1884, %v1987
  %v1989 = vpop.f32.mrb[0].mxu0
  %1990 = vmatprep.mubr.bf16.mxu0 0
  %1991 = vmatmul.mubr.bf16.gmra.mrb[0].mxu0 %v1860
  %v1992 = vpop.f32.mrb[0].mxu0
  %v1993 = vadd.f32 %v1884, %v1992
  %v1994 = vpop.f32.mrb[0].mxu0
  %v1995 = vpop.f32.mrb[0].mxu0
  %v1996 = vadd.f32 %v1884, %v1995
  %v1997 = vpop.f32.mrb[0].mxu0
  %1998 = vdwg.mxu0
  %v1999 = vmax.f32 %v1969, 0.0
  %v2000 = vmax.f32 %v1972, 0.0
  %v2001 = vmax.f32 %v1977, 0.0
  %v2002 = vmax.f32 %v1980, 0.0
  %v2003 = vmax.f32 %v1985, 0.0
  %v2004 = vmax.f32 %v1988, 0.0
  %v2005 = vmax.f32 %v1993, 0.0
  %v2006 = vmax.f32 %v1996, 0.0
  %v2007 = vpack.c.bf16 %v2000, %v1999
  %v2008 = vpack.c.bf16 %v2002, %v2001
  %v2009 = vpack.c.bf16 %v2004, %v2003
  %v2010 = vpack.c.bf16 %v2006, %v2005
  %s2011 = scalar_lea.vmem %s5, 704
  %v2012 = vld [vmem:[%s2011] sm:$0xf]
  %v2013 = vld [vmem:[%s2011 + $0x4] sm:$0xf]
  %v2014 = vld [vmem:[%s2011 + $0x8] sm:$0xf]
  %v2015 = vld [vmem:[%s2011 + $0xc] sm:$0xf]
  %v2016 = vld [vmem:[%s2011 + $0x10] sm:$0xf]
  %v2017 = vld [vmem:[%s2011 + $0x14] sm:$0xf]
  %v2018 = vld [vmem:[%s2011 + $0x18] sm:$0xf]
  %v2019 = vld [vmem:[%s2011 + $0x1c] sm:$0xf]
  %v2020 = vld [vmem:[%s2011 + $0x20] sm:$0xf]
  %v2021 = vld [vmem:[%s2011 + $0x24] sm:$0xf]
  %v2022 = vld [vmem:[%s2011 + $0x28] sm:$0xf]
  %v2023 = vld [vmem:[%s2011 + $0x2c] sm:$0xf]
  %v2024 = vld [vmem:[%s2011 + $0x30] sm:$0xf]
  %v2025 = vld [vmem:[%s2011 + $0x34] sm:$0xf]
  %v2026 = vld [vmem:[%s2011 + $0x38] sm:$0xf]
  %v2027 = vld [vmem:[%s2011 + $0x3c] sm:$0xf]
  %s2028 = scalar_lea.vmem %s6, 11
  %v2029 = vld [vmem:[%s2028] sm:$0x1]
  %v2031 = vlaneseq
  %v2032 = vshrl.u32 %v2031, 7
  %v2033 = vsub.s32 0, %v2032
  %v2034 = vrot.slane %v2029, %v2033
  %v2052 = vunpack.c.l.b16 %v2012
  %v2053 = vunpack.c.l.b16 %v2013
  %v2054 = vunpack.c.l.b16 %v2014
  %v2055 = vunpack.c.l.b16 %v2015
  %v2056 = vunpack.c.l.b16 %v2016
  %v2057 = vunpack.c.l.b16 %v2017
  %v2058 = vunpack.c.l.b16 %v2018
  %v2059 = vunpack.c.l.b16 %v2019
  %v2060 = vunpack.c.l.b16 %v2020
  %v2061 = vunpack.c.l.b16 %v2021
  %v2062 = vunpack.c.l.b16 %v2022
  %v2063 = vunpack.c.l.b16 %v2023
  %v2064 = vunpack.c.l.b16 %v2024
  %v2065 = vunpack.c.l.b16 %v2025
  %v2066 = vunpack.c.l.b16 %v2026
  %v2067 = vunpack.c.l.b16 %v2027
  %v2068 = vpack.c.b16 %v2053, %v2052
  %v2069 = vpack.c.b16 %v2055, %v2054
  %v2070 = vpack.c.b16 %v2057, %v2056
  %v2071 = vpack.c.b16 %v2059, %v2058
  %v2072 = vpack.c.b16 %v2061, %v2060
  %v2073 = vpack.c.b16 %v2063, %v2062
  %v2074 = vpack.c.b16 %v2065, %v2064
  %v2075 = vpack.c.b16 %v2067, %v2066
  %2084 = vmatprep.subr.bf16.mxu0 0
  %2085 = vmatpush1.bf16.msra.mxu0 %v2068
  %2086 = vmatprep.subr.bf16.mxu0 0
  %2087 = vmatpush1.bf16.msra.mxu0 %v2069
  %2088 = vmatprep.subr.bf16.mxu0 0
  %2089 = vmatpush1.bf16.msra.mxu0 %v2070
  %2090 = vmatprep.subr.bf16.mxu0 0
  %2091 = vmatpush1.bf16.msra.mxu0 %v2071
  %2092 = vmatprep.subr.bf16.mxu0 0
  %2093 = vmatpush1.bf16.msra.mxu0 %v2072
  %2094 = vmatprep.subr.bf16.mxu0 0
  %2095 = vmatpush1.bf16.msra.mxu0 %v2073
  %2096 = vmatprep.subr.bf16.mxu0 0
  %2097 = vmatpush1.bf16.msra.mxu0 %v2074
  %2098 = vmatprep.subr.bf16.mxu0 0
  %2099 = vmatpush1.bf16.msra.mxu0 %v2075
  %2100 = vmatprep.subr.bf16.mxu0 0
  %2101 = vmatpush1.bf16.msra.mxu0 0
  %2102 = vmatprep.subr.bf16.mxu0 0
  %2103 = vmatpush1.bf16.msra.mxu0 0
  %2104 = vmatprep.subr.bf16.mxu0 0
  %2105 = vmatpush1.bf16.msra.mxu0 0
  %2106 = vmatprep.subr.bf16.mxu0 0
  %2107 = vmatpush1.bf16.msra.mxu0 0
  %2108 = vmatprep.subr.bf16.mxu0 0
  %2109 = vmatpush1.bf16.msra.mxu0 0
  %2110 = vmatprep.subr.bf16.mxu0 0
  %2111 = vmatpush1.bf16.msra.mxu0 0
  %2112 = vmatprep.subr.bf16.mxu0 0
  %2113 = vmatpush1.bf16.msra.mxu0 0
  %2114 = vmatprep.subr.bf16.mxu0 0
  %2115 = vmatpush1.bf16.msra.mxu0 0
  %2116 = vmatprep.mubr.bf16.mxu0 0
  %2117 = vmatmul.mubr.bf16.gmra.mrb[0].mxu0 %v2007
  %v2118 = vpop.f32.mrb[0].mxu0
  %v2119 = vadd.f32 %v2034, %v2118
  %v2120 = vpop.f32.mrb[0].mxu0
  %v2121 = vpop.f32.mrb[0].mxu0
  %v2122 = vadd.f32 %v2034, %v2121
  %v2123 = vpop.f32.mrb[0].mxu0
  %2124 = vmatprep.mubr.bf16.mxu0 0
  %2125 = vmatmul.mubr.bf16.gmra.mrb[0].mxu0 %v2008
  %v2126 = vpop.f32.mrb[0].mxu0
  %v2127 = vadd.f32 %v2034, %v2126
  %v2128 = vpop.f32.mrb[0].mxu0
  %v2129 = vpop.f32.mrb[0].mxu0
  %v2130 = vadd.f32 %v2034, %v2129
  %v2131 = vpop.f32.mrb[0].mxu0
  %2132 = vmatprep.mubr.bf16.mxu0 0
  %2133 = vmatmul.mubr.bf16.gmra.mrb[0].mxu0 %v2009
  %v2134 = vpop.f32.mrb[0].mxu0
  %v2135 = vadd.f32 %v2034, %v2134
  %v2136 = vpop.f32.mrb[0].mxu0
  %v2137 = vpop.f32.mrb[0].mxu0
  %v2138 = vadd.f32 %v2034, %v2137
  %v2139 = vpop.f32.mrb[0].mxu0
  %2140 = vmatprep.mubr.bf16.mxu0 0
  %2141 = vmatmul.mubr.bf16.gmra.mrb[0].mxu0 %v2010
  %v2142 = vpop.f32.mrb[0].mxu0
  %v2143 = vadd.f32 %v2034, %v2142
  %v2144 = vpop.f32.mrb[0].mxu0
  %v2145 = vpop.f32.mrb[0].mxu0
  %v2146 = vadd.f32 %v2034, %v2145
  %v2147 = vpop.f32.mrb[0].mxu0
  %2148 = vdwg.mxu0
  %v2149 = vmax.f32 %v2119, 0.0
  %v2150 = vmax.f32 %v2122, 0.0
  %v2151 = vmax.f32 %v2127, 0.0
  %v2152 = vmax.f32 %v2130, 0.0
  %v2153 = vmax.f32 %v2135, 0.0
  %v2154 = vmax.f32 %v2138, 0.0
  %v2155 = vmax.f32 %v2143, 0.0
  %v2156 = vmax.f32 %v2146, 0.0
  %v2157 = vpack.c.bf16 %v2150, %v2149
  %v2158 = vpack.c.bf16 %v2152, %v2151
  %v2159 = vpack.c.bf16 %v2154, %v2153
  %v2160 = vpack.c.bf16 %v2156, %v2155
  %s2161 = scalar_lea.vmem %s5, 768
  %v2162 = vld [vmem:[%s2161] sm:$0xf]
  %v2163 = vld [vmem:[%s2161 + $0x4] sm:$0xf]
  %v2164 = vld [vmem:[%s2161 + $0x8] sm:$0xf]
  %v2165 = vld [vmem:[%s2161 + $0xc] sm:$0xf]
  %v2166 = vld [vmem:[%s2161 + $0x10] sm:$0xf]
  %v2167 = vld [vmem:[%s2161 + $0x14] sm:$0xf]
  %v2168 = vld [vmem:[%s2161 + $0x18] sm:$0xf]
  %v2169 = vld [vmem:[%s2161 + $0x1c] sm:$0xf]
  %v2170 = vld [vmem:[%s2161 + $0x20] sm:$0xf]
  %v2171 = vld [vmem:[%s2161 + $0x24] sm:$0xf]
  %v2172 = vld [vmem:[%s2161 + $0x28] sm:$0xf]
  %v2173 = vld [vmem:[%s2161 + $0x2c] sm:$0xf]
  %v2174 = vld [vmem:[%s2161 + $0x30] sm:$0xf]
  %v2175 = vld [vmem:[%s2161 + $0x34] sm:$0xf]
  %v2176 = vld [vmem:[%s2161 + $0x38] sm:$0xf]
  %v2177 = vld [vmem:[%s2161 + $0x3c] sm:$0xf]
  %s2178 = scalar_lea.vmem %s6, 12
  %v2179 = vld [vmem:[%s2178] sm:$0x1]
  %v2181 = vlaneseq
  %v2182 = vshrl.u32 %v2181, 7
  %v2183 = vsub.s32 0, %v2182
  %v2184 = vrot.slane %v2179, %v2183
  %v2202 = vunpack.c.l.b16 %v2162
  %v2203 = vunpack.c.l.b16 %v2163
  %v2204 = vunpack.c.l.b16 %v2164
  %v2205 = vunpack.c.l.b16 %v2165
  %v2206 = vunpack.c.l.b16 %v2166
  %v2207 = vunpack.c.l.b16 %v2167
  %v2208 = vunpack.c.l.b16 %v2168
  %v2209 = vunpack.c.l.b16 %v2169
  %v2210 = vunpack.c.l.b16 %v2170
  %v2211 = vunpack.c.l.b16 %v2171
  %v2212 = vunpack.c.l.b16 %v2172
  %v2213 = vunpack.c.l.b16 %v2173
  %v2214 = vunpack.c.l.b16 %v2174
  %v2215 = vunpack.c.l.b16 %v2175
  %v2216 = vunpack.c.l.b16 %v2176
  %v2217 = vunpack.c.l.b16 %v2177
  %v2218 = vpack.c.b16 %v2203, %v2202
  %v2219 = vpack.c.b16 %v2205, %v2204
  %v2220 = vpack.c.b16 %v2207, %v2206
  %v2221 = vpack.c.b16 %v2209, %v2208
  %v2222 = vpack.c.b16 %v2211, %v2210
  %v2223 = vpack.c.b16 %v2213, %v2212
  %v2224 = vpack.c.b16 %v2215, %v2214
  %v2225 = vpack.c.b16 %v2217, %v2216
  %2234 = vmatprep.subr.bf16.mxu0 0
  %2235 = vmatpush1.bf16.msra.mxu0 %v2218
  %2236 = vmatprep.subr.bf16.mxu0 0
  %2237 = vmatpush1.bf16.msra.mxu0 %v2219
  %2238 = vmatprep.subr.bf16.mxu0 0
  %2239 = vmatpush1.bf16.msra.mxu0 %v2220
  %2240 = vmatprep.subr.bf16.mxu0 0
  %2241 = vmatpush1.bf16.msra.mxu0 %v2221
  %2242 = vmatprep.subr.bf16.mxu0 0
  %2243 = vmatpush1.bf16.msra.mxu0 %v2222
  %2244 = vmatprep.subr.bf16.mxu0 0
  %2245 = vmatpush1.bf16.msra.mxu0 %v2223
  %2246 = vmatprep.subr.bf16.mxu0 0
  %2247 = vmatpush1.bf16.msra.mxu0 %v2224
  %2248 = vmatprep.subr.bf16.mxu0 0
  %2249 = vmatpush1.bf16.msra.mxu0 %v2225
  %2250 = vmatprep.subr.bf16.mxu0 0
  %2251 = vmatpush1.bf16.msra.mxu0 0
  %2252 = vmatprep.subr.bf16.mxu0 0
  %2253 = vmatpush1.bf16.msra.mxu0 0
  %2254 = vmatprep.subr.bf16.mxu0 0
  %2255 = vmatpush1.bf16.msra.mxu0 0
  %2256 = vmatprep.subr.bf16.mxu0 0
  %2257 = vmatpush1.bf16.msra.mxu0 0
  %2258 = vmatprep.subr.bf16.mxu0 0
  %2259 = vmatpush1.bf16.msra.mxu0 0
  %2260 = vmatprep.subr.bf16.mxu0 0
  %2261 = vmatpush1.bf16.msra.mxu0 0
  %2262 = vmatprep.subr.bf16.mxu0 0
  %2263 = vmatpush1.bf16.msra.mxu0 0
  %2264 = vmatprep.subr.bf16.mxu0 0
  %2265 = vmatpush1.bf16.msra.mxu0 0
  %2266 = vmatprep.mubr.bf16.mxu0 0
  %2267 = vmatmul.mubr.bf16.gmra.mrb[0].mxu0 %v2157
  %v2268 = vpop.f32.mrb[0].mxu0
  %v2269 = vadd.f32 %v2184, %v2268
  %v2270 = vpop.f32.mrb[0].mxu0
  %v2271 = vpop.f32.mrb[0].mxu0
  %v2272 = vadd.f32 %v2184, %v2271
  %v2273 = vpop.f32.mrb[0].mxu0
  %2274 = vmatprep.mubr.bf16.mxu0 0
  %2275 = vmatmul.mubr.bf16.gmra.mrb[0].mxu0 %v2158
  %v2276 = vpop.f32.mrb[0].mxu0
  %v2277 = vadd.f32 %v2184, %v2276
  %v2278 = vpop.f32.mrb[0].mxu0
  %v2279 = vpop.f32.mrb[0].mxu0
  %v2280 = vadd.f32 %v2184, %v2279
  %v2281 = vpop.f32.mrb[0].mxu0
  %2282 = vmatprep.mubr.bf16.mxu0 0
  %2283 = vmatmul.mubr.bf16.gmra.mrb[0].mxu0 %v2159
  %v2284 = vpop.f32.mrb[0].mxu0
  %v2285 = vadd.f32 %v2184, %v2284
  %v2286 = vpop.f32.mrb[0].mxu0
  %v2287 = vpop.f32.mrb[0].mxu0
  %v2288 = vadd.f32 %v2184, %v2287
  %v2289 = vpop.f32.mrb[0].mxu0
  %2290 = vmatprep.mubr.bf16.mxu0 0
  %2291 = vmatmul.mubr.bf16.gmra.mrb[0].mxu0 %v2160
  %v2292 = vpop.f32.mrb[0].mxu0
  %v2293 = vadd.f32 %v2184, %v2292
  %v2294 = vpop.f32.mrb[0].mxu0
  %v2295 = vpop.f32.mrb[0].mxu0
  %v2296 = vadd.f32 %v2184, %v2295
  %v2297 = vpop.f32.mrb[0].mxu0
  %2298 = vdwg.mxu0
  %v2299 = vmax.f32 %v2269, 0.0
  %v2300 = vmax.f32 %v2272, 0.0
  %v2301 = vmax.f32 %v2277, 0.0
  %v2302 = vmax.f32 %v2280, 0.0
  %v2303 = vmax.f32 %v2285, 0.0
  %v2304 = vmax.f32 %v2288, 0.0
  %v2305 = vmax.f32 %v2293, 0.0
  %v2306 = vmax.f32 %v2296, 0.0
  %v2307 = vpack.c.bf16 %v2300, %v2299
  %v2308 = vpack.c.bf16 %v2302, %v2301
  %v2309 = vpack.c.bf16 %v2304, %v2303
  %v2310 = vpack.c.bf16 %v2306, %v2305
  %s2311 = scalar_lea.vmem %s5, 832
  %v2312 = vld [vmem:[%s2311] sm:$0xf]
  %v2313 = vld [vmem:[%s2311 + $0x4] sm:$0xf]
  %v2314 = vld [vmem:[%s2311 + $0x8] sm:$0xf]
  %v2315 = vld [vmem:[%s2311 + $0xc] sm:$0xf]
  %v2316 = vld [vmem:[%s2311 + $0x10] sm:$0xf]
  %v2317 = vld [vmem:[%s2311 + $0x14] sm:$0xf]
  %v2318 = vld [vmem:[%s2311 + $0x18] sm:$0xf]
  %v2319 = vld [vmem:[%s2311 + $0x1c] sm:$0xf]
  %v2320 = vld [vmem:[%s2311 + $0x20] sm:$0xf]
  %v2321 = vld [vmem:[%s2311 + $0x24] sm:$0xf]
  %v2322 = vld [vmem:[%s2311 + $0x28] sm:$0xf]
  %v2323 = vld [vmem:[%s2311 + $0x2c] sm:$0xf]
  %v2324 = vld [vmem:[%s2311 + $0x30] sm:$0xf]
  %v2325 = vld [vmem:[%s2311 + $0x34] sm:$0xf]
  %v2326 = vld [vmem:[%s2311 + $0x38] sm:$0xf]
  %v2327 = vld [vmem:[%s2311 + $0x3c] sm:$0xf]
  %s2328 = scalar_lea.vmem %s6, 13
  %v2329 = vld [vmem:[%s2328] sm:$0x1]
  %v2331 = vlaneseq
  %v2332 = vshrl.u32 %v2331, 7
  %v2333 = vsub.s32 0, %v2332
  %v2334 = vrot.slane %v2329, %v2333
  %v2352 = vunpack.c.l.b16 %v2312
  %v2353 = vunpack.c.l.b16 %v2313
  %v2354 = vunpack.c.l.b16 %v2314
  %v2355 = vunpack.c.l.b16 %v2315
  %v2356 = vunpack.c.l.b16 %v2316
  %v2357 = vunpack.c.l.b16 %v2317
  %v2358 = vunpack.c.l.b16 %v2318
  %v2359 = vunpack.c.l.b16 %v2319
  %v2360 = vunpack.c.l.b16 %v2320
  %v2361 = vunpack.c.l.b16 %v2321
  %v2362 = vunpack.c.l.b16 %v2322
  %v2363 = vunpack.c.l.b16 %v2323
  %v2364 = vunpack.c.l.b16 %v2324
  %v2365 = vunpack.c.l.b16 %v2325
  %v2366 = vunpack.c.l.b16 %v2326
  %v2367 = vunpack.c.l.b16 %v2327
  %v2368 = vpack.c.b16 %v2353, %v2352
  %v2369 = vpack.c.b16 %v2355, %v2354
  %v2370 = vpack.c.b16 %v2357, %v2356
  %v2371 = vpack.c.b16 %v2359, %v2358
  %v2372 = vpack.c.b16 %v2361, %v2360
  %v2373 = vpack.c.b16 %v2363, %v2362
  %v2374 = vpack.c.b16 %v2365, %v2364
  %v2375 = vpack.c.b16 %v2367, %v2366
  %2384 = vmatprep.subr.bf16.mxu0 0
  %2385 = vmatpush1.bf16.msra.mxu0 %v2368
  %2386 = vmatprep.subr.bf16.mxu0 0
  %2387 = vmatpush1.bf16.msra.mxu0 %v2369
  %2388 = vmatprep.subr.bf16.mxu0 0
  %2389 = vmatpush1.bf16.msra.mxu0 %v2370
  %2390 = vmatprep.subr.bf16.mxu0 0
  %2391 = vmatpush1.bf16.msra.mxu0 %v2371
  %2392 = vmatprep.subr.bf16.mxu0 0
  %2393 = vmatpush1.bf16.msra.mxu0 %v2372
  %2394 = vmatprep.subr.bf16.mxu0 0
  %2395 = vmatpush1.bf16.msra.mxu0 %v2373
  %2396 = vmatprep.subr.bf16.mxu0 0
  %2397 = vmatpush1.bf16.msra.mxu0 %v2374
  %2398 = vmatprep.subr.bf16.mxu0 0
  %2399 = vmatpush1.bf16.msra.mxu0 %v2375
  %2400 = vmatprep.subr.bf16.mxu0 0
  %2401 = vmatpush1.bf16.msra.mxu0 0
  %2402 = vmatprep.subr.bf16.mxu0 0
  %2403 = vmatpush1.bf16.msra.mxu0 0
  %2404 = vmatprep.subr.bf16.mxu0 0
  %2405 = vmatpush1.bf16.msra.mxu0 0
  %2406 = vmatprep.subr.bf16.mxu0 0
  %2407 = vmatpush1.bf16.msra.mxu0 0
  %2408 = vmatprep.subr.bf16.mxu0 0
  %2409 = vmatpush1.bf16.msra.mxu0 0
  %2410 = vmatprep.subr.bf16.mxu0 0
  %2411 = vmatpush1.bf16.msra.mxu0 0
  %2412 = vmatprep.subr.bf16.mxu0 0
  %2413 = vmatpush1.bf16.msra.mxu0 0
  %2414 = vmatprep.subr.bf16.mxu0 0
  %2415 = vmatpush1.bf16.msra.mxu0 0
  %2416 = vmatprep.mubr.bf16.mxu0 0
  %2417 = vmatmul.mubr.bf16.gmra.mrb[0].mxu0 %v2307
  %v2418 = vpop.f32.mrb[0].mxu0
  %v2419 = vadd.f32 %v2334, %v2418
  %v2420 = vpop.f32.mrb[0].mxu0
  %v2421 = vpop.f32.mrb[0].mxu0
  %v2422 = vadd.f32 %v2334, %v2421
  %v2423 = vpop.f32.mrb[0].mxu0
  %2424 = vmatprep.mubr.bf16.mxu0 0
  %2425 = vmatmul.mubr.bf16.gmra.mrb[0].mxu0 %v2308
  %v2426 = vpop.f32.mrb[0].mxu0
  %v2427 = vadd.f32 %v2334, %v2426
  %v2428 = vpop.f32.mrb[0].mxu0
  %v2429 = vpop.f32.mrb[0].mxu0
  %v2430 = vadd.f32 %v2334, %v2429
  %v2431 = vpop.f32.mrb[0].mxu0
  %2432 = vmatprep.mubr.bf16.mxu0 0
  %2433 = vmatmul.mubr.bf16.gmra.mrb[0].mxu0 %v2309
  %v2434 = vpop.f32.mrb[0].mxu0
  %v2435 = vadd.f32 %v2334, %v2434
  %v2436 = vpop.f32.mrb[0].mxu0
  %v2437 = vpop.f32.mrb[0].mxu0
  %v2438 = vadd.f32 %v2334, %v2437
  %v2439 = vpop.f32.mrb[0].mxu0
  %2440 = vmatprep.mubr.bf16.mxu0 0
  %2441 = vmatmul.mubr.bf16.gmra.mrb[0].mxu0 %v2310
  %v2442 = vpop.f32.mrb[0].mxu0
  %v2443 = vadd.f32 %v2334, %v2442
  %v2444 = vpop.f32.mrb[0].mxu0
  %v2445 = vpop.f32.mrb[0].mxu0
  %v2446 = vadd.f32 %v2334, %v2445
  %v2447 = vpop.f32.mrb[0].mxu0
  %2448 = vdwg.mxu0
  %v2449 = vmax.f32 %v2419, 0.0
  %v2450 = vmax.f32 %v2422, 0.0
  %v2451 = vmax.f32 %v2427, 0.0
  %v2452 = vmax.f32 %v2430, 0.0
  %v2453 = vmax.f32 %v2435, 0.0
  %v2454 = vmax.f32 %v2438, 0.0
  %v2455 = vmax.f32 %v2443, 0.0
  %v2456 = vmax.f32 %v2446, 0.0
  %v2457 = vpack.c.bf16 %v2450, %v2449
  %v2458 = vpack.c.bf16 %v2452, %v2451
  %v2459 = vpack.c.bf16 %v2454, %v2453
  %v2460 = vpack.c.bf16 %v2456, %v2455
  %s2461 = scalar_lea.vmem %s5, 896
  %v2462 = vld [vmem:[%s2461] sm:$0xf]
  %v2463 = vld [vmem:[%s2461 + $0x4] sm:$0xf]
  %v2464 = vld [vmem:[%s2461 + $0x8] sm:$0xf]
  %v2465 = vld [vmem:[%s2461 + $0xc] sm:$0xf]
  %v2466 = vld [vmem:[%s2461 + $0x10] sm:$0xf]
  %v2467 = vld [vmem:[%s2461 + $0x14] sm:$0xf]
  %v2468 = vld [vmem:[%s2461 + $0x18] sm:$0xf]
  %v2469 = vld [vmem:[%s2461 + $0x1c] sm:$0xf]
  %v2470 = vld [vmem:[%s2461 + $0x20] sm:$0xf]
  %v2471 = vld [vmem:[%s2461 + $0x24] sm:$0xf]
  %v2472 = vld [vmem:[%s2461 + $0x28] sm:$0xf]
  %v2473 = vld [vmem:[%s2461 + $0x2c] sm:$0xf]
  %v2474 = vld [vmem:[%s2461 + $0x30] sm:$0xf]
  %v2475 = vld [vmem:[%s2461 + $0x34] sm:$0xf]
  %v2476 = vld [vmem:[%s2461 + $0x38] sm:$0xf]
  %v2477 = vld [vmem:[%s2461 + $0x3c] sm:$0xf]
  %s2478 = scalar_lea.vmem %s6, 14
  %v2479 = vld [vmem:[%s2478] sm:$0x1]
  %v2481 = vlaneseq
  %v2482 = vshrl.u32 %v2481, 7
  %v2483 = vsub.s32 0, %v2482
  %v2484 = vrot.slane %v2479, %v2483
  %v2502 = vunpack.c.l.b16 %v2462
  %v2503 = vunpack.c.l.b16 %v2463
  %v2504 = vunpack.c.l.b16 %v2464
  %v2505 = vunpack.c.l.b16 %v2465
  %v2506 = vunpack.c.l.b16 %v2466
  %v2507 = vunpack.c.l.b16 %v2467
  %v2508 = vunpack.c.l.b16 %v2468
  %v2509 = vunpack.c.l.b16 %v2469
  %v2510 = vunpack.c.l.b16 %v2470
  %v2511 = vunpack.c.l.b16 %v2471
  %v2512 = vunpack.c.l.b16 %v2472
  %v2513 = vunpack.c.l.b16 %v2473
  %v2514 = vunpack.c.l.b16 %v2474
  %v2515 = vunpack.c.l.b16 %v2475
  %v2516 = vunpack.c.l.b16 %v2476
  %v2517 = vunpack.c.l.b16 %v2477
  %v2518 = vpack.c.b16 %v2503, %v2502
  %v2519 = vpack.c.b16 %v2505, %v2504
  %v2520 = vpack.c.b16 %v2507, %v2506
  %v2521 = vpack.c.b16 %v2509, %v2508
  %v2522 = vpack.c.b16 %v2511, %v2510
  %v2523 = vpack.c.b16 %v2513, %v2512
  %v2524 = vpack.c.b16 %v2515, %v2514
  %v2525 = vpack.c.b16 %v2517, %v2516
  %2534 = vmatprep.subr.bf16.mxu0 0
  %2535 = vmatpush1.bf16.msra.mxu0 %v2518
  %2536 = vmatprep.subr.bf16.mxu0 0
  %2537 = vmatpush1.bf16.msra.mxu0 %v2519
  %2538 = vmatprep.subr.bf16.mxu0 0
  %2539 = vmatpush1.bf16.msra.mxu0 %v2520
  %2540 = vmatprep.subr.bf16.mxu0 0
  %2541 = vmatpush1.bf16.msra.mxu0 %v2521
  %2542 = vmatprep.subr.bf16.mxu0 0
  %2543 = vmatpush1.bf16.msra.mxu0 %v2522
  %2544 = vmatprep.subr.bf16.mxu0 0
  %2545 = vmatpush1.bf16.msra.mxu0 %v2523
  %2546 = vmatprep.subr.bf16.mxu0 0
  %2547 = vmatpush1.bf16.msra.mxu0 %v2524
  %2548 = vmatprep.subr.bf16.mxu0 0
  %2549 = vmatpush1.bf16.msra.mxu0 %v2525
  %2550 = vmatprep.subr.bf16.mxu0 0
  %2551 = vmatpush1.bf16.msra.mxu0 0
  %2552 = vmatprep.subr.bf16.mxu0 0
  %2553 = vmatpush1.bf16.msra.mxu0 0
  %2554 = vmatprep.subr.bf16.mxu0 0
  %2555 = vmatpush1.bf16.msra.mxu0 0
  %2556 = vmatprep.subr.bf16.mxu0 0
  %2557 = vmatpush1.bf16.msra.mxu0 0
  %2558 = vmatprep.subr.bf16.mxu0 0
  %2559 = vmatpush1.bf16.msra.mxu0 0
  %2560 = vmatprep.subr.bf16.mxu0 0
  %2561 = vmatpush1.bf16.msra.mxu0 0
  %2562 = vmatprep.subr.bf16.mxu0 0
  %2563 = vmatpush1.bf16.msra.mxu0 0
  %2564 = vmatprep.subr.bf16.mxu0 0
  %2565 = vmatpush1.bf16.msra.mxu0 0
  %2566 = vmatprep.mubr.bf16.mxu0 0
  %2567 = vmatmul.mubr.bf16.gmra.mrb[0].mxu0 %v2457
  %v2568 = vpop.f32.mrb[0].mxu0
  %v2569 = vadd.f32 %v2484, %v2568
  %v2570 = vpop.f32.mrb[0].mxu0
  %v2571 = vpop.f32.mrb[0].mxu0
  %v2572 = vadd.f32 %v2484, %v2571
  %v2573 = vpop.f32.mrb[0].mxu0
  %2574 = vmatprep.mubr.bf16.mxu0 0
  %2575 = vmatmul.mubr.bf16.gmra.mrb[0].mxu0 %v2458
  %v2576 = vpop.f32.mrb[0].mxu0
  %v2577 = vadd.f32 %v2484, %v2576
  %v2578 = vpop.f32.mrb[0].mxu0
  %v2579 = vpop.f32.mrb[0].mxu0
  %v2580 = vadd.f32 %v2484, %v2579
  %v2581 = vpop.f32.mrb[0].mxu0
  %2582 = vmatprep.mubr.bf16.mxu0 0
  %2583 = vmatmul.mubr.bf16.gmra.mrb[0].mxu0 %v2459
  %v2584 = vpop.f32.mrb[0].mxu0
  %v2585 = vadd.f32 %v2484, %v2584
  %v2586 = vpop.f32.mrb[0].mxu0
  %v2587 = vpop.f32.mrb[0].mxu0
  %v2588 = vadd.f32 %v2484, %v2587
  %v2589 = vpop.f32.mrb[0].mxu0
  %2590 = vmatprep.mubr.bf16.mxu0 0
  %2591 = vmatmul.mubr.bf16.gmra.mrb[0].mxu0 %v2460
  %v2592 = vpop.f32.mrb[0].mxu0
  %v2593 = vadd.f32 %v2484, %v2592
  %v2594 = vpop.f32.mrb[0].mxu0
  %v2595 = vpop.f32.mrb[0].mxu0
  %v2596 = vadd.f32 %v2484, %v2595
  %v2597 = vpop.f32.mrb[0].mxu0
  %2598 = vdwg.mxu0
  %v2599 = vmax.f32 %v2569, 0.0
  %v2600 = vmax.f32 %v2572, 0.0
  %v2601 = vmax.f32 %v2577, 0.0
  %v2602 = vmax.f32 %v2580, 0.0
  %v2603 = vmax.f32 %v2585, 0.0
  %v2604 = vmax.f32 %v2588, 0.0
  %v2605 = vmax.f32 %v2593, 0.0
  %v2606 = vmax.f32 %v2596, 0.0
  %v2607 = vpack.c.bf16 %v2600, %v2599
  %v2608 = vpack.c.bf16 %v2602, %v2601
  %v2609 = vpack.c.bf16 %v2604, %v2603
  %v2610 = vpack.c.bf16 %v2606, %v2605
  %s2611 = scalar_lea.vmem %s5, 960
  %v2612 = vld [vmem:[%s2611] sm:$0xf]
  %v2613 = vld [vmem:[%s2611 + $0x4] sm:$0xf]
  %v2614 = vld [vmem:[%s2611 + $0x8] sm:$0xf]
  %v2615 = vld [vmem:[%s2611 + $0xc] sm:$0xf]
  %v2616 = vld [vmem:[%s2611 + $0x10] sm:$0xf]
  %v2617 = vld [vmem:[%s2611 + $0x14] sm:$0xf]
  %v2618 = vld [vmem:[%s2611 + $0x18] sm:$0xf]
  %v2619 = vld [vmem:[%s2611 + $0x1c] sm:$0xf]
  %v2620 = vld [vmem:[%s2611 + $0x20] sm:$0xf]
  %v2621 = vld [vmem:[%s2611 + $0x24] sm:$0xf]
  %v2622 = vld [vmem:[%s2611 + $0x28] sm:$0xf]
  %v2623 = vld [vmem:[%s2611 + $0x2c] sm:$0xf]
  %v2624 = vld [vmem:[%s2611 + $0x30] sm:$0xf]
  %v2625 = vld [vmem:[%s2611 + $0x34] sm:$0xf]
  %v2626 = vld [vmem:[%s2611 + $0x38] sm:$0xf]
  %v2627 = vld [vmem:[%s2611 + $0x3c] sm:$0xf]
  %s2628 = scalar_lea.vmem %s6, 15
  %v2629 = vld [vmem:[%s2628] sm:$0x1]
  %v2631 = vlaneseq
  %v2632 = vshrl.u32 %v2631, 7
  %v2633 = vsub.s32 0, %v2632
  %v2634 = vrot.slane %v2629, %v2633
  %v2652 = vunpack.c.l.b16 %v2612
  %v2653 = vunpack.c.l.b16 %v2613
  %v2654 = vunpack.c.l.b16 %v2614
  %v2655 = vunpack.c.l.b16 %v2615
  %v2656 = vunpack.c.l.b16 %v2616
  %v2657 = vunpack.c.l.b16 %v2617
  %v2658 = vunpack.c.l.b16 %v2618
  %v2659 = vunpack.c.l.b16 %v2619
  %v2660 = vunpack.c.l.b16 %v2620
  %v2661 = vunpack.c.l.b16 %v2621
  %v2662 = vunpack.c.l.b16 %v2622
  %v2663 = vunpack.c.l.b16 %v2623
  %v2664 = vunpack.c.l.b16 %v2624
  %v2665 = vunpack.c.l.b16 %v2625
  %v2666 = vunpack.c.l.b16 %v2626
  %v2667 = vunpack.c.l.b16 %v2627
  %v2668 = vpack.c.b16 %v2653, %v2652
  %v2669 = vpack.c.b16 %v2655, %v2654
  %v2670 = vpack.c.b16 %v2657, %v2656
  %v2671 = vpack.c.b16 %v2659, %v2658
  %v2672 = vpack.c.b16 %v2661, %v2660
  %v2673 = vpack.c.b16 %v2663, %v2662
  %v2674 = vpack.c.b16 %v2665, %v2664
  %v2675 = vpack.c.b16 %v2667, %v2666
  %2684 = vmatprep.subr.bf16.mxu0 0
  %2685 = vmatpush1.bf16.msra.mxu0 %v2668
  %2686 = vmatprep.subr.bf16.mxu0 0
  %2687 = vmatpush1.bf16.msra.mxu0 %v2669
  %2688 = vmatprep.subr.bf16.mxu0 0
  %2689 = vmatpush1.bf16.msra.mxu0 %v2670
  %2690 = vmatprep.subr.bf16.mxu0 0
  %2691 = vmatpush1.bf16.msra.mxu0 %v2671
  %2692 = vmatprep.subr.bf16.mxu0 0
  %2693 = vmatpush1.bf16.msra.mxu0 %v2672
  %2694 = vmatprep.subr.bf16.mxu0 0
  %2695 = vmatpush1.bf16.msra.mxu0 %v2673
  %2696 = vmatprep.subr.bf16.mxu0 0
  %2697 = vmatpush1.bf16.msra.mxu0 %v2674
  %2698 = vmatprep.subr.bf16.mxu0 0
  %2699 = vmatpush1.bf16.msra.mxu0 %v2675
  %2700 = vmatprep.subr.bf16.mxu0 0
  %2701 = vmatpush1.bf16.msra.mxu0 0
  %2702 = vmatprep.subr.bf16.mxu0 0
  %2703 = vmatpush1.bf16.msra.mxu0 0
  %2704 = vmatprep.subr.bf16.mxu0 0
  %2705 = vmatpush1.bf16.msra.mxu0 0
  %2706 = vmatprep.subr.bf16.mxu0 0
  %2707 = vmatpush1.bf16.msra.mxu0 0
  %2708 = vmatprep.subr.bf16.mxu0 0
  %2709 = vmatpush1.bf16.msra.mxu0 0
  %2710 = vmatprep.subr.bf16.mxu0 0
  %2711 = vmatpush1.bf16.msra.mxu0 0
  %2712 = vmatprep.subr.bf16.mxu0 0
  %2713 = vmatpush1.bf16.msra.mxu0 0
  %2714 = vmatprep.subr.bf16.mxu0 0
  %2715 = vmatpush1.bf16.msra.mxu0 0
  %2716 = vmatprep.mubr.bf16.mxu0 0
  %2717 = vmatmul.mubr.bf16.gmra.mrb[0].mxu0 %v2607
  %v2718 = vpop.f32.mrb[0].mxu0
  %v2719 = vadd.f32 %v2634, %v2718
  %v2720 = vpop.f32.mrb[0].mxu0
  %v2721 = vpop.f32.mrb[0].mxu0
  %v2722 = vadd.f32 %v2634, %v2721
  %v2723 = vpop.f32.mrb[0].mxu0
  %2724 = vmatprep.mubr.bf16.mxu0 0
  %2725 = vmatmul.mubr.bf16.gmra.mrb[0].mxu0 %v2608
  %v2726 = vpop.f32.mrb[0].mxu0
  %v2727 = vadd.f32 %v2634, %v2726
  %v2728 = vpop.f32.mrb[0].mxu0
  %v2729 = vpop.f32.mrb[0].mxu0
  %v2730 = vadd.f32 %v2634, %v2729
  %v2731 = vpop.f32.mrb[0].mxu0
  %2732 = vmatprep.mubr.bf16.mxu0 0
  %2733 = vmatmul.mubr.bf16.gmra.mrb[0].mxu0 %v2609
  %v2734 = vpop.f32.mrb[0].mxu0
  %v2735 = vadd.f32 %v2634, %v2734
  %v2736 = vpop.f32.mrb[0].mxu0
  %v2737 = vpop.f32.mrb[0].mxu0
  %v2738 = vadd.f32 %v2634, %v2737
  %v2739 = vpop.f32.mrb[0].mxu0
  %2740 = vmatprep.mubr.bf16.mxu0 0
  %2741 = vmatmul.mubr.bf16.gmra.mrb[0].mxu0 %v2610
  %v2742 = vpop.f32.mrb[0].mxu0
  %v2743 = vadd.f32 %v2634, %v2742
  %v2744 = vpop.f32.mrb[0].mxu0
  %v2745 = vpop.f32.mrb[0].mxu0
  %v2746 = vadd.f32 %v2634, %v2745
  %v2747 = vpop.f32.mrb[0].mxu0
  %2748 = vdwg.mxu0
  %v2749 = vmax.f32 %v2719, 0.0
  %v2750 = vmax.f32 %v2722, 0.0
  %v2751 = vmax.f32 %v2727, 0.0
  %v2752 = vmax.f32 %v2730, 0.0
  %v2753 = vmax.f32 %v2735, 0.0
  %v2754 = vmax.f32 %v2738, 0.0
  %v2755 = vmax.f32 %v2743, 0.0
  %v2756 = vmax.f32 %v2746, 0.0
  %v2757 = vpack.c.bf16 %v2750, %v2749
  %v2758 = vpack.c.bf16 %v2752, %v2751
  %v2759 = vpack.c.bf16 %v2754, %v2753
  %v2760 = vpack.c.bf16 %v2756, %v2755
  %s2761 = scalar_lea.vmem %s5, 1024
  %v2762 = vld [vmem:[%s2761] sm:$0xf]
  %v2763 = vld [vmem:[%s2761 + $0x4] sm:$0xf]
  %v2764 = vld [vmem:[%s2761 + $0x8] sm:$0xf]
  %v2765 = vld [vmem:[%s2761 + $0xc] sm:$0xf]
  %v2766 = vld [vmem:[%s2761 + $0x10] sm:$0xf]
  %v2767 = vld [vmem:[%s2761 + $0x14] sm:$0xf]
  %v2768 = vld [vmem:[%s2761 + $0x18] sm:$0xf]
  %v2769 = vld [vmem:[%s2761 + $0x1c] sm:$0xf]
  %v2770 = vld [vmem:[%s2761 + $0x20] sm:$0xf]
  %v2771 = vld [vmem:[%s2761 + $0x24] sm:$0xf]
  %v2772 = vld [vmem:[%s2761 + $0x28] sm:$0xf]
  %v2773 = vld [vmem:[%s2761 + $0x2c] sm:$0xf]
  %v2774 = vld [vmem:[%s2761 + $0x30] sm:$0xf]
  %v2775 = vld [vmem:[%s2761 + $0x34] sm:$0xf]
  %v2776 = vld [vmem:[%s2761 + $0x38] sm:$0xf]
  %v2777 = vld [vmem:[%s2761 + $0x3c] sm:$0xf]
  %s2778 = scalar_lea.vmem %s6, 16
  %v2779 = vld [vmem:[%s2778] sm:$0x1]
  %v2781 = vlaneseq
  %v2782 = vshrl.u32 %v2781, 7
  %v2783 = vsub.s32 0, %v2782
  %v2784 = vrot.slane %v2779, %v2783
  %v2802 = vunpack.c.l.b16 %v2762
  %v2803 = vunpack.c.l.b16 %v2763
  %v2804 = vunpack.c.l.b16 %v2764
  %v2805 = vunpack.c.l.b16 %v2765
  %v2806 = vunpack.c.l.b16 %v2766
  %v2807 = vunpack.c.l.b16 %v2767
  %v2808 = vunpack.c.l.b16 %v2768
  %v2809 = vunpack.c.l.b16 %v2769
  %v2810 = vunpack.c.l.b16 %v2770
  %v2811 = vunpack.c.l.b16 %v2771
  %v2812 = vunpack.c.l.b16 %v2772
  %v2813 = vunpack.c.l.b16 %v2773
  %v2814 = vunpack.c.l.b16 %v2774
  %v2815 = vunpack.c.l.b16 %v2775
  %v2816 = vunpack.c.l.b16 %v2776
  %v2817 = vunpack.c.l.b16 %v2777
  %v2818 = vpack.c.b16 %v2803, %v2802
  %v2819 = vpack.c.b16 %v2805, %v2804
  %v2820 = vpack.c.b16 %v2807, %v2806
  %v2821 = vpack.c.b16 %v2809, %v2808
  %v2822 = vpack.c.b16 %v2811, %v2810
  %v2823 = vpack.c.b16 %v2813, %v2812
  %v2824 = vpack.c.b16 %v2815, %v2814
  %v2825 = vpack.c.b16 %v2817, %v2816
  %2834 = vmatprep.subr.bf16.mxu0 0
  %2835 = vmatpush1.bf16.msra.mxu0 %v2818
  %2836 = vmatprep.subr.bf16.mxu0 0
  %2837 = vmatpush1.bf16.msra.mxu0 %v2819
  %2838 = vmatprep.subr.bf16.mxu0 0
  %2839 = vmatpush1.bf16.msra.mxu0 %v2820
  %2840 = vmatprep.subr.bf16.mxu0 0
  %2841 = vmatpush1.bf16.msra.mxu0 %v2821
  %2842 = vmatprep.subr.bf16.mxu0 0
  %2843 = vmatpush1.bf16.msra.mxu0 %v2822
  %2844 = vmatprep.subr.bf16.mxu0 0
  %2845 = vmatpush1.bf16.msra.mxu0 %v2823
  %2846 = vmatprep.subr.bf16.mxu0 0
  %2847 = vmatpush1.bf16.msra.mxu0 %v2824
  %2848 = vmatprep.subr.bf16.mxu0 0
  %2849 = vmatpush1.bf16.msra.mxu0 %v2825
  %2850 = vmatprep.subr.bf16.mxu0 0
  %2851 = vmatpush1.bf16.msra.mxu0 0
  %2852 = vmatprep.subr.bf16.mxu0 0
  %2853 = vmatpush1.bf16.msra.mxu0 0
  %2854 = vmatprep.subr.bf16.mxu0 0
  %2855 = vmatpush1.bf16.msra.mxu0 0
  %2856 = vmatprep.subr.bf16.mxu0 0
  %2857 = vmatpush1.bf16.msra.mxu0 0
  %2858 = vmatprep.subr.bf16.mxu0 0
  %2859 = vmatpush1.bf16.msra.mxu0 0
  %2860 = vmatprep.subr.bf16.mxu0 0
  %2861 = vmatpush1.bf16.msra.mxu0 0
  %2862 = vmatprep.subr.bf16.mxu0 0
  %2863 = vmatpush1.bf16.msra.mxu0 0
  %2864 = vmatprep.subr.bf16.mxu0 0
  %2865 = vmatpush1.bf16.msra.mxu0 0
  %2866 = vmatprep.mubr.bf16.mxu0 0
  %2867 = vmatmul.mubr.bf16.gmra.mrb[0].mxu0 %v2757
  %v2868 = vpop.f32.mrb[0].mxu0
  %v2869 = vadd.f32 %v2784, %v2868
  %v2870 = vpop.f32.mrb[0].mxu0
  %v2871 = vpop.f32.mrb[0].mxu0
  %v2872 = vadd.f32 %v2784, %v2871
  %v2873 = vpop.f32.mrb[0].mxu0
  %2874 = vmatprep.mubr.bf16.mxu0 0
  %2875 = vmatmul.mubr.bf16.gmra.mrb[0].mxu0 %v2758
  %v2876 = vpop.f32.mrb[0].mxu0
  %v2877 = vadd.f32 %v2784, %v2876
  %v2878 = vpop.f32.mrb[0].mxu0
  %v2879 = vpop.f32.mrb[0].mxu0
  %v2880 = vadd.f32 %v2784, %v2879
  %v2881 = vpop.f32.mrb[0].mxu0
  %2882 = vmatprep.mubr.bf16.mxu0 0
  %2883 = vmatmul.mubr.bf16.gmra.mrb[0].mxu0 %v2759
  %v2884 = vpop.f32.mrb[0].mxu0
  %v2885 = vadd.f32 %v2784, %v2884
  %v2886 = vpop.f32.mrb[0].mxu0
  %v2887 = vpop.f32.mrb[0].mxu0
  %v2888 = vadd.f32 %v2784, %v2887
  %v2889 = vpop.f32.mrb[0].mxu0
  %2890 = vmatprep.mubr.bf16.mxu0 0
  %2891 = vmatmul.mubr.bf16.gmra.mrb[0].mxu0 %v2760
  %v2892 = vpop.f32.mrb[0].mxu0
  %v2893 = vadd.f32 %v2784, %v2892
  %v2894 = vpop.f32.mrb[0].mxu0
  %v2895 = vpop.f32.mrb[0].mxu0
  %v2896 = vadd.f32 %v2784, %v2895
  %v2897 = vpop.f32.mrb[0].mxu0
  %2898 = vdwg.mxu0
  %v2899 = vmax.f32 %v2869, 0.0
  %v2900 = vmax.f32 %v2872, 0.0
  %v2901 = vmax.f32 %v2877, 0.0
  %v2902 = vmax.f32 %v2880, 0.0
  %v2903 = vmax.f32 %v2885, 0.0
  %v2904 = vmax.f32 %v2888, 0.0
  %v2905 = vmax.f32 %v2893, 0.0
  %v2906 = vmax.f32 %v2896, 0.0
  %v2907 = vpack.c.bf16 %v2900, %v2899
  %v2908 = vpack.c.bf16 %v2902, %v2901
  %v2909 = vpack.c.bf16 %v2904, %v2903
  %v2910 = vpack.c.bf16 %v2906, %v2905
  %s2911 = scalar_lea.vmem %s5, 1088
  %v2912 = vld [vmem:[%s2911] sm:$0xf]
  %v2913 = vld [vmem:[%s2911 + $0x4] sm:$0xf]
  %v2914 = vld [vmem:[%s2911 + $0x8] sm:$0xf]
  %v2915 = vld [vmem:[%s2911 + $0xc] sm:$0xf]
  %v2916 = vld [vmem:[%s2911 + $0x10] sm:$0xf]
  %v2917 = vld [vmem:[%s2911 + $0x14] sm:$0xf]
  %v2918 = vld [vmem:[%s2911 + $0x18] sm:$0xf]
  %v2919 = vld [vmem:[%s2911 + $0x1c] sm:$0xf]
  %v2920 = vld [vmem:[%s2911 + $0x20] sm:$0xf]
  %v2921 = vld [vmem:[%s2911 + $0x24] sm:$0xf]
  %v2922 = vld [vmem:[%s2911 + $0x28] sm:$0xf]
  %v2923 = vld [vmem:[%s2911 + $0x2c] sm:$0xf]
  %v2924 = vld [vmem:[%s2911 + $0x30] sm:$0xf]
  %v2925 = vld [vmem:[%s2911 + $0x34] sm:$0xf]
  %v2926 = vld [vmem:[%s2911 + $0x38] sm:$0xf]
  %v2927 = vld [vmem:[%s2911 + $0x3c] sm:$0xf]
  %s2928 = scalar_lea.vmem %s6, 17
  %v2929 = vld [vmem:[%s2928] sm:$0x1]
  %v2931 = vlaneseq
  %v2932 = vshrl.u32 %v2931, 7
  %v2933 = vsub.s32 0, %v2932
  %v2934 = vrot.slane %v2929, %v2933
  %v2952 = vunpack.c.l.b16 %v2912
  %v2953 = vunpack.c.l.b16 %v2913
  %v2954 = vunpack.c.l.b16 %v2914
  %v2955 = vunpack.c.l.b16 %v2915
  %v2956 = vunpack.c.l.b16 %v2916
  %v2957 = vunpack.c.l.b16 %v2917
  %v2958 = vunpack.c.l.b16 %v2918
  %v2959 = vunpack.c.l.b16 %v2919
  %v2960 = vunpack.c.l.b16 %v2920
  %v2961 = vunpack.c.l.b16 %v2921
  %v2962 = vunpack.c.l.b16 %v2922
  %v2963 = vunpack.c.l.b16 %v2923
  %v2964 = vunpack.c.l.b16 %v2924
  %v2965 = vunpack.c.l.b16 %v2925
  %v2966 = vunpack.c.l.b16 %v2926
  %v2967 = vunpack.c.l.b16 %v2927
  %v2968 = vpack.c.b16 %v2953, %v2952
  %v2969 = vpack.c.b16 %v2955, %v2954
  %v2970 = vpack.c.b16 %v2957, %v2956
  %v2971 = vpack.c.b16 %v2959, %v2958
  %v2972 = vpack.c.b16 %v2961, %v2960
  %v2973 = vpack.c.b16 %v2963, %v2962
  %v2974 = vpack.c.b16 %v2965, %v2964
  %v2975 = vpack.c.b16 %v2967, %v2966
  %2984 = vmatprep.subr.bf16.mxu0 0
  %2985 = vmatpush1.bf16.msra.mxu0 %v2968
  %2986 = vmatprep.subr.bf16.mxu0 0
  %2987 = vmatpush1.bf16.msra.mxu0 %v2969
  %2988 = vmatprep.subr.bf16.mxu0 0
  %2989 = vmatpush1.bf16.msra.mxu0 %v2970
  %2990 = vmatprep.subr.bf16.mxu0 0
  %2991 = vmatpush1.bf16.msra.mxu0 %v2971
  %2992 = vmatprep.subr.bf16.mxu0 0
  %2993 = vmatpush1.bf16.msra.mxu0 %v2972
  %2994 = vmatprep.subr.bf16.mxu0 0
  %2995 = vmatpush1.bf16.msra.mxu0 %v2973
  %2996 = vmatprep.subr.bf16.mxu0 0
  %2997 = vmatpush1.bf16.msra.mxu0 %v2974
  %2998 = vmatprep.subr.bf16.mxu0 0
  %2999 = vmatpush1.bf16.msra.mxu0 %v2975
  %3000 = vmatprep.subr.bf16.mxu0 0
  %3001 = vmatpush1.bf16.msra.mxu0 0
  %3002 = vmatprep.subr.bf16.mxu0 0
  %3003 = vmatpush1.bf16.msra.mxu0 0
  %3004 = vmatprep.subr.bf16.mxu0 0
  %3005 = vmatpush1.bf16.msra.mxu0 0
  %3006 = vmatprep.subr.bf16.mxu0 0
  %3007 = vmatpush1.bf16.msra.mxu0 0
  %3008 = vmatprep.subr.bf16.mxu0 0
  %3009 = vmatpush1.bf16.msra.mxu0 0
  %3010 = vmatprep.subr.bf16.mxu0 0
  %3011 = vmatpush1.bf16.msra.mxu0 0
  %3012 = vmatprep.subr.bf16.mxu0 0
  %3013 = vmatpush1.bf16.msra.mxu0 0
  %3014 = vmatprep.subr.bf16.mxu0 0
  %3015 = vmatpush1.bf16.msra.mxu0 0
  %3016 = vmatprep.mubr.bf16.mxu0 0
  %3017 = vmatmul.mubr.bf16.gmra.mrb[0].mxu0 %v2907
  %v3018 = vpop.f32.mrb[0].mxu0
  %v3019 = vadd.f32 %v2934, %v3018
  %v3020 = vpop.f32.mrb[0].mxu0
  %v3021 = vpop.f32.mrb[0].mxu0
  %v3022 = vadd.f32 %v2934, %v3021
  %v3023 = vpop.f32.mrb[0].mxu0
  %3024 = vmatprep.mubr.bf16.mxu0 0
  %3025 = vmatmul.mubr.bf16.gmra.mrb[0].mxu0 %v2908
  %v3026 = vpop.f32.mrb[0].mxu0
  %v3027 = vadd.f32 %v2934, %v3026
  %v3028 = vpop.f32.mrb[0].mxu0
  %v3029 = vpop.f32.mrb[0].mxu0
  %v3030 = vadd.f32 %v2934, %v3029
  %v3031 = vpop.f32.mrb[0].mxu0
  %3032 = vmatprep.mubr.bf16.mxu0 0
  %3033 = vmatmul.mubr.bf16.gmra.mrb[0].mxu0 %v2909
  %v3034 = vpop.f32.mrb[0].mxu0
  %v3035 = vadd.f32 %v2934, %v3034
  %v3036 = vpop.f32.mrb[0].mxu0
  %v3037 = vpop.f32.mrb[0].mxu0
  %v3038 = vadd.f32 %v2934, %v3037
  %v3039 = vpop.f32.mrb[0].mxu0
  %3040 = vmatprep.mubr.bf16.mxu0 0
  %3041 = vmatmul.mubr.bf16.gmra.mrb[0].mxu0 %v2910
  %v3042 = vpop.f32.mrb[0].mxu0
  %v3043 = vadd.f32 %v2934, %v3042
  %v3044 = vpop.f32.mrb[0].mxu0
  %v3045 = vpop.f32.mrb[0].mxu0
  %v3046 = vadd.f32 %v2934, %v3045
  %v3047 = vpop.f32.mrb[0].mxu0
  %3048 = vdwg.mxu0
  %v3049 = vmax.f32 %v3019, 0.0
  %v3050 = vmax.f32 %v3022, 0.0
  %v3051 = vmax.f32 %v3027, 0.0
  %v3052 = vmax.f32 %v3030, 0.0
  %v3053 = vmax.f32 %v3035, 0.0
  %v3054 = vmax.f32 %v3038, 0.0
  %v3055 = vmax.f32 %v3043, 0.0
  %v3056 = vmax.f32 %v3046, 0.0
  %v3057 = vpack.c.bf16 %v3050, %v3049
  %v3058 = vpack.c.bf16 %v3052, %v3051
  %v3059 = vpack.c.bf16 %v3054, %v3053
  %v3060 = vpack.c.bf16 %v3056, %v3055
  %s3061 = scalar_lea.vmem %s5, 1152
  %v3062 = vld [vmem:[%s3061] sm:$0xf]
  %v3063 = vld [vmem:[%s3061 + $0x4] sm:$0xf]
  %v3064 = vld [vmem:[%s3061 + $0x8] sm:$0xf]
  %v3065 = vld [vmem:[%s3061 + $0xc] sm:$0xf]
  %v3066 = vld [vmem:[%s3061 + $0x10] sm:$0xf]
  %v3067 = vld [vmem:[%s3061 + $0x14] sm:$0xf]
  %v3068 = vld [vmem:[%s3061 + $0x18] sm:$0xf]
  %v3069 = vld [vmem:[%s3061 + $0x1c] sm:$0xf]
  %v3070 = vld [vmem:[%s3061 + $0x20] sm:$0xf]
  %v3071 = vld [vmem:[%s3061 + $0x24] sm:$0xf]
  %v3072 = vld [vmem:[%s3061 + $0x28] sm:$0xf]
  %v3073 = vld [vmem:[%s3061 + $0x2c] sm:$0xf]
  %v3074 = vld [vmem:[%s3061 + $0x30] sm:$0xf]
  %v3075 = vld [vmem:[%s3061 + $0x34] sm:$0xf]
  %v3076 = vld [vmem:[%s3061 + $0x38] sm:$0xf]
  %v3077 = vld [vmem:[%s3061 + $0x3c] sm:$0xf]
  %s3078 = scalar_lea.vmem %s6, 18
  %v3079 = vld [vmem:[%s3078] sm:$0x1]
  %v3081 = vlaneseq
  %v3082 = vshrl.u32 %v3081, 7
  %v3083 = vsub.s32 0, %v3082
  %v3084 = vrot.slane %v3079, %v3083
  %v3102 = vunpack.c.l.b16 %v3062
  %v3103 = vunpack.c.l.b16 %v3063
  %v3104 = vunpack.c.l.b16 %v3064
  %v3105 = vunpack.c.l.b16 %v3065
  %v3106 = vunpack.c.l.b16 %v3066
  %v3107 = vunpack.c.l.b16 %v3067
  %v3108 = vunpack.c.l.b16 %v3068
  %v3109 = vunpack.c.l.b16 %v3069
  %v3110 = vunpack.c.l.b16 %v3070
  %v3111 = vunpack.c.l.b16 %v3071
  %v3112 = vunpack.c.l.b16 %v3072
  %v3113 = vunpack.c.l.b16 %v3073
  %v3114 = vunpack.c.l.b16 %v3074
  %v3115 = vunpack.c.l.b16 %v3075
  %v3116 = vunpack.c.l.b16 %v3076
  %v3117 = vunpack.c.l.b16 %v3077
  %v3118 = vpack.c.b16 %v3103, %v3102
  %v3119 = vpack.c.b16 %v3105, %v3104
  %v3120 = vpack.c.b16 %v3107, %v3106
  %v3121 = vpack.c.b16 %v3109, %v3108
  %v3122 = vpack.c.b16 %v3111, %v3110
  %v3123 = vpack.c.b16 %v3113, %v3112
  %v3124 = vpack.c.b16 %v3115, %v3114
  %v3125 = vpack.c.b16 %v3117, %v3116
  %3134 = vmatprep.subr.bf16.mxu0 0
  %3135 = vmatpush1.bf16.msra.mxu0 %v3118
  %3136 = vmatprep.subr.bf16.mxu0 0
  %3137 = vmatpush1.bf16.msra.mxu0 %v3119
  %3138 = vmatprep.subr.bf16.mxu0 0
  %3139 = vmatpush1.bf16.msra.mxu0 %v3120
  %3140 = vmatprep.subr.bf16.mxu0 0
  %3141 = vmatpush1.bf16.msra.mxu0 %v3121
  %3142 = vmatprep.subr.bf16.mxu0 0
  %3143 = vmatpush1.bf16.msra.mxu0 %v3122
  %3144 = vmatprep.subr.bf16.mxu0 0
  %3145 = vmatpush1.bf16.msra.mxu0 %v3123
  %3146 = vmatprep.subr.bf16.mxu0 0
  %3147 = vmatpush1.bf16.msra.mxu0 %v3124
  %3148 = vmatprep.subr.bf16.mxu0 0
  %3149 = vmatpush1.bf16.msra.mxu0 %v3125
  %3150 = vmatprep.subr.bf16.mxu0 0
  %3151 = vmatpush1.bf16.msra.mxu0 0
  %3152 = vmatprep.subr.bf16.mxu0 0
  %3153 = vmatpush1.bf16.msra.mxu0 0
  %3154 = vmatprep.subr.bf16.mxu0 0
  %3155 = vmatpush1.bf16.msra.mxu0 0
  %3156 = vmatprep.subr.bf16.mxu0 0
  %3157 = vmatpush1.bf16.msra.mxu0 0
  %3158 = vmatprep.subr.bf16.mxu0 0
  %3159 = vmatpush1.bf16.msra.mxu0 0
  %3160 = vmatprep.subr.bf16.mxu0 0
  %3161 = vmatpush1.bf16.msra.mxu0 0
  %3162 = vmatprep.subr.bf16.mxu0 0
  %3163 = vmatpush1.bf16.msra.mxu0 0
  %3164 = vmatprep.subr.bf16.mxu0 0
  %3165 = vmatpush1.bf16.msra.mxu0 0
  %3166 = vmatprep.mubr.bf16.mxu0 0
  %3167 = vmatmul.mubr.bf16.gmra.mrb[0].mxu0 %v3057
  %v3168 = vpop.f32.mrb[0].mxu0
  %v3169 = vadd.f32 %v3084, %v3168
  %v3170 = vpop.f32.mrb[0].mxu0
  %v3171 = vpop.f32.mrb[0].mxu0
  %v3172 = vadd.f32 %v3084, %v3171
  %v3173 = vpop.f32.mrb[0].mxu0
  %3174 = vmatprep.mubr.bf16.mxu0 0
  %3175 = vmatmul.mubr.bf16.gmra.mrb[0].mxu0 %v3058
  %v3176 = vpop.f32.mrb[0].mxu0
  %v3177 = vadd.f32 %v3084, %v3176
  %v3178 = vpop.f32.mrb[0].mxu0
  %v3179 = vpop.f32.mrb[0].mxu0
  %v3180 = vadd.f32 %v3084, %v3179
  %v3181 = vpop.f32.mrb[0].mxu0
  %3182 = vmatprep.mubr.bf16.mxu0 0
  %3183 = vmatmul.mubr.bf16.gmra.mrb[0].mxu0 %v3059
  %v3184 = vpop.f32.mrb[0].mxu0
  %v3185 = vadd.f32 %v3084, %v3184
  %v3186 = vpop.f32.mrb[0].mxu0
  %v3187 = vpop.f32.mrb[0].mxu0
  %v3188 = vadd.f32 %v3084, %v3187
  %v3189 = vpop.f32.mrb[0].mxu0
  %3190 = vmatprep.mubr.bf16.mxu0 0
  %3191 = vmatmul.mubr.bf16.gmra.mrb[0].mxu0 %v3060
  %v3192 = vpop.f32.mrb[0].mxu0
  %v3193 = vadd.f32 %v3084, %v3192
  %v3194 = vpop.f32.mrb[0].mxu0
  %v3195 = vpop.f32.mrb[0].mxu0
  %v3196 = vadd.f32 %v3084, %v3195
  %v3197 = vpop.f32.mrb[0].mxu0
  %3198 = vdwg.mxu0
  %v3199 = vmax.f32 %v3169, 0.0
  %v3200 = vmax.f32 %v3172, 0.0
  %v3201 = vmax.f32 %v3177, 0.0
  %v3202 = vmax.f32 %v3180, 0.0
  %v3203 = vmax.f32 %v3185, 0.0
  %v3204 = vmax.f32 %v3188, 0.0
  %v3205 = vmax.f32 %v3193, 0.0
  %v3206 = vmax.f32 %v3196, 0.0
  %v3207 = vpack.c.bf16 %v3200, %v3199
  %v3208 = vpack.c.bf16 %v3202, %v3201
  %v3209 = vpack.c.bf16 %v3204, %v3203
  %v3210 = vpack.c.bf16 %v3206, %v3205
  %s3211 = scalar_lea.vmem %s5, 1216
  %v3212 = vld [vmem:[%s3211] sm:$0xf]
  %v3213 = vld [vmem:[%s3211 + $0x4] sm:$0xf]
  %v3214 = vld [vmem:[%s3211 + $0x8] sm:$0xf]
  %v3215 = vld [vmem:[%s3211 + $0xc] sm:$0xf]
  %v3216 = vld [vmem:[%s3211 + $0x10] sm:$0xf]
  %v3217 = vld [vmem:[%s3211 + $0x14] sm:$0xf]
  %v3218 = vld [vmem:[%s3211 + $0x18] sm:$0xf]
  %v3219 = vld [vmem:[%s3211 + $0x1c] sm:$0xf]
  %v3220 = vld [vmem:[%s3211 + $0x20] sm:$0xf]
  %v3221 = vld [vmem:[%s3211 + $0x24] sm:$0xf]
  %v3222 = vld [vmem:[%s3211 + $0x28] sm:$0xf]
  %v3223 = vld [vmem:[%s3211 + $0x2c] sm:$0xf]
  %v3224 = vld [vmem:[%s3211 + $0x30] sm:$0xf]
  %v3225 = vld [vmem:[%s3211 + $0x34] sm:$0xf]
  %v3226 = vld [vmem:[%s3211 + $0x38] sm:$0xf]
  %v3227 = vld [vmem:[%s3211 + $0x3c] sm:$0xf]
  %s3228 = scalar_lea.vmem %s6, 19
  %v3229 = vld [vmem:[%s3228] sm:$0x1]
  %v3231 = vlaneseq
  %v3232 = vshrl.u32 %v3231, 7
  %v3233 = vsub.s32 0, %v3232
  %v3234 = vrot.slane %v3229, %v3233
  %v3252 = vunpack.c.l.b16 %v3212
  %v3253 = vunpack.c.l.b16 %v3213
  %v3254 = vunpack.c.l.b16 %v3214
  %v3255 = vunpack.c.l.b16 %v3215
  %v3256 = vunpack.c.l.b16 %v3216
  %v3257 = vunpack.c.l.b16 %v3217
  %v3258 = vunpack.c.l.b16 %v3218
  %v3259 = vunpack.c.l.b16 %v3219
  %v3260 = vunpack.c.l.b16 %v3220
  %v3261 = vunpack.c.l.b16 %v3221
  %v3262 = vunpack.c.l.b16 %v3222
  %v3263 = vunpack.c.l.b16 %v3223
  %v3264 = vunpack.c.l.b16 %v3224
  %v3265 = vunpack.c.l.b16 %v3225
  %v3266 = vunpack.c.l.b16 %v3226
  %v3267 = vunpack.c.l.b16 %v3227
  %v3268 = vpack.c.b16 %v3253, %v3252
  %v3269 = vpack.c.b16 %v3255, %v3254
  %v3270 = vpack.c.b16 %v3257, %v3256
  %v3271 = vpack.c.b16 %v3259, %v3258
  %v3272 = vpack.c.b16 %v3261, %v3260
  %v3273 = vpack.c.b16 %v3263, %v3262
  %v3274 = vpack.c.b16 %v3265, %v3264
  %v3275 = vpack.c.b16 %v3267, %v3266
  %3284 = vmatprep.subr.bf16.mxu0 0
  %3285 = vmatpush1.bf16.msra.mxu0 %v3268
  %3286 = vmatprep.subr.bf16.mxu0 0
  %3287 = vmatpush1.bf16.msra.mxu0 %v3269
  %3288 = vmatprep.subr.bf16.mxu0 0
  %3289 = vmatpush1.bf16.msra.mxu0 %v3270
  %3290 = vmatprep.subr.bf16.mxu0 0
  %3291 = vmatpush1.bf16.msra.mxu0 %v3271
  %3292 = vmatprep.subr.bf16.mxu0 0
  %3293 = vmatpush1.bf16.msra.mxu0 %v3272
  %3294 = vmatprep.subr.bf16.mxu0 0
  %3295 = vmatpush1.bf16.msra.mxu0 %v3273
  %3296 = vmatprep.subr.bf16.mxu0 0
  %3297 = vmatpush1.bf16.msra.mxu0 %v3274
  %3298 = vmatprep.subr.bf16.mxu0 0
  %3299 = vmatpush1.bf16.msra.mxu0 %v3275
  %3300 = vmatprep.subr.bf16.mxu0 0
  %3301 = vmatpush1.bf16.msra.mxu0 0
  %3302 = vmatprep.subr.bf16.mxu0 0
  %3303 = vmatpush1.bf16.msra.mxu0 0
  %3304 = vmatprep.subr.bf16.mxu0 0
  %3305 = vmatpush1.bf16.msra.mxu0 0
  %3306 = vmatprep.subr.bf16.mxu0 0
  %3307 = vmatpush1.bf16.msra.mxu0 0
  %3308 = vmatprep.subr.bf16.mxu0 0
  %3309 = vmatpush1.bf16.msra.mxu0 0
  %3310 = vmatprep.subr.bf16.mxu0 0
  %3311 = vmatpush1.bf16.msra.mxu0 0
  %3312 = vmatprep.subr.bf16.mxu0 0
  %3313 = vmatpush1.bf16.msra.mxu0 0
  %3314 = vmatprep.subr.bf16.mxu0 0
  %3315 = vmatpush1.bf16.msra.mxu0 0
  %3316 = vmatprep.mubr.bf16.mxu0 0
  %3317 = vmatmul.mubr.bf16.gmra.mrb[0].mxu0 %v3207
  %v3318 = vpop.f32.mrb[0].mxu0
  %v3319 = vadd.f32 %v3234, %v3318
  %v3320 = vpop.f32.mrb[0].mxu0
  %v3321 = vpop.f32.mrb[0].mxu0
  %v3322 = vadd.f32 %v3234, %v3321
  %v3323 = vpop.f32.mrb[0].mxu0
  %3324 = vmatprep.mubr.bf16.mxu0 0
  %3325 = vmatmul.mubr.bf16.gmra.mrb[0].mxu0 %v3208
  %v3326 = vpop.f32.mrb[0].mxu0
  %v3327 = vadd.f32 %v3234, %v3326
  %v3328 = vpop.f32.mrb[0].mxu0
  %v3329 = vpop.f32.mrb[0].mxu0
  %v3330 = vadd.f32 %v3234, %v3329
  %v3331 = vpop.f32.mrb[0].mxu0
  %3332 = vmatprep.mubr.bf16.mxu0 0
  %3333 = vmatmul.mubr.bf16.gmra.mrb[0].mxu0 %v3209
  %v3334 = vpop.f32.mrb[0].mxu0
  %v3335 = vadd.f32 %v3234, %v3334
  %v3336 = vpop.f32.mrb[0].mxu0
  %v3337 = vpop.f32.mrb[0].mxu0
  %v3338 = vadd.f32 %v3234, %v3337
  %v3339 = vpop.f32.mrb[0].mxu0
  %3340 = vmatprep.mubr.bf16.mxu0 0
  %3341 = vmatmul.mubr.bf16.gmra.mrb[0].mxu0 %v3210
  %v3342 = vpop.f32.mrb[0].mxu0
  %v3343 = vadd.f32 %v3234, %v3342
  %v3344 = vpop.f32.mrb[0].mxu0
  %v3345 = vpop.f32.mrb[0].mxu0
  %v3346 = vadd.f32 %v3234, %v3345
  %v3347 = vpop.f32.mrb[0].mxu0
  %3348 = vdwg.mxu0
  %v3349 = vmax.f32 %v3319, 0.0
  %v3350 = vmax.f32 %v3322, 0.0
  %v3351 = vmax.f32 %v3327, 0.0
  %v3352 = vmax.f32 %v3330, 0.0
  %v3353 = vmax.f32 %v3335, 0.0
  %v3354 = vmax.f32 %v3338, 0.0
  %v3355 = vmax.f32 %v3343, 0.0
  %v3356 = vmax.f32 %v3346, 0.0
  %v3357 = vpack.c.bf16 %v3350, %v3349
  %v3358 = vpack.c.bf16 %v3352, %v3351
  %v3359 = vpack.c.bf16 %v3354, %v3353
  %v3360 = vpack.c.bf16 %v3356, %v3355
  %v3361 = vld [vmem:[%s7] sm:$0xf]
  %v3362 = vld [vmem:[%s7 + $0x4] sm:$0xf]
  %v3363 = vld [vmem:[%s7 + $0x8] sm:$0xf]
  %v3364 = vld [vmem:[%s7 + $0xc] sm:$0xf]
  %v3365 = vld [vmem:[%s7 + $0x10] sm:$0xf]
  %v3366 = vld [vmem:[%s7 + $0x14] sm:$0xf]
  %v3367 = vld [vmem:[%s7 + $0x18] sm:$0xf]
  %v3368 = vld [vmem:[%s7 + $0x1c] sm:$0xf]
  %v3369 = vld [vmem:[%s7 + $0x20] sm:$0xf]
  %v3370 = vld [vmem:[%s7 + $0x24] sm:$0xf]
  %v3371 = vld [vmem:[%s7 + $0x28] sm:$0xf]
  %v3372 = vld [vmem:[%s7 + $0x2c] sm:$0xf]
  %v3373 = vld [vmem:[%s7 + $0x30] sm:$0xf]
  %v3374 = vld [vmem:[%s7 + $0x34] sm:$0xf]
  %v3375 = vld [vmem:[%s7 + $0x38] sm:$0xf]
  %v3376 = vld [vmem:[%s7 + $0x3c] sm:$0xf]
  %s3377 = scalar_lea.vmem %s7, 64
  %v3378 = vld [vmem:[%s3377] sm:$0xf]
  %v3379 = vld [vmem:[%s3377 + $0x4] sm:$0xf]
  %v3380 = vld [vmem:[%s3377 + $0x8] sm:$0xf]
  %v3381 = vld [vmem:[%s3377 + $0xc] sm:$0xf]
  %v3382 = vld [vmem:[%s3377 + $0x10] sm:$0xf]
  %v3383 = vld [vmem:[%s3377 + $0x14] sm:$0xf]
  %v3384 = vld [vmem:[%s3377 + $0x18] sm:$0xf]
  %v3385 = vld [vmem:[%s3377 + $0x1c] sm:$0xf]
  %v3386 = vld [vmem:[%s3377 + $0x20] sm:$0xf]
  %v3387 = vld [vmem:[%s3377 + $0x24] sm:$0xf]
  %v3388 = vld [vmem:[%s3377 + $0x28] sm:$0xf]
  %v3389 = vld [vmem:[%s3377 + $0x2c] sm:$0xf]
  %v3390 = vld [vmem:[%s3377 + $0x30] sm:$0xf]
  %v3391 = vld [vmem:[%s3377 + $0x34] sm:$0xf]
  %v3392 = vld [vmem:[%s3377 + $0x38] sm:$0xf]
  %v3393 = vld [vmem:[%s3377 + $0x3c] sm:$0xf]
  %v3410 = vunpack.c.l.b16 %v3378
  %v3411 = vunpack.c.l.b16 %v3379
  %v3412 = vunpack.c.l.b16 %v3380
  %v3413 = vunpack.c.l.b16 %v3381
  %v3414 = vunpack.c.l.b16 %v3382
  %v3415 = vunpack.c.l.b16 %v3383
  %v3416 = vunpack.c.l.b16 %v3384
  %v3417 = vunpack.c.l.b16 %v3385
  %v3418 = vunpack.c.l.b16 %v3386
  %v3419 = vunpack.c.l.b16 %v3387
  %v3420 = vunpack.c.l.b16 %v3388
  %v3421 = vunpack.c.l.b16 %v3389
  %v3422 = vunpack.c.l.b16 %v3390
  %v3423 = vunpack.c.l.b16 %v3391
  %v3424 = vunpack.c.l.b16 %v3392
  %v3425 = vunpack.c.l.b16 %v3393
  %v3426 = vpack.c.b16 %v3411, %v3410
  %v3427 = vpack.c.b16 %v3413, %v3412
  %v3428 = vpack.c.b16 %v3415, %v3414
  %v3429 = vpack.c.b16 %v3417, %v3416
  %v3430 = vpack.c.b16 %v3419, %v3418
  %v3431 = vpack.c.b16 %v3421, %v3420
  %v3432 = vpack.c.b16 %v3423, %v3422
  %v3433 = vpack.c.b16 %v3425, %v3424
  %3442 = vmatprep.subr.bf16.mxu0 0
  %3443 = vmatpush1.bf16.msra.mxu0 %v3426
  %3444 = vmatprep.subr.bf16.mxu0 0
  %3445 = vmatpush1.bf16.msra.mxu0 %v3427
  %3446 = vmatprep.subr.bf16.mxu0 0
  %3447 = vmatpush1.bf16.msra.mxu0 %v3428
  %3448 = vmatprep.subr.bf16.mxu0 0
  %3449 = vmatpush1.bf16.msra.mxu0 %v3429
  %3450 = vmatprep.subr.bf16.mxu0 0
  %3451 = vmatpush1.bf16.msra.mxu0 %v3430
  %3452 = vmatprep.subr.bf16.mxu0 0
  %3453 = vmatpush1.bf16.msra.mxu0 %v3431
  %3454 = vmatprep.subr.bf16.mxu0 0
  %3455 = vmatpush1.bf16.msra.mxu0 %v3432
  %3456 = vmatprep.subr.bf16.mxu0 0
  %3457 = vmatpush1.bf16.msra.mxu0 %v3433
  %3458 = vmatprep.subr.bf16.mxu0 0
  %3459 = vmatpush1.bf16.msra.mxu0 0
  %3460 = vmatprep.subr.bf16.mxu0 0
  %3461 = vmatpush1.bf16.msra.mxu0 0
  %3462 = vmatprep.subr.bf16.mxu0 0
  %3463 = vmatpush1.bf16.msra.mxu0 0
  %3464 = vmatprep.subr.bf16.mxu0 0
  %3465 = vmatpush1.bf16.msra.mxu0 0
  %3466 = vmatprep.subr.bf16.mxu0 0
  %3467 = vmatpush1.bf16.msra.mxu0 0
  %3468 = vmatprep.subr.bf16.mxu0 0
  %3469 = vmatpush1.bf16.msra.mxu0 0
  %3470 = vmatprep.subr.bf16.mxu0 0
  %3471 = vmatpush1.bf16.msra.mxu0 0
  %3472 = vmatprep.subr.bf16.mxu0 0
  %3473 = vmatpush1.bf16.msra.mxu0 0
  %3474 = vmatprep.mubr.bf16.mxu0 0
  %3475 = vmatmul.mubr.bf16.gmra.mrb[0].mxu0 %v3358
  %v3476 = vpop.f32.mrb[0].mxu0
  %v3477 = vadd.f32 0.0, %v3476
  %v3478 = vpop.f32.mrb[0].mxu0
  %v3479 = vpop.f32.mrb[0].mxu0
  %v3480 = vadd.f32 0.0, %v3479
  %v3481 = vpop.f32.mrb[0].mxu0
  %3482 = vdwg.mxu0
  %v3499 = vunpack.c.l.b16 %v3361
  %v3500 = vunpack.c.l.b16 %v3362
  %v3501 = vunpack.c.l.b16 %v3363
  %v3502 = vunpack.c.l.b16 %v3364
  %v3503 = vunpack.c.l.b16 %v3365
  %v3504 = vunpack.c.l.b16 %v3366
  %v3505 = vunpack.c.l.b16 %v3367
  %v3506 = vunpack.c.l.b16 %v3368
  %v3507 = vunpack.c.l.b16 %v3369
  %v3508 = vunpack.c.l.b16 %v3370
  %v3509 = vunpack.c.l.b16 %v3371
  %v3510 = vunpack.c.l.b16 %v3372
  %v3511 = vunpack.c.l.b16 %v3373
  %v3512 = vunpack.c.l.b16 %v3374
  %v3513 = vunpack.c.l.b16 %v3375
  %v3514 = vunpack.c.l.b16 %v3376
  %v3515 = vpack.c.b16 %v3500, %v3499
  %v3516 = vpack.c.b16 %v3502, %v3501
  %v3517 = vpack.c.b16 %v3504, %v3503
  %v3518 = vpack.c.b16 %v3506, %v3505
  %v3519 = vpack.c.b16 %v3508, %v3507
  %v3520 = vpack.c.b16 %v3510, %v3509
  %v3521 = vpack.c.b16 %v3512, %v3511
  %v3522 = vpack.c.b16 %v3514, %v3513
  %3531 = vmatprep.subr.bf16.mxu0 0
  %3532 = vmatpush1.bf16.msra.mxu0 %v3515
  %3533 = vmatprep.subr.bf16.mxu0 0
  %3534 = vmatpush1.bf16.msra.mxu0 %v3516
  %3535 = vmatprep.subr.bf16.mxu0 0
  %3536 = vmatpush1.bf16.msra.mxu0 %v3517
  %3537 = vmatprep.subr.bf16.mxu0 0
  %3538 = vmatpush1.bf16.msra.mxu0 %v3518
  %3539 = vmatprep.subr.bf16.mxu0 0
  %3540 = vmatpush1.bf16.msra.mxu0 %v3519
  %3541 = vmatprep.subr.bf16.mxu0 0
  %3542 = vmatpush1.bf16.msra.mxu0 %v3520
  %3543 = vmatprep.subr.bf16.mxu0 0
  %3544 = vmatpush1.bf16.msra.mxu0 %v3521
  %3545 = vmatprep.subr.bf16.mxu0 0
  %3546 = vmatpush1.bf16.msra.mxu0 %v3522
  %3547 = vmatprep.subr.bf16.mxu0 0
  %3548 = vmatpush1.bf16.msra.mxu0 0
  %3549 = vmatprep.subr.bf16.mxu0 0
  %3550 = vmatpush1.bf16.msra.mxu0 0
  %3551 = vmatprep.subr.bf16.mxu0 0
  %3552 = vmatpush1.bf16.msra.mxu0 0
  %3553 = vmatprep.subr.bf16.mxu0 0
  %3554 = vmatpush1.bf16.msra.mxu0 0
  %3555 = vmatprep.subr.bf16.mxu0 0
  %3556 = vmatpush1.bf16.msra.mxu0 0
  %3557 = vmatprep.subr.bf16.mxu0 0
  %3558 = vmatpush1.bf16.msra.mxu0 0
  %3559 = vmatprep.subr.bf16.mxu0 0
  %3560 = vmatpush1.bf16.msra.mxu0 0
  %3561 = vmatprep.subr.bf16.mxu0 0
  %3562 = vmatpush1.bf16.msra.mxu0 0
  %3563 = vmatprep.mubr.bf16.mxu0 0
  %3564 = vmatmul.mubr.bf16.gmra.mrb[0].mxu0 %v3357
  %v3565 = vpop.f32.mrb[0].mxu0
  %v3566 = vadd.f32 %v3477, %v3565
  %v3567 = vpop.f32.mrb[0].mxu0
  %v3568 = vpop.f32.mrb[0].mxu0
  %v3569 = vadd.f32 %v3480, %v3568
  %v3570 = vpop.f32.mrb[0].mxu0
  %3571 = vdwg.mxu0
  %s3572 = scalar_lea.vmem %s7, 128
  %v3573 = vld [vmem:[%s3572] sm:$0xf]
  %v3574 = vld [vmem:[%s3572 + $0x4] sm:$0xf]
  %v3575 = vld [vmem:[%s3572 + $0x8] sm:$0xf]
  %v3576 = vld [vmem:[%s3572 + $0xc] sm:$0xf]
  %v3577 = vld [vmem:[%s3572 + $0x10] sm:$0xf]
  %v3578 = vld [vmem:[%s3572 + $0x14] sm:$0xf]
  %v3579 = vld [vmem:[%s3572 + $0x18] sm:$0xf]
  %v3580 = vld [vmem:[%s3572 + $0x1c] sm:$0xf]
  %v3581 = vld [vmem:[%s3572 + $0x20] sm:$0xf]
  %v3582 = vld [vmem:[%s3572 + $0x24] sm:$0xf]
  %v3583 = vld [vmem:[%s3572 + $0x28] sm:$0xf]
  %v3584 = vld [vmem:[%s3572 + $0x2c] sm:$0xf]
  %v3585 = vld [vmem:[%s3572 + $0x30] sm:$0xf]
  %v3586 = vld [vmem:[%s3572 + $0x34] sm:$0xf]
  %v3587 = vld [vmem:[%s3572 + $0x38] sm:$0xf]
  %v3588 = vld [vmem:[%s3572 + $0x3c] sm:$0xf]
  %v3605 = vunpack.c.l.b16 %v3573
  %v3606 = vunpack.c.l.b16 %v3574
  %v3607 = vunpack.c.l.b16 %v3575
  %v3608 = vunpack.c.l.b16 %v3576
  %v3609 = vunpack.c.l.b16 %v3577
  %v3610 = vunpack.c.l.b16 %v3578
  %v3611 = vunpack.c.l.b16 %v3579
  %v3612 = vunpack.c.l.b16 %v3580
  %v3613 = vunpack.c.l.b16 %v3581
  %v3614 = vunpack.c.l.b16 %v3582
  %v3615 = vunpack.c.l.b16 %v3583
  %v3616 = vunpack.c.l.b16 %v3584
  %v3617 = vunpack.c.l.b16 %v3585
  %v3618 = vunpack.c.l.b16 %v3586
  %v3619 = vunpack.c.l.b16 %v3587
  %v3620 = vunpack.c.l.b16 %v3588
  %v3621 = vpack.c.b16 %v3606, %v3605
  %v3622 = vpack.c.b16 %v3608, %v3607
  %v3623 = vpack.c.b16 %v3610, %v3609
  %v3624 = vpack.c.b16 %v3612, %v3611
  %v3625 = vpack.c.b16 %v3614, %v3613
  %v3626 = vpack.c.b16 %v3616, %v3615
  %v3627 = vpack.c.b16 %v3618, %v3617
  %v3628 = vpack.c.b16 %v3620, %v3619
  %3637 = vmatprep.subr.bf16.mxu0 0
  %3638 = vmatpush1.bf16.msra.mxu0 %v3621
  %3639 = vmatprep.subr.bf16.mxu0 0
  %3640 = vmatpush1.bf16.msra.mxu0 %v3622
  %3641 = vmatprep.subr.bf16.mxu0 0
  %3642 = vmatpush1.bf16.msra.mxu0 %v3623
  %3643 = vmatprep.subr.bf16.mxu0 0
  %3644 = vmatpush1.bf16.msra.mxu0 %v3624
  %3645 = vmatprep.subr.bf16.mxu0 0
  %3646 = vmatpush1.bf16.msra.mxu0 %v3625
  %3647 = vmatprep.subr.bf16.mxu0 0
  %3648 = vmatpush1.bf16.msra.mxu0 %v3626
  %3649 = vmatprep.subr.bf16.mxu0 0
  %3650 = vmatpush1.bf16.msra.mxu0 %v3627
  %3651 = vmatprep.subr.bf16.mxu0 0
  %3652 = vmatpush1.bf16.msra.mxu0 %v3628
  %3653 = vmatprep.subr.bf16.mxu0 0
  %3654 = vmatpush1.bf16.msra.mxu0 0
  %3655 = vmatprep.subr.bf16.mxu0 0
  %3656 = vmatpush1.bf16.msra.mxu0 0
  %3657 = vmatprep.subr.bf16.mxu0 0
  %3658 = vmatpush1.bf16.msra.mxu0 0
  %3659 = vmatprep.subr.bf16.mxu0 0
  %3660 = vmatpush1.bf16.msra.mxu0 0
  %3661 = vmatprep.subr.bf16.mxu0 0
  %3662 = vmatpush1.bf16.msra.mxu0 0
  %3663 = vmatprep.subr.bf16.mxu0 0
  %3664 = vmatpush1.bf16.msra.mxu0 0
  %3665 = vmatprep.subr.bf16.mxu0 0
  %3666 = vmatpush1.bf16.msra.mxu0 0
  %3667 = vmatprep.subr.bf16.mxu0 0
  %3668 = vmatpush1.bf16.msra.mxu0 0
  %3669 = vmatprep.mubr.bf16.mxu0 0
  %3670 = vmatmul.mubr.bf16.gmra.mrb[0].mxu0 %v3359
  %v3671 = vpop.f32.mrb[0].mxu0
  %v3672 = vadd.f32 0.0, %v3671
  %v3673 = vpop.f32.mrb[0].mxu0
  %v3674 = vpop.f32.mrb[0].mxu0
  %v3675 = vadd.f32 0.0, %v3674
  %v3676 = vpop.f32.mrb[0].mxu0
  %3677 = vdwg.mxu0
  %v3678 = vadd.f32 %v3566, %v3672
  %v3679 = vadd.f32 %v3569, %v3675
  %s3680 = scalar_lea.vmem %s7, 192
  %v3681 = vld [vmem:[%s3680] sm:$0xf]
  %v3682 = vld [vmem:[%s3680 + $0x4] sm:$0xf]
  %v3683 = vld [vmem:[%s3680 + $0x8] sm:$0xf]
  %v3684 = vld [vmem:[%s3680 + $0xc] sm:$0xf]
  %v3685 = vld [vmem:[%s3680 + $0x10] sm:$0xf]
  %v3686 = vld [vmem:[%s3680 + $0x14] sm:$0xf]
  %v3687 = vld [vmem:[%s3680 + $0x18] sm:$0xf]
  %v3688 = vld [vmem:[%s3680 + $0x1c] sm:$0xf]
  %v3689 = vld [vmem:[%s3680 + $0x20] sm:$0xf]
  %v3690 = vld [vmem:[%s3680 + $0x24] sm:$0xf]
  %v3691 = vld [vmem:[%s3680 + $0x28] sm:$0xf]
  %v3692 = vld [vmem:[%s3680 + $0x2c] sm:$0xf]
  %v3693 = vld [vmem:[%s3680 + $0x30] sm:$0xf]
  %v3694 = vld [vmem:[%s3680 + $0x34] sm:$0xf]
  %v3695 = vld [vmem:[%s3680 + $0x38] sm:$0xf]
  %v3696 = vld [vmem:[%s3680 + $0x3c] sm:$0xf]
  %v3713 = vunpack.c.l.b16 %v3681
  %v3714 = vunpack.c.l.b16 %v3682
  %v3715 = vunpack.c.l.b16 %v3683
  %v3716 = vunpack.c.l.b16 %v3684
  %v3717 = vunpack.c.l.b16 %v3685
  %v3718 = vunpack.c.l.b16 %v3686
  %v3719 = vunpack.c.l.b16 %v3687
  %v3720 = vunpack.c.l.b16 %v3688
  %v3721 = vunpack.c.l.b16 %v3689
  %v3722 = vunpack.c.l.b16 %v3690
  %v3723 = vunpack.c.l.b16 %v3691
  %v3724 = vunpack.c.l.b16 %v3692
  %v3725 = vunpack.c.l.b16 %v3693
  %v3726 = vunpack.c.l.b16 %v3694
  %v3727 = vunpack.c.l.b16 %v3695
  %v3728 = vunpack.c.l.b16 %v3696
  %v3729 = vpack.c.b16 %v3714, %v3713
  %v3730 = vpack.c.b16 %v3716, %v3715
  %v3731 = vpack.c.b16 %v3718, %v3717
  %v3732 = vpack.c.b16 %v3720, %v3719
  %v3733 = vpack.c.b16 %v3722, %v3721
  %v3734 = vpack.c.b16 %v3724, %v3723
  %v3735 = vpack.c.b16 %v3726, %v3725
  %v3736 = vpack.c.b16 %v3728, %v3727
  %3745 = vmatprep.subr.bf16.mxu0 0
  %3746 = vmatpush1.bf16.msra.mxu0 %v3729
  %3747 = vmatprep.subr.bf16.mxu0 0
  %3748 = vmatpush1.bf16.msra.mxu0 %v3730
  %3749 = vmatprep.subr.bf16.mxu0 0
  %3750 = vmatpush1.bf16.msra.mxu0 %v3731
  %3751 = vmatprep.subr.bf16.mxu0 0
  %3752 = vmatpush1.bf16.msra.mxu0 %v3732
  %3753 = vmatprep.subr.bf16.mxu0 0
  %3754 = vmatpush1.bf16.msra.mxu0 %v3733
  %3755 = vmatprep.subr.bf16.mxu0 0
  %3756 = vmatpush1.bf16.msra.mxu0 %v3734
  %3757 = vmatprep.subr.bf16.mxu0 0
  %3758 = vmatpush1.bf16.msra.mxu0 %v3735
  %3759 = vmatprep.subr.bf16.mxu0 0
  %3760 = vmatpush1.bf16.msra.mxu0 %v3736
  %3761 = vmatprep.subr.bf16.mxu0 0
  %3762 = vmatpush1.bf16.msra.mxu0 0
  %3763 = vmatprep.subr.bf16.mxu0 0
  %3764 = vmatpush1.bf16.msra.mxu0 0
  %3765 = vmatprep.subr.bf16.mxu0 0
  %3766 = vmatpush1.bf16.msra.mxu0 0
  %3767 = vmatprep.subr.bf16.mxu0 0
  %3768 = vmatpush1.bf16.msra.mxu0 0
  %3769 = vmatprep.subr.bf16.mxu0 0
  %3770 = vmatpush1.bf16.msra.mxu0 0
  %3771 = vmatprep.subr.bf16.mxu0 0
  %3772 = vmatpush1.bf16.msra.mxu0 0
  %3773 = vmatprep.subr.bf16.mxu0 0
  %3774 = vmatpush1.bf16.msra.mxu0 0
  %3775 = vmatprep.subr.bf16.mxu0 0
  %3776 = vmatpush1.bf16.msra.mxu0 0
  %3777 = vmatprep.mubr.bf16.mxu0 0
  %3778 = vmatmul.mubr.bf16.gmra.mrb[0].mxu0 %v3360
  %v3779 = vpop.f32.mrb[0].mxu0
  %v3780 = vadd.f32 0.0, %v3779
  %v3781 = vpop.f32.mrb[0].mxu0
  %v3782 = vpop.f32.mrb[0].mxu0
  %v3783 = vadd.f32 0.0, %v3782
  %v3784 = vpop.f32.mrb[0].mxu0
  %3785 = vdwg.mxu0
  %v3786 = vadd.f32 %v3678, %v3780
  %v3787 = vadd.f32 %v3679, %v3783
  %v3788 = vld [vmem:[%s8] sm:$0x1]
  %v3790 = vlaneseq
  %v3791 = vshrl.u32 %v3790, 7
  %v3792 = vsub.s32 0, %v3791
  %v3793 = vrot.slane %v3788, %v3792
  %v3795 = vadd.f32 %v3786, %v3793
  %v3796 = vadd.f32 %v3787, %v3793
  %v3797 = vmax.f32 %v3795, 0.0
  %v3798 = vmax.f32 %v3796, 0.0
  %v3799 = vpack.c.bf16 %v3798, %v3797
  %v3800 = vld [vmem:[%s9] sm:$0xf]
  %v3801 = vld [vmem:[%s9 + $0x4] sm:$0xf]
  %v3802 = vld [vmem:[%s9 + $0x8] sm:$0xf]
  %v3803 = vld [vmem:[%s9 + $0xc] sm:$0xf]
  %v3804 = vld [vmem:[%s9 + $0x10] sm:$0xf]
  %v3805 = vld [vmem:[%s9 + $0x14] sm:$0xf]
  %v3806 = vld [vmem:[%s9 + $0x18] sm:$0xf]
  %v3807 = vld [vmem:[%s9 + $0x1c] sm:$0xf]
  %v3808 = vld [vmem:[%s9 + $0x20] sm:$0xf]
  %v3809 = vld [vmem:[%s9 + $0x24] sm:$0xf]
  %v3810 = vld [vmem:[%s9 + $0x28] sm:$0xf]
  %v3811 = vld [vmem:[%s9 + $0x2c] sm:$0xf]
  %v3812 = vld [vmem:[%s9 + $0x30] sm:$0xf]
  %v3813 = vld [vmem:[%s9 + $0x34] sm:$0xf]
  %v3814 = vld [vmem:[%s9 + $0x38] sm:$0xf]
  %v3815 = vld [vmem:[%s9 + $0x3c] sm:$0xf]
  %v3816 = vld [vmem:[%s10] sm:$0x1]
  %v3818 = vlaneseq
  %v3819 = vshrl.u32 %v3818, 7
  %v3820 = vsub.s32 0, %v3819
  %v3821 = vrot.slane %v3816, %v3820
  %v3839 = vunpack.c.l.b16 %v3800
  %v3840 = vunpack.c.l.b16 %v3801
  %v3841 = vunpack.c.l.b16 %v3802
  %v3842 = vunpack.c.l.b16 %v3803
  %v3843 = vunpack.c.l.b16 %v3804
  %v3844 = vunpack.c.l.b16 %v3805
  %v3845 = vunpack.c.l.b16 %v3806
  %v3846 = vunpack.c.l.b16 %v3807
  %v3847 = vunpack.c.l.b16 %v3808
  %v3848 = vunpack.c.l.b16 %v3809
  %v3849 = vunpack.c.l.b16 %v3810
  %v3850 = vunpack.c.l.b16 %v3811
  %v3851 = vunpack.c.l.b16 %v3812
  %v3852 = vunpack.c.l.b16 %v3813
  %v3853 = vunpack.c.l.b16 %v3814
  %v3854 = vunpack.c.l.b16 %v3815
  %v3855 = vpack.c.b16 %v3840, %v3839
  %v3856 = vpack.c.b16 %v3842, %v3841
  %v3857 = vpack.c.b16 %v3844, %v3843
  %v3858 = vpack.c.b16 %v3846, %v3845
  %v3859 = vpack.c.b16 %v3848, %v3847
  %v3860 = vpack.c.b16 %v3850, %v3849
  %v3861 = vpack.c.b16 %v3852, %v3851
  %v3862 = vpack.c.b16 %v3854, %v3853
  %3871 = vmatprep.subr.bf16.mxu0 0
  %3872 = vmatpush1.bf16.msra.mxu0 %v3855
  %3873 = vmatprep.subr.bf16.mxu0 0
  %3874 = vmatpush1.bf16.msra.mxu0 %v3856
  %3875 = vmatprep.subr.bf16.mxu0 0
  %3876 = vmatpush1.bf16.msra.mxu0 %v3857
  %3877 = vmatprep.subr.bf16.mxu0 0
  %3878 = vmatpush1.bf16.msra.mxu0 %v3858
  %3879 = vmatprep.subr.bf16.mxu0 0
  %3880 = vmatpush1.bf16.msra.mxu0 %v3859
  %3881 = vmatprep.subr.bf16.mxu0 0
  %3882 = vmatpush1.bf16.msra.mxu0 %v3860
  %3883 = vmatprep.subr.bf16.mxu0 0
  %3884 = vmatpush1.bf16.msra.mxu0 %v3861
  %3885 = vmatprep.subr.bf16.mxu0 0
  %3886 = vmatpush1.bf16.msra.mxu0 %v3862
  %3887 = vmatprep.subr.bf16.mxu0 0
  %3888 = vmatpush1.bf16.msra.mxu0 0
  %3889 = vmatprep.subr.bf16.mxu0 0
  %3890 = vmatpush1.bf16.msra.mxu0 0
  %3891 = vmatprep.subr.bf16.mxu0 0
  %3892 = vmatpush1.bf16.msra.mxu0 0
  %3893 = vmatprep.subr.bf16.mxu0 0
  %3894 = vmatpush1.bf16.msra.mxu0 0
  %3895 = vmatprep.subr.bf16.mxu0 0
  %3896 = vmatpush1.bf16.msra.mxu0 0
  %3897 = vmatprep.subr.bf16.mxu0 0
  %3898 = vmatpush1.bf16.msra.mxu0 0
  %3899 = vmatprep.subr.bf16.mxu0 0
  %3900 = vmatpush1.bf16.msra.mxu0 0
  %3901 = vmatprep.subr.bf16.mxu0 0
  %3902 = vmatpush1.bf16.msra.mxu0 0
  %3903 = vmatprep.mubr.bf16.mxu0 0
  %3904 = vmatmul.mubr.bf16.gmra.mrb[0].mxu0 %v3799
  %v3905 = vpop.f32.mrb[0].mxu0
  %v3906 = vadd.f32 %v3821, %v3905
  %v3907 = vpop.f32.mrb[0].mxu0
  %v3908 = vpop.f32.mrb[0].mxu0
  %v3909 = vadd.f32 %v3821, %v3908
  %v3910 = vpop.f32.mrb[0].mxu0
  %3911 = vdwg.mxu0
  %3912 = vst [vmem:[%s11] sm:$0xff] %v3906
  %3913 = vst [vmem:[%s11 + $0x8] sm:$0xff] %v3909
  // Predicated region
  $region46: #{deepcnnx_forward.1} parent=0 // pred_check
    _
  $region47: #{deepcnnx_forward.1} parent=0 // pred_check_branch
    %3915 = sbr.rel (0) target = $region49
  $region48: #{deepcnnx_forward.1} parent=0 // pred_region
    _
  $region49: #{deepcnnx_forward.1} parent=0 // pred_fallthru
    _
  // Predicated region
  $region50: #{deepcnnx_forward.1} parent=0 // pred_check
    _
  $region51: #{deepcnnx_forward.1} parent=0 // pred_check_branch
    %3917 = sbr.rel (0) target = $region53
  $region52: #{deepcnnx_forward.1} parent=0 // pred_region
    _
  $region53: #{deepcnnx_forward.1} parent=0 // pred_fallthru
    _

</llo_original>
